<compile_context>
chip_gen: v5e
topology: v5e:2x2
jax: 0.10.0
libtpu: 0.0.40
codegen_flags: <defaults>
</compile_context>

<pallas_src>
import jax
import jax.numpy as jnp
from jax.experimental import pallas as pl
from jax.experimental.pallas import tpu as pltpu


# ---------------------------------------------------------------------------
# Pallas update kernel: growth + per-kernel weighted sum + wall field + update
# ---------------------------------------------------------------------------

def _make_update_kernel(K, C, is_soft_clip):
    """Block shapes seen by the kernel:
       pot_ref : (K, TSX, SY)  potentials (fftshift already folded in spectrally)
       potw_ref: (TSX, SY)     wall potential
       x_ref   : (C, TSX, SY)  current state (channel-major)
       out_ref : (C, TSX, SY)  next state
       SMEM    : inv_t (1,), m (K,), -1/(2 s^2) (K,), h (K,)
    """
    def kernel(invt_ref, m_ref, nis2_ref, h_ref, pot_ref, potw_ref, x_ref, out_ref):
        inv_t = invt_ref[0]
        zero = jnp.zeros(pot_ref.shape[1:], jnp.float32)

        # growth (gn == 1): exp(-(n-m)^2/(2 s^2) - 0.001)*2 - 1, accumulated over k.
        # -1/(2 s^2) is precomputed (SMEM scalar) so no per-element divide hits the EUP,
        # and the (K,TSX,SY) field tensor is never materialized.
        def body(k, acc):
            p = pot_ref[k]
            g = jnp.exp(jnp.square(p - m_ref[k]) * nis2_ref[k] - 0.001) * 2.0 - 1.0
            return acc + h_ref[k] * g

        d0 = jax.lax.fori_loop(0, K, body, zero, unroll=True)

        # wall field: field_func[3](pot_wall, 1e-8, 10) = -clamp(pot_wall - 1e-8, 0, 1) * 10
        field_wall = jnp.clip(potw_ref[...] - 1e-8, 0.0, 1.0) * (-10.0)

        def update(xc, dc):
            y = xc + inv_t * dc
            if is_soft_clip:
                return jax.nn.sigmoid((y - 0.5) * 10.0)   # one EUP op (vs exp + divide)
            return jnp.clip(y, 0.0, 1.0)

        # channel 0: learnable kernels + wall; channels 1..C-2: wall only;
        # channel C-1 (obstacle channel): D == 0.
        out_ref[0] = update(x_ref[0], d0 + field_wall)
        for c in range(1, C - 1):
            out_ref[c] = update(x_ref[c], field_wall)
        out_ref[C - 1] = update(x_ref[C - 1], zero)

    return kernel


def _pick_tile_sx(SX, SY, K, C, budget_bytes=6 << 20):
    """Largest SX tile that is a multiple of 8, divides SX, gives >= 2 grid steps,
    and keeps the double-buffered in+out working set under `budget_bytes`
    (comfortably inside the 16/32 MiB default scoped-VMEM of v5e / v6e / v7x)."""
    cands = [t for t in range(8, SX, 8) if SX % t == 0]
    if not cands:
        return SX                                   # tiny / odd SX: single block
    bytes_per_row = 2 * 4 * SY * (K + 1 + 2 * C)    # f32, double-buffered
    best = cands[0]
    for t in cands:
        if t * bytes_per_row <= budget_bytes:
            best = t
    return best


def pallas_lenia_update(pot, potw, x_chw, m, s, h, T, is_soft_clip=False):
    """pot: (K,SX,SY) f32, potw: (SX,SY) f32, x_chw: (C,SX,SY) f32 -> (C,SX,SY) f32."""
    K, SX, SY = pot.shape
    C = x_chw.shape[0]
    assert C >= 2
    TSX = _pick_tile_sx(SX, SY, K, C)
    n_tiles = SX // TSX

    inv_t = (1.0 / jnp.asarray(T, jnp.float32)).reshape(1)
    m1 = jnp.asarray(m, jnp.float32).reshape(K)
    s1 = jnp.asarray(s, jnp.float32).reshape(K)
    nis2 = -1.0 / (2.0 * s1 * s1)                    # hoisted out of the kernel
    h1 = jnp.asarray(h, jnp.float32).reshape(K)

    smem = pl.BlockSpec(memory_space=pltpu.MemorySpace.SMEM)
    return pl.pallas_call(
        _make_update_kernel(K, C, is_soft_clip),
        grid=(n_tiles,),
        in_specs=[
            smem, smem, smem, smem,                                   # 1/T, m, -1/(2s^2), h
            pl.BlockSpec((K, TSX, SY), lambda t: (0, t, 0)),          # potentials
            pl.BlockSpec((TSX, SY), lambda t: (t, 0)),                # wall potential
            pl.BlockSpec((C, TSX, SY), lambda t: (0, t, 0)),          # state
        ],
        out_specs=pl.BlockSpec((C, TSX, SY), lambda t: (0, t, 0)),
        out_shape=jax.ShapeDtypeStruct((C, SX, SY), jnp.float32),
        compiler_params=pltpu.CompilerParams(
            dimension_semantics=("parallel",),   # shards SX tiles across v7x's 2 TCs
            vmem_limit_bytes=32 * 1024 * 1024,
        ),
    )(inv_t, m1, nis2, h1,
      pot.astype(jnp.float32), potw.astype(jnp.float32), x_chw.astype(jnp.float32))


# ---------------------------------------------------------------------------
# Convolution-kernel spectra (one-time setup) + fftshift phase fold
# ---------------------------------------------------------------------------

def _ker_c(x, r, w, b):
    return jnp.sum(b * jnp.exp(-0.5 * jnp.square((x[..., None] - r) / w)), axis=-1)


def _radial_grid(SX, SY):
    X = (jnp.arange(SX) - SX // 2).astype(jnp.float32)[:, None]
    Y = (jnp.arange(SY) - SY // 2).astype(jnp.float32)[None, :]
    return jnp.sqrt(X * X + Y * Y)          # (SX, SY)


def compute_kernels_fft(SX, SY, R, r, rk, w, b):
    """Raw (un-shifted) learnable-kernel spectra: (nb_k, SX, SY//2+1) complex64."""
    nb_k = r.shape[0]
    rad = _radial_grid(SX, SY)
    ks = []
    for i in range(nb_k):
        D = rad / ((R + 15.0) * r[i])
        Kk = jax.nn.sigmoid(-(D - 1.0) * 10.0) * _ker_c(D, rk[i], w[i], b[i])
        Kk = Kk / jnp.sum(Kk)
        ks.append(jnp.fft.rfftn(Kk, axes=(0, 1)))
    return jnp.stack(ks).astype(jnp.complex64)


def compute_kernel_wall_fft(SX, SY):
    rad = _radial_grid(SX, SY) / 4.0
    Kk = jax.nn.sigmoid(-(rad - 1.0) * 10.0) * _ker_c(
        rad, jnp.array([0.0, 0.0, 0.0]), jnp.array([0.5, 0.1, 0.1]),
        jnp.array([1.0, 0.0, 0.0]))
    Kk = Kk / jnp.sum(Kk)
    return jnp.fft.rfftn(Kk, axes=(0, 1)).astype(jnp.complex64)   # (SX, SY//2+1)


def fftshift_phase(SX, SY):
    """Spectral factor equivalent to rolling the irfft2 output by (-(SX//2), -(SY//2))
    — i.e. the module's roll_n fftshift.  Exact +-1 for even sizes."""
    F = SY // 2 + 1
    if SX % 2 == 0 and SY % 2 == 0:
        px = 1.0 - 2.0 * (jnp.arange(SX) % 2).astype(jnp.float32)
        py = 1.0 - 2.0 * (jnp.arange(F) % 2).astype(jnp.float32)
        return (px[:, None] * py[None, :]).astype(jnp.complex64)
    px = jnp.exp(2j * jnp.pi * jnp.arange(SX) * (SX // 2) / SX)
    py = jnp.exp(2j * jnp.pi * jnp.arange(F) * (SY // 2) / SY)
    return (px[:, None] * py[None, :]).astype(jnp.complex64)


def fold_fftshift(kernel_fft, SX, SY):
    """Pre-phase a kernel spectrum once so no post-irfft roll is needed per step."""
    return (kernel_fft * fftshift_phase(SX, SY)).astype(jnp.complex64)


# ---------------------------------------------------------------------------
# Forward pass (LeniaStepFFTC.forward)
# ---------------------------------------------------------------------------

def lenia_step_fftc_chw(x_chw, kernels_fft_shifted, kernel_wall_fft_shifted,
                        m, s, h, T, speed_x=0, speed_y=0, is_soft_clip=False):
    """Core step on channel-major state (C, SX, SY).  The kernel spectra must have
    the fftshift phase folded in (fold_fftshift).  Keep the state in this layout
    across simulation steps to avoid per-step NHWC<->CHW transposes."""
    C, SX, SY = x_chw.shape
    assert C >= 2
    x_chw = x_chw.astype(jnp.float32)

    # obstacle-channel advection — channel index 1, exactly as in the module
    if speed_x or speed_y:
        x_chw = x_chw.at[1].set(jnp.roll(x_chw[1], shift=(speed_y, speed_x), axis=(0, 1)))

    # TODO(synk): rfftn/irfftn have no Pallas TPU primitive; computed with jnp.fft glue.
    w0 = jnp.fft.rfftn(x_chw[0], axes=(0, 1))            # (SX, F)
    wl = jnp.fft.rfftn(x_chw[C - 1], axes=(0, 1))        # (SX, F)

    # Spectral products: left to XLA (single fused complex-multiply pass).  Mosaic
    # refs cannot hold complex64, so a Pallas version would need re/im-split inputs
    # plus a recombination pass (~2x HBM traffic) — dropped per review.
    pot_fft = kernels_fft_shifted * w0[None]             # (K, SX, F)
    potw_fft = kernel_wall_fft_shifted * wl              # (SX, F)

    pot = jnp.fft.irfftn(pot_fft, s=(SX, SY), axes=(1, 2))     # (K, SX, SY), pre-shifted
    potw = jnp.fft.irfftn(potw_fft, s=(SX, SY), axes=(0, 1))   # (SX, SY),    pre-shifted

    return pallas_lenia_update(pot, potw, x_chw, m, s, h, T, is_soft_clip)


def lenia_step_fftc(x, kernels_fft_shifted, kernel_wall_fft_shifted,
                    m, s, h, T, speed_x=0, speed_y=0, is_soft_clip=False):
    """NHWC wrapper matching LeniaStepFFTC.forward: x is (1, SX, SY, C)."""
    B, SX, SY, C = x.shape
    assert B == 1
    out = lenia_step_fftc_chw(jnp.transpose(x[0], (2, 0, 1)),
                              kernels_fft_shifted, kernel_wall_fft_shifted,
                              m, s, h, T, speed_x, speed_y, is_soft_clip)
    return jnp.transpose(out, (1, 2, 0))[None]           # (1, SX, SY, C)


# ---------------------------------------------------------------------------
# Pure-jnp reference (direct transcription of the torch forward, raw spectra)
# ---------------------------------------------------------------------------

def lenia_step_reference(x, kernels_fft, kernel_wall_fft, m, s, h, T,
                         speed_x=0, speed_y=0, is_soft_clip=False):
    B, SX, SY, C = x.shape
    x = x.astype(jnp.float32)
    x = x.at[:, :, :, 1].set(jnp.roll(x[:, :, :, 1], shift=(speed_y, speed_x), axis=(1, 2)))
    D = jnp.zeros_like(x)

    w0 = jnp.fft.rfftn(x[:, :, :, 0], axes=(1, 2))                       # (1, SX, F)
    pot = jnp.fft.irfftn(kernels_fft * w0, s=(SX, SY), axes=(1, 2))      # (K, SX, SY)
    pot = jnp.roll(pot, shift=(-(SX // 2), -(SY // 2)), axis=(1, 2))
    field = jnp.exp(-jnp.square(pot - m[:, None, None]) /
                    (2.0 * jnp.square(s[:, None, None])) - 0.001) * 2.0 - 1.0
    D = D.at[:, :, :, 0].set(jnp.sum(h[:, None, None] * field, axis=0, keepdims=True))

    wl = jnp.fft.rfftn(x[:, :, :, C - 1], axes=(1, 2))
    potw = jnp.fft.irfftn(kernel_wall_fft[None] * wl, s=(SX, SY), axes=(1, 2))
    potw = jnp.roll(potw, shift=(-(SX // 2), -(SY // 2)), axis=(1, 2))
    field_wall = -jnp.clip(potw - 1e-8, 0.0, 1.0) * 10.0
    for i in range(C - 1):
        D = D.at[:, :, :, i].add(field_wall)

    if not is_soft_clip:
        return jnp.clip(x + 1.0 / T * D, 0.0, 1.0)
    return jax.nn.sigmoid((x + 1.0 / T * D - 0.5) * 10.0)


# ---------------------------------------------------------------------------
# Demo / smoke test
# ---------------------------------------------------------------------------

if __name__ == "__main__":
    key = jax.random.PRNGKey(0)
    SX = SY = 128
    C = 3          # channel 0: Lenia channel; channel C-1: obstacle/wall channel
    nb_k = 4       # number of learnable kernels
    R = 13.0
    T = 10.0

    keys = jax.random.split(key, 8)
    r = jax.random.uniform(keys[0], (nb_k,), minval=0.2, maxval=1.0)
    rk = jax.random.uniform(keys[1], (nb_k, 3), minval=0.0, maxval=1.0)
    b = jax.random.uniform(keys[2], (nb_k, 3), minval=0.1, maxval=1.0)
    w = jax.random.uniform(keys[3], (nb_k, 3), minval=0.05, maxval=0.5)
    h = jax.random.uniform(keys[4], (nb_k,), minval=0.2, maxval=1.0)
    m = jax.random.uniform(keys[5], (nb_k,), minval=0.1, maxval=0.5)
    s = jax.random.uniform(keys[6], (nb_k,), minval=0.05, maxval=0.3)
    x = jax.random.uniform(keys[7], (1, SX, SY, C), minval=0.0, maxval=1.0)

    # One-time setup (hoisted out of the per-step path): raw spectra + fftshift fold.
    kernels_fft = compute_kernels_fft(SX, SY, R, r, rk, w, b)     # (nb_k, SX, SY//2+1)
    kernel_wall_fft = compute_kernel_wall_fft(SX, SY)             # (SX, SY//2+1)
    kernels_fft_s = fold_fftshift(kernels_fft, SX, SY)
    kernel_wall_fft_s = fold_fftshift(kernel_wall_fft, SX, SY)

    step = jax.jit(lenia_step_fftc,
                   static_argnames=("speed_x", "speed_y", "is_soft_clip"))
    out = step(x, kernels_fft_s, kernel_wall_fft_s, m, s, h, T,
               speed_x=0, speed_y=0, is_soft_clip=False)
    out = jax.block_until_ready(out)
    assert out.shape == (1, SX, SY, C)

    ref = lenia_step_reference(x, kernels_fft, kernel_wall_fft, m, s, h, T,
                               speed_x=0, speed_y=0, is_soft_clip=False)
    max_err = float(jnp.max(jnp.abs(out - ref)))
    assert max_err < 1e-3, f"mismatch vs reference: {max_err}"
    print("KERNEL_OK")
</pallas_src>

<mosaic_0001>
module attributes {stable_mosaic.version = 11 : i64} {
  func.func @kernel(%arg0: i32, %arg1: memref<1xf32, #tpu.memory_space<smem>>, %arg2: memref<4xf32, #tpu.memory_space<smem>>, %arg3: memref<4xf32, #tpu.memory_space<smem>>, %arg4: memref<4xf32, #tpu.memory_space<smem>>, %arg5: memref<4x64x128xf32, #tpu.memory_space<vmem>>, %arg6: memref<64x128xf32, #tpu.memory_space<vmem>>, %arg7: memref<3x64x128xf32, #tpu.memory_space<vmem>>, %arg8: memref<3x64x128xf32, #tpu.memory_space<vmem>>) attributes {dimension_semantics = [#tpu.dimension_semantics<parallel>], iteration_bounds = array<i64: 2>, scalar_prefetch = 0 : i64, scratch_operands = 0 : i64, tpu.core_type = #tpu.core_type<tc>, window_params = [{transform_indices = @transform_0, window_bounds = array<i64: 1>}, {transform_indices = @transform_1, window_bounds = array<i64: 4>}, {transform_indices = @transform_2, window_bounds = array<i64: 4>}, {transform_indices = @transform_3, window_bounds = array<i64: 4>}, {transform_indices = @transform_4, window_bounds = array<i64: 4, 64, 128>}, {transform_indices = @transform_5, window_bounds = array<i64: 64, 128>}, {transform_indices = @transform_6, window_bounds = array<i64: 3, 64, 128>}, {transform_indices = @transform_7, window_bounds = array<i64: 3, 64, 128>}]} {
    %c0 = arith.constant 0 : index
    %0 = memref.load %arg1[%c0] : memref<1xf32, #tpu.memory_space<smem>>
    %cst = arith.constant 0.000000e+00 : f32
    %1 = vector.broadcast %cst : f32 to vector<64x128xf32>
    %c0_i32 = arith.constant 0 : i32
    %2 = arith.index_cast %c0_i32 : i32 to index
    %c0_0 = arith.constant 0 : index
    %c0_1 = arith.constant 0 : index
    %3 = vector.load %arg5[%2, %c0_0, %c0_1] : memref<4x64x128xf32, #tpu.memory_space<vmem>>, vector<1x64x128xf32>
    %4 = vector.shape_cast %3 : vector<1x64x128xf32> to vector<64x128xf32>
    %5 = arith.index_cast %c0_i32 : i32 to index
    %6 = memref.load %arg2[%5] : memref<4xf32, #tpu.memory_space<smem>>
    %7 = vector.broadcast %6 : f32 to vector<64x128xf32>
    %8 = arith.subf %4, %7 : vector<64x128xf32>
    %9 = arith.mulf %8, %8 : vector<64x128xf32>
    %10 = arith.index_cast %c0_i32 : i32 to index
    %11 = memref.load %arg3[%10] : memref<4xf32, #tpu.memory_space<smem>>
    %12 = vector.broadcast %11 : f32 to vector<64x128xf32>
    %13 = arith.mulf %9, %12 : vector<64x128xf32>
    %cst_2 = arith.constant 1.000000e-03 : f32
    %14 = vector.broadcast %cst_2 : f32 to vector<64x128xf32>
    %15 = arith.subf %13, %14 : vector<64x128xf32>
    %16 = math.exp %15 : vector<64x128xf32>
    %cst_3 = arith.constant 2.000000e+00 : f32
    %17 = vector.broadcast %cst_3 : f32 to vector<64x128xf32>
    %18 = arith.mulf %16, %17 : vector<64x128xf32>
    %cst_4 = arith.constant 1.000000e+00 : f32
    %19 = vector.broadcast %cst_4 : f32 to vector<64x128xf32>
    %20 = arith.subf %18, %19 : vector<64x128xf32>
    %21 = arith.index_cast %c0_i32 : i32 to index
    %22 = memref.load %arg4[%21] : memref<4xf32, #tpu.memory_space<smem>>
    %23 = vector.broadcast %22 : f32 to vector<64x128xf32>
    %24 = arith.mulf %23, %20 : vector<64x128xf32>
    %25 = arith.addf %1, %24 : vector<64x128xf32>
    %c1_i32 = arith.constant 1 : i32
    %26 = arith.index_cast %c1_i32 : i32 to index
    %c0_5 = arith.constant 0 : index
    %c0_6 = arith.constant 0 : index
    %27 = vector.load %arg5[%26, %c0_5, %c0_6] : memref<4x64x128xf32, #tpu.memory_space<vmem>>, vector<1x64x128xf32>
    %28 = vector.shape_cast %27 : vector<1x64x128xf32> to vector<64x128xf32>
    %29 = arith.index_cast %c1_i32 : i32 to index
    %30 = memref.load %arg2[%29] : memref<4xf32, #tpu.memory_space<smem>>
    %31 = vector.broadcast %30 : f32 to vector<64x128xf32>
    %32 = arith.subf %28, %31 : vector<64x128xf32>
    %33 = arith.mulf %32, %32 : vector<64x128xf32>
    %34 = arith.index_cast %c1_i32 : i32 to index
    %35 = memref.load %arg3[%34] : memref<4xf32, #tpu.memory_space<smem>>
    %36 = vector.broadcast %35 : f32 to vector<64x128xf32>
    %37 = arith.mulf %33, %36 : vector<64x128xf32>
    %cst_7 = arith.constant 1.000000e-03 : f32
    %38 = vector.broadcast %cst_7 : f32 to vector<64x128xf32>
    %39 = arith.subf %37, %38 : vector<64x128xf32>
    %40 = math.exp %39 : vector<64x128xf32>
    %cst_8 = arith.constant 2.000000e+00 : f32
    %41 = vector.broadcast %cst_8 : f32 to vector<64x128xf32>
    %42 = arith.mulf %40, %41 : vector<64x128xf32>
    %cst_9 = arith.constant 1.000000e+00 : f32
    %43 = vector.broadcast %cst_9 : f32 to vector<64x128xf32>
    %44 = arith.subf %42, %43 : vector<64x128xf32>
    %45 = arith.index_cast %c1_i32 : i32 to index
    %46 = memref.load %arg4[%45] : memref<4xf32, #tpu.memory_space<smem>>
    %47 = vector.broadcast %46 : f32 to vector<64x128xf32>
    %48 = arith.mulf %47, %44 : vector<64x128xf32>
    %49 = arith.addf %25, %48 : vector<64x128xf32>
    %c2_i32 = arith.constant 2 : i32
    %50 = arith.index_cast %c2_i32 : i32 to index
    %c0_10 = arith.constant 0 : index
    %c0_11 = arith.constant 0 : index
    %51 = vector.load %arg5[%50, %c0_10, %c0_11] : memref<4x64x128xf32, #tpu.memory_space<vmem>>, vector<1x64x128xf32>
    %52 = vector.shape_cast %51 : vector<1x64x128xf32> to vector<64x128xf32>
    %53 = arith.index_cast %c2_i32 : i32 to index
    %54 = memref.load %arg2[%53] : memref<4xf32, #tpu.memory_space<smem>>
    %55 = vector.broadcast %54 : f32 to vector<64x128xf32>
    %56 = arith.subf %52, %55 : vector<64x128xf32>
    %57 = arith.mulf %56, %56 : vector<64x128xf32>
    %58 = arith.index_cast %c2_i32 : i32 to index
    %59 = memref.load %arg3[%58] : memref<4xf32, #tpu.memory_space<smem>>
    %60 = vector.broadcast %59 : f32 to vector<64x128xf32>
    %61 = arith.mulf %57, %60 : vector<64x128xf32>
    %cst_12 = arith.constant 1.000000e-03 : f32
    %62 = vector.broadcast %cst_12 : f32 to vector<64x128xf32>
    %63 = arith.subf %61, %62 : vector<64x128xf32>
    %64 = math.exp %63 : vector<64x128xf32>
    %cst_13 = arith.constant 2.000000e+00 : f32
    %65 = vector.broadcast %cst_13 : f32 to vector<64x128xf32>
    %66 = arith.mulf %64, %65 : vector<64x128xf32>
    %cst_14 = arith.constant 1.000000e+00 : f32
    %67 = vector.broadcast %cst_14 : f32 to vector<64x128xf32>
    %68 = arith.subf %66, %67 : vector<64x128xf32>
    %69 = arith.index_cast %c2_i32 : i32 to index
    %70 = memref.load %arg4[%69] : memref<4xf32, #tpu.memory_space<smem>>
    %71 = vector.broadcast %70 : f32 to vector<64x128xf32>
    %72 = arith.mulf %71, %68 : vector<64x128xf32>
    %73 = arith.addf %49, %72 : vector<64x128xf32>
    %c3_i32 = arith.constant 3 : i32
    %74 = arith.index_cast %c3_i32 : i32 to index
    %c0_15 = arith.constant 0 : index
    %c0_16 = arith.constant 0 : index
    %75 = vector.load %arg5[%74, %c0_15, %c0_16] : memref<4x64x128xf32, #tpu.memory_space<vmem>>, vector<1x64x128xf32>
    %76 = vector.shape_cast %75 : vector<1x64x128xf32> to vector<64x128xf32>
    %77 = arith.index_cast %c3_i32 : i32 to index
    %78 = memref.load %arg2[%77] : memref<4xf32, #tpu.memory_space<smem>>
    %79 = vector.broadcast %78 : f32 to vector<64x128xf32>
    %80 = arith.subf %76, %79 : vector<64x128xf32>
    %81 = arith.mulf %80, %80 : vector<64x128xf32>
    %82 = arith.index_cast %c3_i32 : i32 to index
    %83 = memref.load %arg3[%82] : memref<4xf32, #tpu.memory_space<smem>>
    %84 = vector.broadcast %83 : f32 to vector<64x128xf32>
    %85 = arith.mulf %81, %84 : vector<64x128xf32>
    %cst_17 = arith.constant 1.000000e-03 : f32
    %86 = vector.broadcast %cst_17 : f32 to vector<64x128xf32>
    %87 = arith.subf %85, %86 : vector<64x128xf32>
    %88 = math.exp %87 : vector<64x128xf32>
    %cst_18 = arith.constant 2.000000e+00 : f32
    %89 = vector.broadcast %cst_18 : f32 to vector<64x128xf32>
    %90 = arith.mulf %88, %89 : vector<64x128xf32>
    %cst_19 = arith.constant 1.000000e+00 : f32
    %91 = vector.broadcast %cst_19 : f32 to vector<64x128xf32>
    %92 = arith.subf %90, %91 : vector<64x128xf32>
    %93 = arith.index_cast %c3_i32 : i32 to index
    %94 = memref.load %arg4[%93] : memref<4xf32, #tpu.memory_space<smem>>
    %95 = vector.broadcast %94 : f32 to vector<64x128xf32>
    %96 = arith.mulf %95, %92 : vector<64x128xf32>
    %97 = arith.addf %73, %96 : vector<64x128xf32>
    %c4_i32 = arith.constant 4 : i32
    %c0_20 = arith.constant 0 : index
    %c0_21 = arith.constant 0 : index
    %98 = vector.load %arg6[%c0_20, %c0_21] : memref<64x128xf32, #tpu.memory_space<vmem>>, vector<64x128xf32>
    %cst_22 = arith.constant 9.99999993E-9 : f32
    %99 = vector.broadcast %cst_22 : f32 to vector<64x128xf32>
    %100 = arith.subf %98, %99 : vector<64x128xf32>
    %cst_23 = arith.constant 0.000000e+00 : f32
    %cst_24 = arith.constant 1.000000e+00 : f32
    %101 = vector.broadcast %cst_23 : f32 to vector<64x128xf32>
    %102 = arith.maximumf %101, %100 : vector<64x128xf32>
    %103 = vector.broadcast %cst_24 : f32 to vector<64x128xf32>
    %104 = arith.minimumf %103, %102 : vector<64x128xf32>
    %cst_25 = arith.constant -1.000000e+01 : f32
    %105 = vector.broadcast %cst_25 : f32 to vector<64x128xf32>
    %106 = arith.mulf %104, %105 : vector<64x128xf32>
    %c0_26 = arith.constant 0 : index
    %c0_27 = arith.constant 0 : index
    %c0_28 = arith.constant 0 : index
    %107 = vector.load %arg7[%c0_26, %c0_27, %c0_28] : memref<3x64x128xf32, #tpu.memory_space<vmem>>, vector<1x64x128xf32>
    %108 = vector.shape_cast %107 : vector<1x64x128xf32> to vector<64x128xf32>
    %109 = arith.addf %97, %106 : vector<64x128xf32>
    %110 = vector.broadcast %0 : f32 to vector<64x128xf32>
    %111 = arith.mulf %110, %109 : vector<64x128xf32>
    %112 = arith.addf %108, %111 : vector<64x128xf32>
    %cst_29 = arith.constant 0.000000e+00 : f32
    %cst_30 = arith.constant 1.000000e+00 : f32
    %113 = vector.broadcast %cst_29 : f32 to vector<64x128xf32>
    %114 = arith.maximumf %113, %112 : vector<64x128xf32>
    %115 = vector.broadcast %cst_30 : f32 to vector<64x128xf32>
    %116 = arith.minimumf %115, %114 : vector<64x128xf32>
    %c0_31 = arith.constant 0 : index
    %c0_32 = arith.constant 0 : index
    %c0_33 = arith.constant 0 : index
    %117 = vector.load %arg8[%c0_31, %c0_32, %c0_33] : memref<3x64x128xf32, #tpu.memory_space<vmem>>, vector<1x64x128xf32>
    %118 = vector.shape_cast %117 : vector<1x64x128xf32> to vector<64x128xf32>
    %119 = vector.shape_cast %116 : vector<64x128xf32> to vector<1x64x128xf32>
    tpu.vector_store %arg8[%c0_31, %c0_32, %c0_33], %119 {strides = array<i32>} : memref<3x64x128xf32, #tpu.memory_space<vmem>>, vector<1x64x128xf32>,
    %c1 = arith.constant 1 : index
    %c0_34 = arith.constant 0 : index
    %c0_35 = arith.constant 0 : index
    %120 = vector.load %arg7[%c1, %c0_34, %c0_35] : memref<3x64x128xf32, #tpu.memory_space<vmem>>, vector<1x64x128xf32>
    %121 = vector.shape_cast %120 : vector<1x64x128xf32> to vector<64x128xf32>
    %122 = vector.broadcast %0 : f32 to vector<64x128xf32>
    %123 = arith.mulf %122, %106 : vector<64x128xf32>
    %124 = arith.addf %121, %123 : vector<64x128xf32>
    %cst_36 = arith.constant 0.000000e+00 : f32
    %cst_37 = arith.constant 1.000000e+00 : f32
    %125 = vector.broadcast %cst_36 : f32 to vector<64x128xf32>
    %126 = arith.maximumf %125, %124 : vector<64x128xf32>
    %127 = vector.broadcast %cst_37 : f32 to vector<64x128xf32>
    %128 = arith.minimumf %127, %126 : vector<64x128xf32>
    %c1_38 = arith.constant 1 : index
    %c0_39 = arith.constant 0 : index
    %c0_40 = arith.constant 0 : index
    %129 = vector.load %arg8[%c1_38, %c0_39, %c0_40] : memref<3x64x128xf32, #tpu.memory_space<vmem>>, vector<1x64x128xf32>
    %130 = vector.shape_cast %129 : vector<1x64x128xf32> to vector<64x128xf32>
    %131 = vector.shape_cast %128 : vector<64x128xf32> to vector<1x64x128xf32>
    tpu.vector_store %arg8[%c1_38, %c0_39, %c0_40], %131 {strides = array<i32>} : memref<3x64x128xf32, #tpu.memory_space<vmem>>, vector<1x64x128xf32>,
    %c2 = arith.constant 2 : index
    %c0_41 = arith.constant 0 : index
    %c0_42 = arith.constant 0 : index
    %132 = vector.load %arg7[%c2, %c0_41, %c0_42] : memref<3x64x128xf32, #tpu.memory_space<vmem>>, vector<1x64x128xf32>
    %133 = vector.shape_cast %132 : vector<1x64x128xf32> to vector<64x128xf32>
    %134 = vector.broadcast %0 : f32 to vector<64x128xf32>
    %135 = arith.mulf %134, %1 : vector<64x128xf32>
    %136 = arith.addf %133, %135 : vector<64x128xf32>
    %cst_43 = arith.constant 0.000000e+00 : f32
    %cst_44 = arith.constant 1.000000e+00 : f32
    %137 = vector.broadcast %cst_43 : f32 to vector<64x128xf32>
    %138 = arith.maximumf %137, %136 : vector<64x128xf32>
    %139 = vector.broadcast %cst_44 : f32 to vector<64x128xf32>
    %140 = arith.minimumf %139, %138 : vector<64x128xf32>
    %c2_45 = arith.constant 2 : index
    %c0_46 = arith.constant 0 : index
    %c0_47 = arith.constant 0 : index
    %141 = vector.load %arg8[%c2_45, %c0_46, %c0_47] : memref<3x64x128xf32, #tpu.memory_space<vmem>>, vector<1x64x128xf32>
    %142 = vector.shape_cast %141 : vector<1x64x128xf32> to vector<64x128xf32>
    %143 = vector.shape_cast %140 : vector<64x128xf32> to vector<1x64x128xf32>
    tpu.vector_store %arg8[%c2_45, %c0_46, %c0_47], %143 {strides = array<i32>} : memref<3x64x128xf32, #tpu.memory_space<vmem>>, vector<1x64x128xf32>,
    return
  }
  func.func @transform_0(%arg0: i32) -> i32 {
    %c0_i32 = arith.constant 0 : i32
    %c0_i32_0 = arith.constant 0 : i32
    return %c0_i32 : i32
  }
  func.func @transform_1(%arg0: i32) -> i32 {
    %c0_i32 = arith.constant 0 : i32
    %c0_i32_0 = arith.constant 0 : i32
    return %c0_i32 : i32
  }
  func.func @transform_2(%arg0: i32) -> i32 {
    %c0_i32 = arith.constant 0 : i32
    %c0_i32_0 = arith.constant 0 : i32
    return %c0_i32 : i32
  }
  func.func @transform_3(%arg0: i32) -> i32 {
    %c0_i32 = arith.constant 0 : i32
    %c0_i32_0 = arith.constant 0 : i32
    return %c0_i32 : i32
  }
  func.func @transform_4(%arg0: i32) -> (i32, i32, i32) {
    %c0_i32 = arith.constant 0 : i32
    %c0_i32_0 = arith.constant 0 : i32
    %c0_i32_1 = arith.constant 0 : i32
    return %c0_i32, %arg0, %c0_i32_0 : i32, i32, i32
  }
  func.func @transform_5(%arg0: i32) -> (i32, i32) {
    %c0_i32 = arith.constant 0 : i32
    %c0_i32_0 = arith.constant 0 : i32
    return %arg0, %c0_i32 : i32, i32
  }
  func.func @transform_6(%arg0: i32) -> (i32, i32, i32) {
    %c0_i32 = arith.constant 0 : i32
    %c0_i32_0 = arith.constant 0 : i32
    %c0_i32_1 = arith.constant 0 : i32
    return %c0_i32, %arg0, %c0_i32_0 : i32, i32, i32
  }
  func.func @transform_7(%arg0: i32) -> (i32, i32, i32) {
    %c0_i32 = arith.constant 0 : i32
    %c0_i32_0 = arith.constant 0 : i32
    %c0_i32_1 = arith.constant 0 : i32
    return %c0_i32, %arg0, %c0_i32_0 : i32, i32, i32
  }
}

</mosaic_0001>

<llo_original>
// kernel: custom-call.1
$region0: #{custom-call.1}
  %s0 = inlined_call_operand.hbm [shape: c64[4,128,65], index: 0, kind: input, shape index: {}]
  %s1 = inlined_call_operand.vmem [shape: f32[4,128,65], index: 1, kind: output, shape index: {}]
  %s2 = scalar_lea.hbm %s0, 260
  $region1: #{custom-call.1} parent=0
    #allocation0 [shape = 's32[1]{0}', space=sflag, size = 0x4, scoped, tag = 'scoped memory for custom-call.1']
    %3 = vsyncpa [#allocation0], 0
    %s5 = sshll.u32 %s2, 4
    %s6 = int_to_ptr.hbm [resolvable:$true] %s5
    %s7 = sshll.u32 %s1, 4
    %s8 = int_to_ptr.vmem [resolvable:$true] %s7
    %10 = dma.hbm_to_vmem [thread:$0]  %s6, 4160, %s8, [#allocation0]
    %12 = dma.done [#allocation0], 4160
    %13 = vsyncpa [#allocation0], 1

// kernel: custom-call
$region0: #{custom-call}
  %s0 = inlined_call_operand.hbm [shape: c64[4,128,65], index: 0, kind: input, shape index: {}]
  %s1 = inlined_call_operand.vmem [shape: f32[4,128,65], index: 1, kind: output, shape index: {}]
  $region1: #{custom-call} parent=0
    #allocation0 [shape = 's32[1]{0}', space=sflag, size = 0x4, scoped, tag = 'scoped memory for custom-call']
    %2 = vsyncpa [#allocation0], 0
    %s4 = sshll.u32 %s0, 4
    %s5 = int_to_ptr.hbm [resolvable:$true] %s4
    %s6 = sshll.u32 %s1, 4
    %s7 = int_to_ptr.vmem [resolvable:$true] %s6
    %9 = dma.hbm_to_vmem [thread:$0]  %s5, 4160, %s7, [#allocation0]
    %11 = dma.done [#allocation0], 4160
    %12 = vsyncpa [#allocation0], 1

// kernel: reverse.0
$region0: #{reverse.0}
  %s0 = inlined_call_operand.vmem [shape: f32[4,128,63], index: 0, kind: input, shape index: {}]
  %s1 = inlined_call_operand.vmem [shape: f32[4,128,63], index: 1, kind: output, shape index: {}]
  $region1: #{reverse.0} parent=0
    #allocation0 [shape = 'u8[147456]{0}', space=vmem, size = 0x24000, scoped, tag = 'operand span for operand 0']
    #allocation1 [shape = 'u8[131072]{0}', space=vmem, size = 0x20000, scoped, tag = 'operand span for operand 1']
    %s2 = scalar_lea.vmem [#allocation0], 8
    // Predicated region
    $region2: #{reverse.0} parent=1 // pred_check
      _
    $region3: #{reverse.0} parent=1 // pred_check_branch
      %4 = sbr.rel (0) target = $region5
    $region4: #{reverse.0} parent=1 // pred_region
      // Predicated region
      $region6: #{reverse.0} parent=4 // pred_check
        _
      $region7: #{reverse.0} parent=4 // pred_check_branch
        %6 = sbr.rel (0) target = $region9
      $region8: #{reverse.0} parent=4 // pred_region
        // Predicated region
        $region21: #{reverse.0} parent=8 // pred_check
          _
        $region22: #{reverse.0} parent=8 // pred_check_branch
          %84 = sbr.rel (0) target = $region24
        $region23: #{reverse.0} parent=8 // pred_region
          loop: start=0, step=1, limit=1
          $region25: #{reverse.0} parent=23 // loop_pre_header
            _
          $region26: #{reverse.0} parent=23 // loop_header
            %s86 = sphi 0, %s90
            %p87 = scmp.ge.s32.totalorder %s86, 1
            %s91 = sphi %s0, %s0
            %s92 = sphi %s2, %s2
          $region27: #{reverse.0} parent=23 // loop_header_branch
            %89 = sbr.rel (%p87) target = $region31
          $region28: #{reverse.0} parent=23 // loop_body
            %v93 = vld [vmem:[%s91] sm:$0xff]
            %94 = vst [vmem:[%s92] sm:$0xff] %v93
            %v95 = vld [vmem:[%s91 + $0x8] sm:$0xff]
            %96 = vst [vmem:[%s92 + $0x8] sm:$0xff] %v95
            %v97 = vld [vmem:[%s91 + $0x10] sm:$0xff]
            %98 = vst [vmem:[%s92 + $0x10] sm:$0xff] %v97
            %v99 = vld [vmem:[%s91 + $0x18] sm:$0xff]
            %100 = vst [vmem:[%s92 + $0x18] sm:$0xff] %v99
            %v101 = vld [vmem:[%s91 + $0x20] sm:$0xff]
            %102 = vst [vmem:[%s92 + $0x20] sm:$0xff] %v101
            %v103 = vld [vmem:[%s91 + $0x28] sm:$0xff]
            %104 = vst [vmem:[%s92 + $0x28] sm:$0xff] %v103
            %v105 = vld [vmem:[%s91 + $0x30] sm:$0xff]
            %106 = vst [vmem:[%s92 + $0x30] sm:$0xff] %v105
            %v107 = vld [vmem:[%s91 + $0x38] sm:$0xff]
            %108 = vst [vmem:[%s92 + $0x38] sm:$0xff] %v107
            %v109 = vld [vmem:[%s91 + $0x40] sm:$0xff]
            %110 = vst [vmem:[%s92 + $0x48] sm:$0xff] %v109
            %v111 = vld [vmem:[%s91 + $0x48] sm:$0xff]
            %112 = vst [vmem:[%s92 + $0x50] sm:$0xff] %v111
            %v113 = vld [vmem:[%s91 + $0x50] sm:$0xff]
            %114 = vst [vmem:[%s92 + $0x58] sm:$0xff] %v113
            %v115 = vld [vmem:[%s91 + $0x58] sm:$0xff]
            %116 = vst [vmem:[%s92 + $0x60] sm:$0xff] %v115
            %v117 = vld [vmem:[%s91 + $0x60] sm:$0xff]
            %118 = vst [vmem:[%s92 + $0x68] sm:$0xff] %v117
            %v119 = vld [vmem:[%s91 + $0x68] sm:$0xff]
            %120 = vst [vmem:[%s92 + $0x70] sm:$0xff] %v119
            %v121 = vld [vmem:[%s91 + $0x70] sm:$0xff]
            %122 = vst [vmem:[%s92 + $0x78] sm:$0xff] %v121
            %v123 = vld [vmem:[%s91 + $0x78] sm:$0xff]
            %124 = vst [vmem:[%s92 + $0x80] sm:$0xff] %v123
            %v125 = vld [vmem:[%s91 + $0x80] sm:$0xff]
            %126 = vst [vmem:[%s92 + $0x90] sm:$0xff] %v125
            %v127 = vld [vmem:[%s91 + $0x88] sm:$0xff]
            %128 = vst [vmem:[%s92 + $0x98] sm:$0xff] %v127
            %v129 = vld [vmem:[%s91 + $0x90] sm:$0xff]
            %130 = vst [vmem:[%s92 + $0xa0] sm:$0xff] %v129
            %v131 = vld [vmem:[%s91 + $0x98] sm:$0xff]
            %132 = vst [vmem:[%s92 + $0xa8] sm:$0xff] %v131
            %v133 = vld [vmem:[%s91 + $0xa0] sm:$0xff]
            %134 = vst [vmem:[%s92 + $0xb0] sm:$0xff] %v133
            %v135 = vld [vmem:[%s91 + $0xa8] sm:$0xff]
            %136 = vst [vmem:[%s92 + $0xb8] sm:$0xff] %v135
            %v137 = vld [vmem:[%s91 + $0xb0] sm:$0xff]
            %138 = vst [vmem:[%s92 + $0xc0] sm:$0xff] %v137
            %v139 = vld [vmem:[%s91 + $0xb8] sm:$0xff]
            %140 = vst [vmem:[%s92 + $0xc8] sm:$0xff] %v139
            %v141 = vld [vmem:[%s91 + $0xc0] sm:$0xff]
            %142 = vst [vmem:[%s92 + $0xd8] sm:$0xff] %v141
            %v143 = vld [vmem:[%s91 + $0xc8] sm:$0xff]
            %144 = vst [vmem:[%s92 + $0xe0] sm:$0xff] %v143
            %v145 = vld [vmem:[%s91 + $0xd0] sm:$0xff]
            %146 = vst [vmem:[%s92 + $0xe8] sm:$0xff] %v145
            %v147 = vld [vmem:[%s91 + $0xd8] sm:$0xff]
            %148 = vst [vmem:[%s92 + $0xf0] sm:$0xff] %v147
            %v149 = vld [vmem:[%s91 + $0xe0] sm:$0xff]
            %150 = vst [vmem:[%s92 + $0xf8] sm:$0xff] %v149
            %v151 = vld [vmem:[%s91 + $0xe8] sm:$0xff]
            %152 = vst [vmem:[%s92 + $0x100] sm:$0xff] %v151
            %v153 = vld [vmem:[%s91 + $0xf0] sm:$0xff]
            %154 = vst [vmem:[%s92 + $0x108] sm:$0xff] %v153
            %v155 = vld [vmem:[%s91 + $0xf8] sm:$0xff]
            %156 = vst [vmem:[%s92 + $0x110] sm:$0xff] %v155
          $region29: #{reverse.0} parent=23 // loop_footer
            %s90 = sadd.s32 1, %s86
          $region30: #{reverse.0} parent=23 // loop_footer_branch
            %85 = sbr.rel target = $region26
          $region31: #{reverse.0} parent=23 // loop_exit
            _
        $region24: #{reverse.0} parent=8 // pred_fallthru
          _
        // Predicated region
        $region32: #{reverse.0} parent=8 // pred_check
          _
        $region33: #{reverse.0} parent=8 // pred_check_branch
          %158 = sbr.rel target = $region35
        $region34: #{reverse.0} parent=8 // pred_region
          _
        $region35: #{reverse.0} parent=8 // pred_fallthru
          _
      $region9: #{reverse.0} parent=4 // pred_fallthru
        _
      // Predicated region
      $region10: #{reverse.0} parent=4 // pred_check
        _
      $region11: #{reverse.0} parent=4 // pred_check_branch
        %8 = sbr.rel target = $region13
      $region12: #{reverse.0} parent=4 // pred_region
        %s10 = ssub.s32 256, 1
        loop: start=0, step=1, limit=1
        $region14: #{reverse.0} parent=12 // loop_pre_header
          _
        $region15: #{reverse.0} parent=12 // loop_header
          %s12 = sphi 0, %s16
          %p13 = scmp.ge.s32.totalorder %s12, 1
          %s17 = sphi %s0, %s0
          %s18 = sphi %s2, %s2
        $region16: #{reverse.0} parent=12 // loop_header_branch
          %15 = sbr.rel (%p13) target = $region20
        $region17: #{reverse.0} parent=12 // loop_body
          %v19 = vld [vmem:[%s17] sm:%s10]
          %20 = vst [vmem:[%s18] sm:%s10] %v19
          %v21 = vld [vmem:[%s17 + $0x8] sm:%s10]
          %22 = vst [vmem:[%s18 + $0x8] sm:%s10] %v21
          %v23 = vld [vmem:[%s17 + $0x10] sm:%s10]
          %24 = vst [vmem:[%s18 + $0x10] sm:%s10] %v23
          %v25 = vld [vmem:[%s17 + $0x18] sm:%s10]
          %26 = vst [vmem:[%s18 + $0x18] sm:%s10] %v25
          %v27 = vld [vmem:[%s17 + $0x20] sm:%s10]
          %28 = vst [vmem:[%s18 + $0x20] sm:%s10] %v27
          %v29 = vld [vmem:[%s17 + $0x28] sm:%s10]
          %30 = vst [vmem:[%s18 + $0x28] sm:%s10] %v29
          %v31 = vld [vmem:[%s17 + $0x30] sm:%s10]
          %32 = vst [vmem:[%s18 + $0x30] sm:%s10] %v31
          %v33 = vld [vmem:[%s17 + $0x38] sm:%s10]
          %34 = vst [vmem:[%s18 + $0x38] sm:%s10] %v33
          %v35 = vld [vmem:[%s17 + $0x40] sm:%s10]
          %36 = vst [vmem:[%s18 + $0x48] sm:%s10] %v35
          %v37 = vld [vmem:[%s17 + $0x48] sm:%s10]
          %38 = vst [vmem:[%s18 + $0x50] sm:%s10] %v37
          %v39 = vld [vmem:[%s17 + $0x50] sm:%s10]
          %40 = vst [vmem:[%s18 + $0x58] sm:%s10] %v39
          %v41 = vld [vmem:[%s17 + $0x58] sm:%s10]
          %42 = vst [vmem:[%s18 + $0x60] sm:%s10] %v41
          %v43 = vld [vmem:[%s17 + $0x60] sm:%s10]
          %44 = vst [vmem:[%s18 + $0x68] sm:%s10] %v43
          %v45 = vld [vmem:[%s17 + $0x68] sm:%s10]
          %46 = vst [vmem:[%s18 + $0x70] sm:%s10] %v45
          %v47 = vld [vmem:[%s17 + $0x70] sm:%s10]
          %48 = vst [vmem:[%s18 + $0x78] sm:%s10] %v47
          %v49 = vld [vmem:[%s17 + $0x78] sm:%s10]
          %50 = vst [vmem:[%s18 + $0x80] sm:%s10] %v49
          %v51 = vld [vmem:[%s17 + $0x80] sm:%s10]
          %52 = vst [vmem:[%s18 + $0x90] sm:%s10] %v51
          %v53 = vld [vmem:[%s17 + $0x88] sm:%s10]
          %54 = vst [vmem:[%s18 + $0x98] sm:%s10] %v53
          %v55 = vld [vmem:[%s17 + $0x90] sm:%s10]
          %56 = vst [vmem:[%s18 + $0xa0] sm:%s10] %v55
          %v57 = vld [vmem:[%s17 + $0x98] sm:%s10]
          %58 = vst [vmem:[%s18 + $0xa8] sm:%s10] %v57
          %v59 = vld [vmem:[%s17 + $0xa0] sm:%s10]
          %60 = vst [vmem:[%s18 + $0xb0] sm:%s10] %v59
          %v61 = vld [vmem:[%s17 + $0xa8] sm:%s10]
          %62 = vst [vmem:[%s18 + $0xb8] sm:%s10] %v61
          %v63 = vld [vmem:[%s17 + $0xb0] sm:%s10]
          %64 = vst [vmem:[%s18 + $0xc0] sm:%s10] %v63
          %v65 = vld [vmem:[%s17 + $0xb8] sm:%s10]
          %66 = vst [vmem:[%s18 + $0xc8] sm:%s10] %v65
          %v67 = vld [vmem:[%s17 + $0xc0] sm:%s10]
          %68 = vst [vmem:[%s18 + $0xd8] sm:%s10] %v67
          %v69 = vld [vmem:[%s17 + $0xc8] sm:%s10]
          %70 = vst [vmem:[%s18 + $0xe0] sm:%s10] %v69
          %v71 = vld [vmem:[%s17 + $0xd0] sm:%s10]
          %72 = vst [vmem:[%s18 + $0xe8] sm:%s10] %v71
          %v73 = vld [vmem:[%s17 + $0xd8] sm:%s10]
          %74 = vst [vmem:[%s18 + $0xf0] sm:%s10] %v73
          %v75 = vld [vmem:[%s17 + $0xe0] sm:%s10]
          %76 = vst [vmem:[%s18 + $0xf8] sm:%s10] %v75
          %v77 = vld [vmem:[%s17 + $0xe8] sm:%s10]
          %78 = vst [vmem:[%s18 + $0x100] sm:%s10] %v77
          %v79 = vld [vmem:[%s17 + $0xf0] sm:%s10]
          %80 = vst [vmem:[%s18 + $0x108] sm:%s10] %v79
          %v81 = vld [vmem:[%s17 + $0xf8] sm:%s10]
          %82 = vst [vmem:[%s18 + $0x110] sm:%s10] %v81
        $region18: #{reverse.0} parent=12 // loop_footer
          %s16 = sadd.s32 1, %s12
        $region19: #{reverse.0} parent=12 // loop_footer_branch
          %11 = sbr.rel target = $region15
        $region20: #{reverse.0} parent=12 // loop_exit
          _
      $region13: #{reverse.0} parent=4 // pred_fallthru
        _
    $region5: #{reverse.0} parent=1 // pred_fallthru
      _
    %159 = vnop
    %s160 = scalar_lea.vmem [#allocation0], 56
    %s161 = scalar_lea.vmem %s160, 7 [#allocation0]
    %v162 = vld [vmem:[%s161] ss:$-1 sm:$0xff]
    %v163 = vrot.slane %v162, 1
    %164 = vst [vmem:[#allocation1] sm:$0xff] %v163
    %s165 = scalar_lea.vmem [#allocation0], 64
    %s166 = scalar_lea.vmem %s165, 7 [#allocation0]
    %v167 = vld [vmem:[%s166] ss:$-1 sm:$0xff]
    %v168 = vrot.slane %v167, 1
    %v169 = vlaneseq
    %v170 = vshrl.u32 %v169, 7
    %vm171 = vcmp.lt.s32.totalorder %v170, 7
    %172 = vst.msk [vmem:[#allocation1] sm:$0xff] %vm171, %v168
    %s173 = scalar_lea.vmem [#allocation1], 8
    %s174 = scalar_lea.vmem [#allocation0], 48
    %s175 = scalar_lea.vmem %s174, 7 [#allocation0]
    %v176 = vld [vmem:[%s175] ss:$-1 sm:$0xff]
    %v177 = vrot.slane %v176, 1
    %178 = vst [vmem:[%s173] sm:$0xff] %v177
    %s179 = scalar_lea.vmem [#allocation0], 56
    %s180 = scalar_lea.vmem %s179, 7 [#allocation0]
    %v181 = vld [vmem:[%s180] ss:$-1 sm:$0xff]
    %v182 = vrot.slane %v181, 1
    %v183 = vlaneseq
    %v184 = vshrl.u32 %v183, 7
    %vm185 = vcmp.lt.s32.totalorder %v184, 7
    %186 = vst.msk [vmem:[%s173] sm:$0xff] %vm185, %v182
    %s187 = scalar_lea.vmem [#allocation1], 16
    %s188 = scalar_lea.vmem [#allocation0], 40
    %s189 = scalar_lea.vmem %s188, 7 [#allocation0]
    %v190 = vld [vmem:[%s189] ss:$-1 sm:$0xff]
    %v191 = vrot.slane %v190, 1
    %192 = vst [vmem:[%s187] sm:$0xff] %v191
    %s193 = scalar_lea.vmem [#allocation0], 48
    %s194 = scalar_lea.vmem %s193, 7 [#allocation0]
    %v195 = vld [vmem:[%s194] ss:$-1 sm:$0xff]
    %v196 = vrot.slane %v195, 1
    %v197 = vlaneseq
    %v198 = vshrl.u32 %v197, 7
    %vm199 = vcmp.lt.s32.totalorder %v198, 7
    %200 = vst.msk [vmem:[%s187] sm:$0xff] %vm199, %v196
    %s201 = scalar_lea.vmem [#allocation1], 24
    %s202 = scalar_lea.vmem [#allocation0], 32
    %s203 = scalar_lea.vmem %s202, 7 [#allocation0]
    %v204 = vld [vmem:[%s203] ss:$-1 sm:$0xff]
    %v205 = vrot.slane %v204, 1
    %206 = vst [vmem:[%s201] sm:$0xff] %v205
    %s207 = scalar_lea.vmem [#allocation0], 40
    %s208 = scalar_lea.vmem %s207, 7 [#allocation0]
    %v209 = vld [vmem:[%s208] ss:$-1 sm:$0xff]
    %v210 = vrot.slane %v209, 1
    %v211 = vlaneseq
    %v212 = vshrl.u32 %v211, 7
    %vm213 = vcmp.lt.s32.totalorder %v212, 7
    %214 = vst.msk [vmem:[%s201] sm:$0xff] %vm213, %v210
    %s215 = scalar_lea.vmem [#allocation1], 32
    %s216 = scalar_lea.vmem [#allocation0], 24
    %s217 = scalar_lea.vmem %s216, 7 [#allocation0]
    %v218 = vld [vmem:[%s217] ss:$-1 sm:$0xff]
    %v219 = vrot.slane %v218, 1
    %220 = vst [vmem:[%s215] sm:$0xff] %v219
    %s221 = scalar_lea.vmem [#allocation0], 32
    %s222 = scalar_lea.vmem %s221, 7 [#allocation0]
    %v223 = vld [vmem:[%s222] ss:$-1 sm:$0xff]
    %v224 = vrot.slane %v223, 1
    %v225 = vlaneseq
    %v226 = vshrl.u32 %v225, 7
    %vm227 = vcmp.lt.s32.totalorder %v226, 7
    %228 = vst.msk [vmem:[%s215] sm:$0xff] %vm227, %v224
    %s229 = scalar_lea.vmem [#allocation1], 40
    %s230 = scalar_lea.vmem [#allocation0], 16
    %s231 = scalar_lea.vmem %s230, 7 [#allocation0]
    %v232 = vld [vmem:[%s231] ss:$-1 sm:$0xff]
    %v233 = vrot.slane %v232, 1
    %234 = vst [vmem:[%s229] sm:$0xff] %v233
    %s235 = scalar_lea.vmem [#allocation0], 24
    %s236 = scalar_lea.vmem %s235, 7 [#allocation0]
    %v237 = vld [vmem:[%s236] ss:$-1 sm:$0xff]
    %v238 = vrot.slane %v237, 1
    %v239 = vlaneseq
    %v240 = vshrl.u32 %v239, 7
    %vm241 = vcmp.lt.s32.totalorder %v240, 7
    %242 = vst.msk [vmem:[%s229] sm:$0xff] %vm241, %v238
    %s243 = scalar_lea.vmem [#allocation1], 48
    %s244 = scalar_lea.vmem [#allocation0], 8
    %s245 = scalar_lea.vmem %s244, 7 [#allocation0]
    %v246 = vld [vmem:[%s245] ss:$-1 sm:$0xff]
    %v247 = vrot.slane %v246, 1
    %248 = vst [vmem:[%s243] sm:$0xff] %v247
    %s249 = scalar_lea.vmem [#allocation0], 16
    %s250 = scalar_lea.vmem %s249, 7 [#allocation0]
    %v251 = vld [vmem:[%s250] ss:$-1 sm:$0xff]
    %v252 = vrot.slane %v251, 1
    %v253 = vlaneseq
    %v254 = vshrl.u32 %v253, 7
    %vm255 = vcmp.lt.s32.totalorder %v254, 7
    %256 = vst.msk [vmem:[%s243] sm:$0xff] %vm255, %v252
    %s257 = scalar_lea.vmem [#allocation1], 56
    %s258 = scalar_lea.vmem [#allocation0], 7
    %v259 = vld [vmem:[%s258] ss:$-1 sm:$0xff]
    %v260 = vrot.slane %v259, 1
    %261 = vst [vmem:[%s257] sm:$0xff] %v260
    %s262 = scalar_lea.vmem [#allocation0], 8
    %s263 = scalar_lea.vmem %s262, 7 [#allocation0]
    %v264 = vld [vmem:[%s263] ss:$-1 sm:$0xff]
    %v265 = vrot.slane %v264, 1
    %v266 = vlaneseq
    %v267 = vshrl.u32 %v266, 7
    %vm268 = vcmp.lt.s32.totalorder %v267, 7
    %269 = vst.msk [vmem:[%s257] sm:$0xff] %vm268, %v265
    %s270 = scalar_lea.vmem [#allocation1], 64
    %s271 = scalar_lea.vmem [#allocation0], 72
    %s272 = scalar_lea.vmem %s271, 56 [#allocation0]
    %s273 = scalar_lea.vmem %s272, 7 [#allocation0]
    %v274 = vld [vmem:[%s273] ss:$-1 sm:$0xff]
    %v275 = vrot.slane %v274, 1
    %276 = vst [vmem:[%s270] sm:$0xff] %v275
    %s277 = scalar_lea.vmem %s271, 64 [#allocation0]
    %s278 = scalar_lea.vmem %s277, 7 [#allocation0]
    %v279 = vld [vmem:[%s278] ss:$-1 sm:$0xff]
    %v280 = vrot.slane %v279, 1
    %v281 = vlaneseq
    %v282 = vshrl.u32 %v281, 7
    %vm283 = vcmp.lt.s32.totalorder %v282, 7
    %284 = vst.msk [vmem:[%s270] sm:$0xff] %vm283, %v280
    %s285 = scalar_lea.vmem %s270, 8 [#allocation1]
    %s286 = scalar_lea.vmem %s271, 48 [#allocation0]
    %s287 = scalar_lea.vmem %s286, 7 [#allocation0]
    %v288 = vld [vmem:[%s287] ss:$-1 sm:$0xff]
    %v289 = vrot.slane %v288, 1
    %290 = vst [vmem:[%s285] sm:$0xff] %v289
    %s291 = scalar_lea.vmem %s271, 56 [#allocation0]
    %s292 = scalar_lea.vmem %s291, 7 [#allocation0]
    %v293 = vld [vmem:[%s292] ss:$-1 sm:$0xff]
    %v294 = vrot.slane %v293, 1
    %v295 = vlaneseq
    %v296 = vshrl.u32 %v295, 7
    %vm297 = vcmp.lt.s32.totalorder %v296, 7
    %298 = vst.msk [vmem:[%s285] sm:$0xff] %vm297, %v294
    %s299 = scalar_lea.vmem %s270, 16 [#allocation1]
    %s300 = scalar_lea.vmem %s271, 40 [#allocation0]
    %s301 = scalar_lea.vmem %s300, 7 [#allocation0]
    %v302 = vld [vmem:[%s301] ss:$-1 sm:$0xff]
    %v303 = vrot.slane %v302, 1
    %304 = vst [vmem:[%s299] sm:$0xff] %v303
    %s305 = scalar_lea.vmem %s271, 48 [#allocation0]
    %s306 = scalar_lea.vmem %s305, 7 [#allocation0]
    %v307 = vld [vmem:[%s306] ss:$-1 sm:$0xff]
    %v308 = vrot.slane %v307, 1
    %v309 = vlaneseq
    %v310 = vshrl.u32 %v309, 7
    %vm311 = vcmp.lt.s32.totalorder %v310, 7
    %312 = vst.msk [vmem:[%s299] sm:$0xff] %vm311, %v308
    %s313 = scalar_lea.vmem %s270, 24 [#allocation1]
    %s314 = scalar_lea.vmem %s271, 32 [#allocation0]
    %s315 = scalar_lea.vmem %s314, 7 [#allocation0]
    %v316 = vld [vmem:[%s315] ss:$-1 sm:$0xff]
    %v317 = vrot.slane %v316, 1
    %318 = vst [vmem:[%s313] sm:$0xff] %v317
    %s319 = scalar_lea.vmem %s271, 40 [#allocation0]
    %s320 = scalar_lea.vmem %s319, 7 [#allocation0]
    %v321 = vld [vmem:[%s320] ss:$-1 sm:$0xff]
    %v322 = vrot.slane %v321, 1
    %v323 = vlaneseq
    %v324 = vshrl.u32 %v323, 7
    %vm325 = vcmp.lt.s32.totalorder %v324, 7
    %326 = vst.msk [vmem:[%s313] sm:$0xff] %vm325, %v322
    %s327 = scalar_lea.vmem %s270, 32 [#allocation1]
    %s328 = scalar_lea.vmem %s271, 24 [#allocation0]
    %s329 = scalar_lea.vmem %s328, 7 [#allocation0]
    %v330 = vld [vmem:[%s329] ss:$-1 sm:$0xff]
    %v331 = vrot.slane %v330, 1
    %332 = vst [vmem:[%s327] sm:$0xff] %v331
    %s333 = scalar_lea.vmem %s271, 32 [#allocation0]
    %s334 = scalar_lea.vmem %s333, 7 [#allocation0]
    %v335 = vld [vmem:[%s334] ss:$-1 sm:$0xff]
    %v336 = vrot.slane %v335, 1
    %v337 = vlaneseq
    %v338 = vshrl.u32 %v337, 7
    %vm339 = vcmp.lt.s32.totalorder %v338, 7
    %340 = vst.msk [vmem:[%s327] sm:$0xff] %vm339, %v336
    %s341 = scalar_lea.vmem %s270, 40 [#allocation1]
    %s342 = scalar_lea.vmem %s271, 16 [#allocation0]
    %s343 = scalar_lea.vmem %s342, 7 [#allocation0]
    %v344 = vld [vmem:[%s343] ss:$-1 sm:$0xff]
    %v345 = vrot.slane %v344, 1
    %346 = vst [vmem:[%s341] sm:$0xff] %v345
    %s347 = scalar_lea.vmem %s271, 24 [#allocation0]
    %s348 = scalar_lea.vmem %s347, 7 [#allocation0]
    %v349 = vld [vmem:[%s348] ss:$-1 sm:$0xff]
    %v350 = vrot.slane %v349, 1
    %v351 = vlaneseq
    %v352 = vshrl.u32 %v351, 7
    %vm353 = vcmp.lt.s32.totalorder %v352, 7
    %354 = vst.msk [vmem:[%s341] sm:$0xff] %vm353, %v350
    %s355 = scalar_lea.vmem %s270, 48 [#allocation1]
    %s356 = scalar_lea.vmem %s271, 8 [#allocation0]
    %s357 = scalar_lea.vmem %s356, 7 [#allocation0]
    %v358 = vld [vmem:[%s357] ss:$-1 sm:$0xff]
    %v359 = vrot.slane %v358, 1
    %360 = vst [vmem:[%s355] sm:$0xff] %v359
    %s361 = scalar_lea.vmem %s271, 16 [#allocation0]
    %s362 = scalar_lea.vmem %s361, 7 [#allocation0]
    %v363 = vld [vmem:[%s362] ss:$-1 sm:$0xff]
    %v364 = vrot.slane %v363, 1
    %v365 = vlaneseq
    %v366 = vshrl.u32 %v365, 7
    %vm367 = vcmp.lt.s32.totalorder %v366, 7
    %368 = vst.msk [vmem:[%s355] sm:$0xff] %vm367, %v364
    %s369 = scalar_lea.vmem %s270, 56 [#allocation1]
    %s370 = scalar_lea.vmem %s271, 7 [#allocation0]
    %v371 = vld [vmem:[%s370] ss:$-1 sm:$0xff]
    %v372 = vrot.slane %v371, 1
    %373 = vst [vmem:[%s369] sm:$0xff] %v372
    %s374 = scalar_lea.vmem %s271, 8 [#allocation0]
    %s375 = scalar_lea.vmem %s374, 7 [#allocation0]
    %v376 = vld [vmem:[%s375] ss:$-1 sm:$0xff]
    %v377 = vrot.slane %v376, 1
    %v378 = vlaneseq
    %v379 = vshrl.u32 %v378, 7
    %vm380 = vcmp.lt.s32.totalorder %v379, 7
    %381 = vst.msk [vmem:[%s369] sm:$0xff] %vm380, %v377
    %s382 = scalar_lea.vmem [#allocation1], 128
    %s383 = scalar_lea.vmem [#allocation0], 144
    %s384 = scalar_lea.vmem %s383, 56 [#allocation0]
    %s385 = scalar_lea.vmem %s384, 7 [#allocation0]
    %v386 = vld [vmem:[%s385] ss:$-1 sm:$0xff]
    %v387 = vrot.slane %v386, 1
    %388 = vst [vmem:[%s382] sm:$0xff] %v387
    %s389 = scalar_lea.vmem %s383, 64 [#allocation0]
    %s390 = scalar_lea.vmem %s389, 7 [#allocation0]
    %v391 = vld [vmem:[%s390] ss:$-1 sm:$0xff]
    %v392 = vrot.slane %v391, 1
    %v393 = vlaneseq
    %v394 = vshrl.u32 %v393, 7
    %vm395 = vcmp.lt.s32.totalorder %v394, 7
    %396 = vst.msk [vmem:[%s382] sm:$0xff] %vm395, %v392
    %s397 = scalar_lea.vmem %s382, 8 [#allocation1]
    %s398 = scalar_lea.vmem %s383, 48 [#allocation0]
    %s399 = scalar_lea.vmem %s398, 7 [#allocation0]
    %v400 = vld [vmem:[%s399] ss:$-1 sm:$0xff]
    %v401 = vrot.slane %v400, 1
    %402 = vst [vmem:[%s397] sm:$0xff] %v401
    %s403 = scalar_lea.vmem %s383, 56 [#allocation0]
    %s404 = scalar_lea.vmem %s403, 7 [#allocation0]
    %v405 = vld [vmem:[%s404] ss:$-1 sm:$0xff]
    %v406 = vrot.slane %v405, 1
    %v407 = vlaneseq
    %v408 = vshrl.u32 %v407, 7
    %vm409 = vcmp.lt.s32.totalorder %v408, 7
    %410 = vst.msk [vmem:[%s397] sm:$0xff] %vm409, %v406
    %s411 = scalar_lea.vmem %s382, 16 [#allocation1]
    %s412 = scalar_lea.vmem %s383, 40 [#allocation0]
    %s413 = scalar_lea.vmem %s412, 7 [#allocation0]
    %v414 = vld [vmem:[%s413] ss:$-1 sm:$0xff]
    %v415 = vrot.slane %v414, 1
    %416 = vst [vmem:[%s411] sm:$0xff] %v415
    %s417 = scalar_lea.vmem %s383, 48 [#allocation0]
    %s418 = scalar_lea.vmem %s417, 7 [#allocation0]
    %v419 = vld [vmem:[%s418] ss:$-1 sm:$0xff]
    %v420 = vrot.slane %v419, 1
    %v421 = vlaneseq
    %v422 = vshrl.u32 %v421, 7
    %vm423 = vcmp.lt.s32.totalorder %v422, 7
    %424 = vst.msk [vmem:[%s411] sm:$0xff] %vm423, %v420
    %s425 = scalar_lea.vmem %s382, 24 [#allocation1]
    %s426 = scalar_lea.vmem %s383, 32 [#allocation0]
    %s427 = scalar_lea.vmem %s426, 7 [#allocation0]
    %v428 = vld [vmem:[%s427] ss:$-1 sm:$0xff]
    %v429 = vrot.slane %v428, 1
    %430 = vst [vmem:[%s425] sm:$0xff] %v429
    %s431 = scalar_lea.vmem %s383, 40 [#allocation0]
    %s432 = scalar_lea.vmem %s431, 7 [#allocation0]
    %v433 = vld [vmem:[%s432] ss:$-1 sm:$0xff]
    %v434 = vrot.slane %v433, 1
    %v435 = vlaneseq
    %v436 = vshrl.u32 %v435, 7
    %vm437 = vcmp.lt.s32.totalorder %v436, 7
    %438 = vst.msk [vmem:[%s425] sm:$0xff] %vm437, %v434
    %s439 = scalar_lea.vmem %s382, 32 [#allocation1]
    %s440 = scalar_lea.vmem %s383, 24 [#allocation0]
    %s441 = scalar_lea.vmem %s440, 7 [#allocation0]
    %v442 = vld [vmem:[%s441] ss:$-1 sm:$0xff]
    %v443 = vrot.slane %v442, 1
    %444 = vst [vmem:[%s439] sm:$0xff] %v443
    %s445 = scalar_lea.vmem %s383, 32 [#allocation0]
    %s446 = scalar_lea.vmem %s445, 7 [#allocation0]
    %v447 = vld [vmem:[%s446] ss:$-1 sm:$0xff]
    %v448 = vrot.slane %v447, 1
    %v449 = vlaneseq
    %v450 = vshrl.u32 %v449, 7
    %vm451 = vcmp.lt.s32.totalorder %v450, 7
    %452 = vst.msk [vmem:[%s439] sm:$0xff] %vm451, %v448
    %s453 = scalar_lea.vmem %s382, 40 [#allocation1]
    %s454 = scalar_lea.vmem %s383, 16 [#allocation0]
    %s455 = scalar_lea.vmem %s454, 7 [#allocation0]
    %v456 = vld [vmem:[%s455] ss:$-1 sm:$0xff]
    %v457 = vrot.slane %v456, 1
    %458 = vst [vmem:[%s453] sm:$0xff] %v457
    %s459 = scalar_lea.vmem %s383, 24 [#allocation0]
    %s460 = scalar_lea.vmem %s459, 7 [#allocation0]
    %v461 = vld [vmem:[%s460] ss:$-1 sm:$0xff]
    %v462 = vrot.slane %v461, 1
    %v463 = vlaneseq
    %v464 = vshrl.u32 %v463, 7
    %vm465 = vcmp.lt.s32.totalorder %v464, 7
    %466 = vst.msk [vmem:[%s453] sm:$0xff] %vm465, %v462
    %s467 = scalar_lea.vmem %s382, 48 [#allocation1]
    %s468 = scalar_lea.vmem %s383, 8 [#allocation0]
    %s469 = scalar_lea.vmem %s468, 7 [#allocation0]
    %v470 = vld [vmem:[%s469] ss:$-1 sm:$0xff]
    %v471 = vrot.slane %v470, 1
    %472 = vst [vmem:[%s467] sm:$0xff] %v471
    %s473 = scalar_lea.vmem %s383, 16 [#allocation0]
    %s474 = scalar_lea.vmem %s473, 7 [#allocation0]
    %v475 = vld [vmem:[%s474] ss:$-1 sm:$0xff]
    %v476 = vrot.slane %v475, 1
    %v477 = vlaneseq
    %v478 = vshrl.u32 %v477, 7
    %vm479 = vcmp.lt.s32.totalorder %v478, 7
    %480 = vst.msk [vmem:[%s467] sm:$0xff] %vm479, %v476
    %s481 = scalar_lea.vmem %s382, 56 [#allocation1]
    %s482 = scalar_lea.vmem %s383, 7 [#allocation0]
    %v483 = vld [vmem:[%s482] ss:$-1 sm:$0xff]
    %v484 = vrot.slane %v483, 1
    %485 = vst [vmem:[%s481] sm:$0xff] %v484
    %s486 = scalar_lea.vmem %s383, 8 [#allocation0]
    %s487 = scalar_lea.vmem %s486, 7 [#allocation0]
    %v488 = vld [vmem:[%s487] ss:$-1 sm:$0xff]
    %v489 = vrot.slane %v488, 1
    %v490 = vlaneseq
    %v491 = vshrl.u32 %v490, 7
    %vm492 = vcmp.lt.s32.totalorder %v491, 7
    %493 = vst.msk [vmem:[%s481] sm:$0xff] %vm492, %v489
    %s494 = scalar_lea.vmem [#allocation1], 192
    %s495 = scalar_lea.vmem [#allocation0], 216
    %s496 = scalar_lea.vmem %s495, 56 [#allocation0]
    %s497 = scalar_lea.vmem %s496, 7 [#allocation0]
    %v498 = vld [vmem:[%s497] ss:$-1 sm:$0xff]
    %v499 = vrot.slane %v498, 1
    %500 = vst [vmem:[%s494] sm:$0xff] %v499
    %s501 = scalar_lea.vmem %s495, 64 [#allocation0]
    %s502 = scalar_lea.vmem %s501, 7 [#allocation0]
    %v503 = vld [vmem:[%s502] ss:$-1 sm:$0xff]
    %v504 = vrot.slane %v503, 1
    %v505 = vlaneseq
    %v506 = vshrl.u32 %v505, 7
    %vm507 = vcmp.lt.s32.totalorder %v506, 7
    %508 = vst.msk [vmem:[%s494] sm:$0xff] %vm507, %v504
    %s509 = scalar_lea.vmem %s494, 8 [#allocation1]
    %s510 = scalar_lea.vmem %s495, 48 [#allocation0]
    %s511 = scalar_lea.vmem %s510, 7 [#allocation0]
    %v512 = vld [vmem:[%s511] ss:$-1 sm:$0xff]
    %v513 = vrot.slane %v512, 1
    %514 = vst [vmem:[%s509] sm:$0xff] %v513
    %s515 = scalar_lea.vmem %s495, 56 [#allocation0]
    %s516 = scalar_lea.vmem %s515, 7 [#allocation0]
    %v517 = vld [vmem:[%s516] ss:$-1 sm:$0xff]
    %v518 = vrot.slane %v517, 1
    %v519 = vlaneseq
    %v520 = vshrl.u32 %v519, 7
    %vm521 = vcmp.lt.s32.totalorder %v520, 7
    %522 = vst.msk [vmem:[%s509] sm:$0xff] %vm521, %v518
    %s523 = scalar_lea.vmem %s494, 16 [#allocation1]
    %s524 = scalar_lea.vmem %s495, 40 [#allocation0]
    %s525 = scalar_lea.vmem %s524, 7 [#allocation0]
    %v526 = vld [vmem:[%s525] ss:$-1 sm:$0xff]
    %v527 = vrot.slane %v526, 1
    %528 = vst [vmem:[%s523] sm:$0xff] %v527
    %s529 = scalar_lea.vmem %s495, 48 [#allocation0]
    %s530 = scalar_lea.vmem %s529, 7 [#allocation0]
    %v531 = vld [vmem:[%s530] ss:$-1 sm:$0xff]
    %v532 = vrot.slane %v531, 1
    %v533 = vlaneseq
    %v534 = vshrl.u32 %v533, 7
    %vm535 = vcmp.lt.s32.totalorder %v534, 7
    %536 = vst.msk [vmem:[%s523] sm:$0xff] %vm535, %v532
    %s537 = scalar_lea.vmem %s494, 24 [#allocation1]
    %s538 = scalar_lea.vmem %s495, 32 [#allocation0]
    %s539 = scalar_lea.vmem %s538, 7 [#allocation0]
    %v540 = vld [vmem:[%s539] ss:$-1 sm:$0xff]
    %v541 = vrot.slane %v540, 1
    %542 = vst [vmem:[%s537] sm:$0xff] %v541
    %s543 = scalar_lea.vmem %s495, 40 [#allocation0]
    %s544 = scalar_lea.vmem %s543, 7 [#allocation0]
    %v545 = vld [vmem:[%s544] ss:$-1 sm:$0xff]
    %v546 = vrot.slane %v545, 1
    %v547 = vlaneseq
    %v548 = vshrl.u32 %v547, 7
    %vm549 = vcmp.lt.s32.totalorder %v548, 7
    %550 = vst.msk [vmem:[%s537] sm:$0xff] %vm549, %v546
    %s551 = scalar_lea.vmem %s494, 32 [#allocation1]
    %s552 = scalar_lea.vmem %s495, 24 [#allocation0]
    %s553 = scalar_lea.vmem %s552, 7 [#allocation0]
    %v554 = vld [vmem:[%s553] ss:$-1 sm:$0xff]
    %v555 = vrot.slane %v554, 1
    %556 = vst [vmem:[%s551] sm:$0xff] %v555
    %s557 = scalar_lea.vmem %s495, 32 [#allocation0]
    %s558 = scalar_lea.vmem %s557, 7 [#allocation0]
    %v559 = vld [vmem:[%s558] ss:$-1 sm:$0xff]
    %v560 = vrot.slane %v559, 1
    %v561 = vlaneseq
    %v562 = vshrl.u32 %v561, 7
    %vm563 = vcmp.lt.s32.totalorder %v562, 7
    %564 = vst.msk [vmem:[%s551] sm:$0xff] %vm563, %v560
    %s565 = scalar_lea.vmem %s494, 40 [#allocation1]
    %s566 = scalar_lea.vmem %s495, 16 [#allocation0]
    %s567 = scalar_lea.vmem %s566, 7 [#allocation0]
    %v568 = vld [vmem:[%s567] ss:$-1 sm:$0xff]
    %v569 = vrot.slane %v568, 1
    %570 = vst [vmem:[%s565] sm:$0xff] %v569
    %s571 = scalar_lea.vmem %s495, 24 [#allocation0]
    %s572 = scalar_lea.vmem %s571, 7 [#allocation0]
    %v573 = vld [vmem:[%s572] ss:$-1 sm:$0xff]
    %v574 = vrot.slane %v573, 1
    %v575 = vlaneseq
    %v576 = vshrl.u32 %v575, 7
    %vm577 = vcmp.lt.s32.totalorder %v576, 7
    %578 = vst.msk [vmem:[%s565] sm:$0xff] %vm577, %v574
    %s579 = scalar_lea.vmem %s494, 48 [#allocation1]
    %s580 = scalar_lea.vmem %s495, 8 [#allocation0]
    %s581 = scalar_lea.vmem %s580, 7 [#allocation0]
    %v582 = vld [vmem:[%s581] ss:$-1 sm:$0xff]
    %v583 = vrot.slane %v582, 1
    %584 = vst [vmem:[%s579] sm:$0xff] %v583
    %s585 = scalar_lea.vmem %s495, 16 [#allocation0]
    %s586 = scalar_lea.vmem %s585, 7 [#allocation0]
    %v587 = vld [vmem:[%s586] ss:$-1 sm:$0xff]
    %v588 = vrot.slane %v587, 1
    %v589 = vlaneseq
    %v590 = vshrl.u32 %v589, 7
    %vm591 = vcmp.lt.s32.totalorder %v590, 7
    %592 = vst.msk [vmem:[%s579] sm:$0xff] %vm591, %v588
    %s593 = scalar_lea.vmem %s494, 56 [#allocation1]
    %s594 = scalar_lea.vmem %s495, 7 [#allocation0]
    %v595 = vld [vmem:[%s594] ss:$-1 sm:$0xff]
    %v596 = vrot.slane %v595, 1
    %597 = vst [vmem:[%s593] sm:$0xff] %v596
    %s598 = scalar_lea.vmem %s495, 8 [#allocation0]
    %s599 = scalar_lea.vmem %s598, 7 [#allocation0]
    %v600 = vld [vmem:[%s599] ss:$-1 sm:$0xff]
    %v601 = vrot.slane %v600, 1
    %v602 = vlaneseq
    %v603 = vshrl.u32 %v602, 7
    %vm604 = vcmp.lt.s32.totalorder %v603, 7
    %605 = vst.msk [vmem:[%s593] sm:$0xff] %vm604, %v601
    // Predicated region
    $region36: #{reverse.0} parent=1 // pred_check
      _
    $region37: #{reverse.0} parent=1 // pred_check_branch
      %607 = sbr.rel (0) target = $region39
    $region38: #{reverse.0} parent=1 // pred_region
      // Predicated region
      $region40: #{reverse.0} parent=38 // pred_check
        _
      $region41: #{reverse.0} parent=38 // pred_check_branch
        %609 = sbr.rel (0) target = $region43
      $region42: #{reverse.0} parent=38 // pred_region
        // Predicated region
        $region55: #{reverse.0} parent=42 // pred_check
          _
        $region56: #{reverse.0} parent=42 // pred_check_branch
          %687 = sbr.rel (0) target = $region58
        $region57: #{reverse.0} parent=42 // pred_region
          loop: start=0, step=1, limit=1
          $region59: #{reverse.0} parent=57 // loop_pre_header
            _
          $region60: #{reverse.0} parent=57 // loop_header
            %s689 = sphi 0, %s693
            %p690 = scmp.ge.s32.totalorder %s689, 1
            %s694 = sphi [#allocation1], [#allocation1]
            %s695 = sphi %s1, %s1
          $region61: #{reverse.0} parent=57 // loop_header_branch
            %692 = sbr.rel (%p690) target = $region65
          $region62: #{reverse.0} parent=57 // loop_body
            %v696 = vld [vmem:[%s694] sm:$0xff]
            %697 = vst [vmem:[%s695] sm:$0xff] %v696
            %v698 = vld [vmem:[%s694 + $0x8] sm:$0xff]
            %699 = vst [vmem:[%s695 + $0x8] sm:$0xff] %v698
            %v700 = vld [vmem:[%s694 + $0x10] sm:$0xff]
            %701 = vst [vmem:[%s695 + $0x10] sm:$0xff] %v700
            %v702 = vld [vmem:[%s694 + $0x18] sm:$0xff]
            %703 = vst [vmem:[%s695 + $0x18] sm:$0xff] %v702
            %v704 = vld [vmem:[%s694 + $0x20] sm:$0xff]
            %705 = vst [vmem:[%s695 + $0x20] sm:$0xff] %v704
            %v706 = vld [vmem:[%s694 + $0x28] sm:$0xff]
            %707 = vst [vmem:[%s695 + $0x28] sm:$0xff] %v706
            %v708 = vld [vmem:[%s694 + $0x30] sm:$0xff]
            %709 = vst [vmem:[%s695 + $0x30] sm:$0xff] %v708
            %v710 = vld [vmem:[%s694 + $0x38] sm:$0xff]
            %711 = vst [vmem:[%s695 + $0x38] sm:$0xff] %v710
            %v712 = vld [vmem:[%s694 + $0x40] sm:$0xff]
            %713 = vst [vmem:[%s695 + $0x40] sm:$0xff] %v712
            %v714 = vld [vmem:[%s694 + $0x48] sm:$0xff]
            %715 = vst [vmem:[%s695 + $0x48] sm:$0xff] %v714
            %v716 = vld [vmem:[%s694 + $0x50] sm:$0xff]
            %717 = vst [vmem:[%s695 + $0x50] sm:$0xff] %v716
            %v718 = vld [vmem:[%s694 + $0x58] sm:$0xff]
            %719 = vst [vmem:[%s695 + $0x58] sm:$0xff] %v718
            %v720 = vld [vmem:[%s694 + $0x60] sm:$0xff]
            %721 = vst [vmem:[%s695 + $0x60] sm:$0xff] %v720
            %v722 = vld [vmem:[%s694 + $0x68] sm:$0xff]
            %723 = vst [vmem:[%s695 + $0x68] sm:$0xff] %v722
            %v724 = vld [vmem:[%s694 + $0x70] sm:$0xff]
            %725 = vst [vmem:[%s695 + $0x70] sm:$0xff] %v724
            %v726 = vld [vmem:[%s694 + $0x78] sm:$0xff]
            %727 = vst [vmem:[%s695 + $0x78] sm:$0xff] %v726
            %v728 = vld [vmem:[%s694 + $0x80] sm:$0xff]
            %729 = vst [vmem:[%s695 + $0x80] sm:$0xff] %v728
            %v730 = vld [vmem:[%s694 + $0x88] sm:$0xff]
            %731 = vst [vmem:[%s695 + $0x88] sm:$0xff] %v730
            %v732 = vld [vmem:[%s694 + $0x90] sm:$0xff]
            %733 = vst [vmem:[%s695 + $0x90] sm:$0xff] %v732
            %v734 = vld [vmem:[%s694 + $0x98] sm:$0xff]
            %735 = vst [vmem:[%s695 + $0x98] sm:$0xff] %v734
            %v736 = vld [vmem:[%s694 + $0xa0] sm:$0xff]
            %737 = vst [vmem:[%s695 + $0xa0] sm:$0xff] %v736
            %v738 = vld [vmem:[%s694 + $0xa8] sm:$0xff]
            %739 = vst [vmem:[%s695 + $0xa8] sm:$0xff] %v738
            %v740 = vld [vmem:[%s694 + $0xb0] sm:$0xff]
            %741 = vst [vmem:[%s695 + $0xb0] sm:$0xff] %v740
            %v742 = vld [vmem:[%s694 + $0xb8] sm:$0xff]
            %743 = vst [vmem:[%s695 + $0xb8] sm:$0xff] %v742
            %v744 = vld [vmem:[%s694 + $0xc0] sm:$0xff]
            %745 = vst [vmem:[%s695 + $0xc0] sm:$0xff] %v744
            %v746 = vld [vmem:[%s694 + $0xc8] sm:$0xff]
            %747 = vst [vmem:[%s695 + $0xc8] sm:$0xff] %v746
            %v748 = vld [vmem:[%s694 + $0xd0] sm:$0xff]
            %749 = vst [vmem:[%s695 + $0xd0] sm:$0xff] %v748
            %v750 = vld [vmem:[%s694 + $0xd8] sm:$0xff]
            %751 = vst [vmem:[%s695 + $0xd8] sm:$0xff] %v750
            %v752 = vld [vmem:[%s694 + $0xe0] sm:$0xff]
            %753 = vst [vmem:[%s695 + $0xe0] sm:$0xff] %v752
            %v754 = vld [vmem:[%s694 + $0xe8] sm:$0xff]
            %755 = vst [vmem:[%s695 + $0xe8] sm:$0xff] %v754
            %v756 = vld [vmem:[%s694 + $0xf0] sm:$0xff]
            %757 = vst [vmem:[%s695 + $0xf0] sm:$0xff] %v756
            %v758 = vld [vmem:[%s694 + $0xf8] sm:$0xff]
            %759 = vst [vmem:[%s695 + $0xf8] sm:$0xff] %v758
          $region63: #{reverse.0} parent=57 // loop_footer
            %s693 = sadd.s32 1, %s689
          $region64: #{reverse.0} parent=57 // loop_footer_branch
            %688 = sbr.rel target = $region60
          $region65: #{reverse.0} parent=57 // loop_exit
            _
        $region58: #{reverse.0} parent=42 // pred_fallthru
          _
        // Predicated region
        $region66: #{reverse.0} parent=42 // pred_check
          _
        $region67: #{reverse.0} parent=42 // pred_check_branch
          %761 = sbr.rel target = $region69
        $region68: #{reverse.0} parent=42 // pred_region
          _
        $region69: #{reverse.0} parent=42 // pred_fallthru
          _
      $region43: #{reverse.0} parent=38 // pred_fallthru
        _
      // Predicated region
      $region44: #{reverse.0} parent=38 // pred_check
        _
      $region45: #{reverse.0} parent=38 // pred_check_branch
        %611 = sbr.rel target = $region47
      $region46: #{reverse.0} parent=38 // pred_region
        %s613 = ssub.s32 256, 1
        loop: start=0, step=1, limit=1
        $region48: #{reverse.0} parent=46 // loop_pre_header
          _
        $region49: #{reverse.0} parent=46 // loop_header
          %s615 = sphi 0, %s619
          %p616 = scmp.ge.s32.totalorder %s615, 1
          %s620 = sphi [#allocation1], [#allocation1]
          %s621 = sphi %s1, %s1
        $region50: #{reverse.0} parent=46 // loop_header_branch
          %618 = sbr.rel (%p616) target = $region54
        $region51: #{reverse.0} parent=46 // loop_body
          %v622 = vld [vmem:[%s620] sm:%s613]
          %623 = vst [vmem:[%s621] sm:%s613] %v622
          %v624 = vld [vmem:[%s620 + $0x8] sm:%s613]
          %625 = vst [vmem:[%s621 + $0x8] sm:%s613] %v624
          %v626 = vld [vmem:[%s620 + $0x10] sm:%s613]
          %627 = vst [vmem:[%s621 + $0x10] sm:%s613] %v626
          %v628 = vld [vmem:[%s620 + $0x18] sm:%s613]
          %629 = vst [vmem:[%s621 + $0x18] sm:%s613] %v628
          %v630 = vld [vmem:[%s620 + $0x20] sm:%s613]
          %631 = vst [vmem:[%s621 + $0x20] sm:%s613] %v630
          %v632 = vld [vmem:[%s620 + $0x28] sm:%s613]
          %633 = vst [vmem:[%s621 + $0x28] sm:%s613] %v632
          %v634 = vld [vmem:[%s620 + $0x30] sm:%s613]
          %635 = vst [vmem:[%s621 + $0x30] sm:%s613] %v634
          %v636 = vld [vmem:[%s620 + $0x38] sm:%s613]
          %637 = vst [vmem:[%s621 + $0x38] sm:%s613] %v636
          %v638 = vld [vmem:[%s620 + $0x40] sm:%s613]
          %639 = vst [vmem:[%s621 + $0x40] sm:%s613] %v638
          %v640 = vld [vmem:[%s620 + $0x48] sm:%s613]
          %641 = vst [vmem:[%s621 + $0x48] sm:%s613] %v640
          %v642 = vld [vmem:[%s620 + $0x50] sm:%s613]
          %643 = vst [vmem:[%s621 + $0x50] sm:%s613] %v642
          %v644 = vld [vmem:[%s620 + $0x58] sm:%s613]
          %645 = vst [vmem:[%s621 + $0x58] sm:%s613] %v644
          %v646 = vld [vmem:[%s620 + $0x60] sm:%s613]
          %647 = vst [vmem:[%s621 + $0x60] sm:%s613] %v646
          %v648 = vld [vmem:[%s620 + $0x68] sm:%s613]
          %649 = vst [vmem:[%s621 + $0x68] sm:%s613] %v648
          %v650 = vld [vmem:[%s620 + $0x70] sm:%s613]
          %651 = vst [vmem:[%s621 + $0x70] sm:%s613] %v650
          %v652 = vld [vmem:[%s620 + $0x78] sm:%s613]
          %653 = vst [vmem:[%s621 + $0x78] sm:%s613] %v652
          %v654 = vld [vmem:[%s620 + $0x80] sm:%s613]
          %655 = vst [vmem:[%s621 + $0x80] sm:%s613] %v654
          %v656 = vld [vmem:[%s620 + $0x88] sm:%s613]
          %657 = vst [vmem:[%s621 + $0x88] sm:%s613] %v656
          %v658 = vld [vmem:[%s620 + $0x90] sm:%s613]
          %659 = vst [vmem:[%s621 + $0x90] sm:%s613] %v658
          %v660 = vld [vmem:[%s620 + $0x98] sm:%s613]
          %661 = vst [vmem:[%s621 + $0x98] sm:%s613] %v660
          %v662 = vld [vmem:[%s620 + $0xa0] sm:%s613]
          %663 = vst [vmem:[%s621 + $0xa0] sm:%s613] %v662
          %v664 = vld [vmem:[%s620 + $0xa8] sm:%s613]
          %665 = vst [vmem:[%s621 + $0xa8] sm:%s613] %v664
          %v666 = vld [vmem:[%s620 + $0xb0] sm:%s613]
          %667 = vst [vmem:[%s621 + $0xb0] sm:%s613] %v666
          %v668 = vld [vmem:[%s620 + $0xb8] sm:%s613]
          %669 = vst [vmem:[%s621 + $0xb8] sm:%s613] %v668
          %v670 = vld [vmem:[%s620 + $0xc0] sm:%s613]
          %671 = vst [vmem:[%s621 + $0xc0] sm:%s613] %v670
          %v672 = vld [vmem:[%s620 + $0xc8] sm:%s613]
          %673 = vst [vmem:[%s621 + $0xc8] sm:%s613] %v672
          %v674 = vld [vmem:[%s620 + $0xd0] sm:%s613]
          %675 = vst [vmem:[%s621 + $0xd0] sm:%s613] %v674
          %v676 = vld [vmem:[%s620 + $0xd8] sm:%s613]
          %677 = vst [vmem:[%s621 + $0xd8] sm:%s613] %v676
          %v678 = vld [vmem:[%s620 + $0xe0] sm:%s613]
          %679 = vst [vmem:[%s621 + $0xe0] sm:%s613] %v678
          %v680 = vld [vmem:[%s620 + $0xe8] sm:%s613]
          %681 = vst [vmem:[%s621 + $0xe8] sm:%s613] %v680
          %v682 = vld [vmem:[%s620 + $0xf0] sm:%s613]
          %683 = vst [vmem:[%s621 + $0xf0] sm:%s613] %v682
          %v684 = vld [vmem:[%s620 + $0xf8] sm:%s613]
          %685 = vst [vmem:[%s621 + $0xf8] sm:%s613] %v684
        $region52: #{reverse.0} parent=46 // loop_footer
          %s619 = sadd.s32 1, %s615
        $region53: #{reverse.0} parent=46 // loop_footer_branch
          %614 = sbr.rel target = $region49
        $region54: #{reverse.0} parent=46 // loop_exit
          _
      $region47: #{reverse.0} parent=38 // pred_fallthru
        _
    $region39: #{reverse.0} parent=1 // pred_fallthru
      _
    %762 = vnop

// kernel: custom-call.3
$region0: #{custom-call.3}
  %s0 = inlined_call_operand.hbm [shape: c64[128,65], index: 0, kind: input, shape index: {}]
  %s1 = inlined_call_operand.vmem [shape: f32[128,65], index: 1, kind: output, shape index: {}]
  %s2 = scalar_lea.hbm %s0, 72
  $region1: #{custom-call.3} parent=0
    #allocation0 [shape = 's32[1]{0}', space=sflag, size = 0x4, scoped, tag = 'scoped memory for custom-call.3']
    %3 = vsyncpa [#allocation0], 0
    %s5 = sshll.u32 %s2, 4
    %s6 = int_to_ptr.hbm [resolvable:$true] %s5
    %s7 = sshll.u32 %s1, 4
    %s8 = int_to_ptr.vmem [resolvable:$true] %s7
    %10 = dma.hbm_to_vmem [thread:$0]  %s6, 1152, %s8, [#allocation0]
    %12 = dma.done [#allocation0], 1152
    %13 = vsyncpa [#allocation0], 1

// kernel: custom-call.2
$region0: #{custom-call.2}
  %s0 = inlined_call_operand.hbm [shape: c64[128,65], index: 0, kind: input, shape index: {}]
  %s1 = inlined_call_operand.vmem [shape: f32[128,65], index: 1, kind: output, shape index: {}]
  $region1: #{custom-call.2} parent=0
    #allocation0 [shape = 's32[1]{0}', space=sflag, size = 0x4, scoped, tag = 'scoped memory for custom-call.2']
    %2 = vsyncpa [#allocation0], 0
    %s4 = sshll.u32 %s0, 4
    %s5 = int_to_ptr.hbm [resolvable:$true] %s4
    %s6 = sshll.u32 %s1, 4
    %s7 = int_to_ptr.vmem [resolvable:$true] %s6
    %9 = dma.hbm_to_vmem [thread:$0]  %s5, 1152, %s7, [#allocation0]
    %11 = dma.done [#allocation0], 1152
    %12 = vsyncpa [#allocation0], 1

// kernel: reverse.1
$region0: #{reverse.1}
  %s0 = inlined_call_operand.vmem [shape: f32[128,63], index: 0, kind: input, shape index: {}]
  %s1 = inlined_call_operand.vmem [shape: f32[128,63], index: 1, kind: output, shape index: {}]
  $region1: #{reverse.1} parent=0
    #allocation0 [shape = 'u8[36864]{0}', space=vmem, size = 0x9000, scoped, tag = 'operand span for operand 0']
    #allocation1 [shape = 'u8[32768]{0}', space=vmem, size = 0x8000, scoped, tag = 'operand span for operand 1']
    %s2 = scalar_lea.vmem [#allocation0], 8
    // Predicated region
    $region2: #{reverse.1} parent=1 // pred_check
      _
    $region3: #{reverse.1} parent=1 // pred_check_branch
      %4 = sbr.rel (0) target = $region5
    $region4: #{reverse.1} parent=1 // pred_region
      // Predicated region
      $region6: #{reverse.1} parent=4 // pred_check
        _
      $region7: #{reverse.1} parent=4 // pred_check_branch
        %6 = sbr.rel (0) target = $region9
      $region8: #{reverse.1} parent=4 // pred_region
        // Predicated region
        $region21: #{reverse.1} parent=8 // pred_check
          _
        $region22: #{reverse.1} parent=8 // pred_check_branch
          %36 = sbr.rel (0) target = $region24
        $region23: #{reverse.1} parent=8 // pred_region
          loop: start=0, step=1, limit=1
          $region25: #{reverse.1} parent=23 // loop_pre_header
            _
          $region26: #{reverse.1} parent=23 // loop_header
            %s38 = sphi 0, %s42
            %p39 = scmp.ge.s32.totalorder %s38, 1
            %s43 = sphi %s0, %s0
            %s44 = sphi %s2, %s2
          $region27: #{reverse.1} parent=23 // loop_header_branch
            %41 = sbr.rel (%p39) target = $region31
          $region28: #{reverse.1} parent=23 // loop_body
            %v45 = vld [vmem:[%s43] sm:$0xff]
            %46 = vst [vmem:[%s44] sm:$0xff] %v45
            %v47 = vld [vmem:[%s43 + $0x8] sm:$0xff]
            %48 = vst [vmem:[%s44 + $0x8] sm:$0xff] %v47
            %v49 = vld [vmem:[%s43 + $0x10] sm:$0xff]
            %50 = vst [vmem:[%s44 + $0x10] sm:$0xff] %v49
            %v51 = vld [vmem:[%s43 + $0x18] sm:$0xff]
            %52 = vst [vmem:[%s44 + $0x18] sm:$0xff] %v51
            %v53 = vld [vmem:[%s43 + $0x20] sm:$0xff]
            %54 = vst [vmem:[%s44 + $0x20] sm:$0xff] %v53
            %v55 = vld [vmem:[%s43 + $0x28] sm:$0xff]
            %56 = vst [vmem:[%s44 + $0x28] sm:$0xff] %v55
            %v57 = vld [vmem:[%s43 + $0x30] sm:$0xff]
            %58 = vst [vmem:[%s44 + $0x30] sm:$0xff] %v57
            %v59 = vld [vmem:[%s43 + $0x38] sm:$0xff]
            %60 = vst [vmem:[%s44 + $0x38] sm:$0xff] %v59
          $region29: #{reverse.1} parent=23 // loop_footer
            %s42 = sadd.s32 1, %s38
          $region30: #{reverse.1} parent=23 // loop_footer_branch
            %37 = sbr.rel target = $region26
          $region31: #{reverse.1} parent=23 // loop_exit
            _
        $region24: #{reverse.1} parent=8 // pred_fallthru
          _
        // Predicated region
        $region32: #{reverse.1} parent=8 // pred_check
          _
        $region33: #{reverse.1} parent=8 // pred_check_branch
          %62 = sbr.rel target = $region35
        $region34: #{reverse.1} parent=8 // pred_region
          _
        $region35: #{reverse.1} parent=8 // pred_fallthru
          _
      $region9: #{reverse.1} parent=4 // pred_fallthru
        _
      // Predicated region
      $region10: #{reverse.1} parent=4 // pred_check
        _
      $region11: #{reverse.1} parent=4 // pred_check_branch
        %8 = sbr.rel target = $region13
      $region12: #{reverse.1} parent=4 // pred_region
        %s10 = ssub.s32 256, 1
        loop: start=0, step=1, limit=1
        $region14: #{reverse.1} parent=12 // loop_pre_header
          _
        $region15: #{reverse.1} parent=12 // loop_header
          %s12 = sphi 0, %s16
          %p13 = scmp.ge.s32.totalorder %s12, 1
          %s17 = sphi %s0, %s0
          %s18 = sphi %s2, %s2
        $region16: #{reverse.1} parent=12 // loop_header_branch
          %15 = sbr.rel (%p13) target = $region20
        $region17: #{reverse.1} parent=12 // loop_body
          %v19 = vld [vmem:[%s17] sm:%s10]
          %20 = vst [vmem:[%s18] sm:%s10] %v19
          %v21 = vld [vmem:[%s17 + $0x8] sm:%s10]
          %22 = vst [vmem:[%s18 + $0x8] sm:%s10] %v21
          %v23 = vld [vmem:[%s17 + $0x10] sm:%s10]
          %24 = vst [vmem:[%s18 + $0x10] sm:%s10] %v23
          %v25 = vld [vmem:[%s17 + $0x18] sm:%s10]
          %26 = vst [vmem:[%s18 + $0x18] sm:%s10] %v25
          %v27 = vld [vmem:[%s17 + $0x20] sm:%s10]
          %28 = vst [vmem:[%s18 + $0x20] sm:%s10] %v27
          %v29 = vld [vmem:[%s17 + $0x28] sm:%s10]
          %30 = vst [vmem:[%s18 + $0x28] sm:%s10] %v29
          %v31 = vld [vmem:[%s17 + $0x30] sm:%s10]
          %32 = vst [vmem:[%s18 + $0x30] sm:%s10] %v31
          %v33 = vld [vmem:[%s17 + $0x38] sm:%s10]
          %34 = vst [vmem:[%s18 + $0x38] sm:%s10] %v33
        $region18: #{reverse.1} parent=12 // loop_footer
          %s16 = sadd.s32 1, %s12
        $region19: #{reverse.1} parent=12 // loop_footer_branch
          %11 = sbr.rel target = $region15
        $region20: #{reverse.1} parent=12 // loop_exit
          _
      $region13: #{reverse.1} parent=4 // pred_fallthru
        _
    $region5: #{reverse.1} parent=1 // pred_fallthru
      _
    %63 = vnop
    %s64 = scalar_lea.vmem [#allocation0], 56
    %s65 = scalar_lea.vmem %s64, 7 [#allocation0]
    %v66 = vld [vmem:[%s65] ss:$-1 sm:$0xff]
    %v67 = vrot.slane %v66, 1
    %68 = vst [vmem:[#allocation1] sm:$0xff] %v67
    %s69 = scalar_lea.vmem [#allocation0], 64
    %s70 = scalar_lea.vmem %s69, 7 [#allocation0]
    %v71 = vld [vmem:[%s70] ss:$-1 sm:$0xff]
    %v72 = vrot.slane %v71, 1
    %v73 = vlaneseq
    %v74 = vshrl.u32 %v73, 7
    %vm75 = vcmp.lt.s32.totalorder %v74, 7
    %76 = vst.msk [vmem:[#allocation1] sm:$0xff] %vm75, %v72
    %s77 = scalar_lea.vmem [#allocation1], 8
    %s78 = scalar_lea.vmem [#allocation0], 48
    %s79 = scalar_lea.vmem %s78, 7 [#allocation0]
    %v80 = vld [vmem:[%s79] ss:$-1 sm:$0xff]
    %v81 = vrot.slane %v80, 1
    %82 = vst [vmem:[%s77] sm:$0xff] %v81
    %s83 = scalar_lea.vmem [#allocation0], 56
    %s84 = scalar_lea.vmem %s83, 7 [#allocation0]
    %v85 = vld [vmem:[%s84] ss:$-1 sm:$0xff]
    %v86 = vrot.slane %v85, 1
    %v87 = vlaneseq
    %v88 = vshrl.u32 %v87, 7
    %vm89 = vcmp.lt.s32.totalorder %v88, 7
    %90 = vst.msk [vmem:[%s77] sm:$0xff] %vm89, %v86
    %s91 = scalar_lea.vmem [#allocation1], 16
    %s92 = scalar_lea.vmem [#allocation0], 40
    %s93 = scalar_lea.vmem %s92, 7 [#allocation0]
    %v94 = vld [vmem:[%s93] ss:$-1 sm:$0xff]
    %v95 = vrot.slane %v94, 1
    %96 = vst [vmem:[%s91] sm:$0xff] %v95
    %s97 = scalar_lea.vmem [#allocation0], 48
    %s98 = scalar_lea.vmem %s97, 7 [#allocation0]
    %v99 = vld [vmem:[%s98] ss:$-1 sm:$0xff]
    %v100 = vrot.slane %v99, 1
    %v101 = vlaneseq
    %v102 = vshrl.u32 %v101, 7
    %vm103 = vcmp.lt.s32.totalorder %v102, 7
    %104 = vst.msk [vmem:[%s91] sm:$0xff] %vm103, %v100
    %s105 = scalar_lea.vmem [#allocation1], 24
    %s106 = scalar_lea.vmem [#allocation0], 32
    %s107 = scalar_lea.vmem %s106, 7 [#allocation0]
    %v108 = vld [vmem:[%s107] ss:$-1 sm:$0xff]
    %v109 = vrot.slane %v108, 1
    %110 = vst [vmem:[%s105] sm:$0xff] %v109
    %s111 = scalar_lea.vmem [#allocation0], 40
    %s112 = scalar_lea.vmem %s111, 7 [#allocation0]
    %v113 = vld [vmem:[%s112] ss:$-1 sm:$0xff]
    %v114 = vrot.slane %v113, 1
    %v115 = vlaneseq
    %v116 = vshrl.u32 %v115, 7
    %vm117 = vcmp.lt.s32.totalorder %v116, 7
    %118 = vst.msk [vmem:[%s105] sm:$0xff] %vm117, %v114
    %s119 = scalar_lea.vmem [#allocation1], 32
    %s120 = scalar_lea.vmem [#allocation0], 24
    %s121 = scalar_lea.vmem %s120, 7 [#allocation0]
    %v122 = vld [vmem:[%s121] ss:$-1 sm:$0xff]
    %v123 = vrot.slane %v122, 1
    %124 = vst [vmem:[%s119] sm:$0xff] %v123
    %s125 = scalar_lea.vmem [#allocation0], 32
    %s126 = scalar_lea.vmem %s125, 7 [#allocation0]
    %v127 = vld [vmem:[%s126] ss:$-1 sm:$0xff]
    %v128 = vrot.slane %v127, 1
    %v129 = vlaneseq
    %v130 = vshrl.u32 %v129, 7
    %vm131 = vcmp.lt.s32.totalorder %v130, 7
    %132 = vst.msk [vmem:[%s119] sm:$0xff] %vm131, %v128
    %s133 = scalar_lea.vmem [#allocation1], 40
    %s134 = scalar_lea.vmem [#allocation0], 16
    %s135 = scalar_lea.vmem %s134, 7 [#allocation0]
    %v136 = vld [vmem:[%s135] ss:$-1 sm:$0xff]
    %v137 = vrot.slane %v136, 1
    %138 = vst [vmem:[%s133] sm:$0xff] %v137
    %s139 = scalar_lea.vmem [#allocation0], 24
    %s140 = scalar_lea.vmem %s139, 7 [#allocation0]
    %v141 = vld [vmem:[%s140] ss:$-1 sm:$0xff]
    %v142 = vrot.slane %v141, 1
    %v143 = vlaneseq
    %v144 = vshrl.u32 %v143, 7
    %vm145 = vcmp.lt.s32.totalorder %v144, 7
    %146 = vst.msk [vmem:[%s133] sm:$0xff] %vm145, %v142
    %s147 = scalar_lea.vmem [#allocation1], 48
    %s148 = scalar_lea.vmem [#allocation0], 8
    %s149 = scalar_lea.vmem %s148, 7 [#allocation0]
    %v150 = vld [vmem:[%s149] ss:$-1 sm:$0xff]
    %v151 = vrot.slane %v150, 1
    %152 = vst [vmem:[%s147] sm:$0xff] %v151
    %s153 = scalar_lea.vmem [#allocation0], 16
    %s154 = scalar_lea.vmem %s153, 7 [#allocation0]
    %v155 = vld [vmem:[%s154] ss:$-1 sm:$0xff]
    %v156 = vrot.slane %v155, 1
    %v157 = vlaneseq
    %v158 = vshrl.u32 %v157, 7
    %vm159 = vcmp.lt.s32.totalorder %v158, 7
    %160 = vst.msk [vmem:[%s147] sm:$0xff] %vm159, %v156
    %s161 = scalar_lea.vmem [#allocation1], 56
    %s162 = scalar_lea.vmem [#allocation0], 7
    %v163 = vld [vmem:[%s162] ss:$-1 sm:$0xff]
    %v164 = vrot.slane %v163, 1
    %165 = vst [vmem:[%s161] sm:$0xff] %v164
    %s166 = scalar_lea.vmem [#allocation0], 8
    %s167 = scalar_lea.vmem %s166, 7 [#allocation0]
    %v168 = vld [vmem:[%s167] ss:$-1 sm:$0xff]
    %v169 = vrot.slane %v168, 1
    %v170 = vlaneseq
    %v171 = vshrl.u32 %v170, 7
    %vm172 = vcmp.lt.s32.totalorder %v171, 7
    %173 = vst.msk [vmem:[%s161] sm:$0xff] %vm172, %v169
    // Predicated region
    $region36: #{reverse.1} parent=1 // pred_check
      _
    $region37: #{reverse.1} parent=1 // pred_check_branch
      %175 = sbr.rel (0) target = $region39
    $region38: #{reverse.1} parent=1 // pred_region
      // Predicated region
      $region40: #{reverse.1} parent=38 // pred_check
        _
      $region41: #{reverse.1} parent=38 // pred_check_branch
        %177 = sbr.rel (0) target = $region43
      $region42: #{reverse.1} parent=38 // pred_region
        // Predicated region
        $region55: #{reverse.1} parent=42 // pred_check
          _
        $region56: #{reverse.1} parent=42 // pred_check_branch
          %207 = sbr.rel (0) target = $region58
        $region57: #{reverse.1} parent=42 // pred_region
          loop: start=0, step=1, limit=1
          $region59: #{reverse.1} parent=57 // loop_pre_header
            _
          $region60: #{reverse.1} parent=57 // loop_header
            %s209 = sphi 0, %s213
            %p210 = scmp.ge.s32.totalorder %s209, 1
            %s214 = sphi [#allocation1], [#allocation1]
            %s215 = sphi %s1, %s1
          $region61: #{reverse.1} parent=57 // loop_header_branch
            %212 = sbr.rel (%p210) target = $region65
          $region62: #{reverse.1} parent=57 // loop_body
            %v216 = vld [vmem:[%s214] sm:$0xff]
            %217 = vst [vmem:[%s215] sm:$0xff] %v216
            %v218 = vld [vmem:[%s214 + $0x8] sm:$0xff]
            %219 = vst [vmem:[%s215 + $0x8] sm:$0xff] %v218
            %v220 = vld [vmem:[%s214 + $0x10] sm:$0xff]
            %221 = vst [vmem:[%s215 + $0x10] sm:$0xff] %v220
            %v222 = vld [vmem:[%s214 + $0x18] sm:$0xff]
            %223 = vst [vmem:[%s215 + $0x18] sm:$0xff] %v222
            %v224 = vld [vmem:[%s214 + $0x20] sm:$0xff]
            %225 = vst [vmem:[%s215 + $0x20] sm:$0xff] %v224
            %v226 = vld [vmem:[%s214 + $0x28] sm:$0xff]
            %227 = vst [vmem:[%s215 + $0x28] sm:$0xff] %v226
            %v228 = vld [vmem:[%s214 + $0x30] sm:$0xff]
            %229 = vst [vmem:[%s215 + $0x30] sm:$0xff] %v228
            %v230 = vld [vmem:[%s214 + $0x38] sm:$0xff]
            %231 = vst [vmem:[%s215 + $0x38] sm:$0xff] %v230
          $region63: #{reverse.1} parent=57 // loop_footer
            %s213 = sadd.s32 1, %s209
          $region64: #{reverse.1} parent=57 // loop_footer_branch
            %208 = sbr.rel target = $region60
          $region65: #{reverse.1} parent=57 // loop_exit
            _
        $region58: #{reverse.1} parent=42 // pred_fallthru
          _
        // Predicated region
        $region66: #{reverse.1} parent=42 // pred_check
          _
        $region67: #{reverse.1} parent=42 // pred_check_branch
          %233 = sbr.rel target = $region69
        $region68: #{reverse.1} parent=42 // pred_region
          _
        $region69: #{reverse.1} parent=42 // pred_fallthru
          _
      $region43: #{reverse.1} parent=38 // pred_fallthru
        _
      // Predicated region
      $region44: #{reverse.1} parent=38 // pred_check
        _
      $region45: #{reverse.1} parent=38 // pred_check_branch
        %179 = sbr.rel target = $region47
      $region46: #{reverse.1} parent=38 // pred_region
        %s181 = ssub.s32 256, 1
        loop: start=0, step=1, limit=1
        $region48: #{reverse.1} parent=46 // loop_pre_header
          _
        $region49: #{reverse.1} parent=46 // loop_header
          %s183 = sphi 0, %s187
          %p184 = scmp.ge.s32.totalorder %s183, 1
          %s188 = sphi [#allocation1], [#allocation1]
          %s189 = sphi %s1, %s1
        $region50: #{reverse.1} parent=46 // loop_header_branch
          %186 = sbr.rel (%p184) target = $region54
        $region51: #{reverse.1} parent=46 // loop_body
          %v190 = vld [vmem:[%s188] sm:%s181]
          %191 = vst [vmem:[%s189] sm:%s181] %v190
          %v192 = vld [vmem:[%s188 + $0x8] sm:%s181]
          %193 = vst [vmem:[%s189 + $0x8] sm:%s181] %v192
          %v194 = vld [vmem:[%s188 + $0x10] sm:%s181]
          %195 = vst [vmem:[%s189 + $0x10] sm:%s181] %v194
          %v196 = vld [vmem:[%s188 + $0x18] sm:%s181]
          %197 = vst [vmem:[%s189 + $0x18] sm:%s181] %v196
          %v198 = vld [vmem:[%s188 + $0x20] sm:%s181]
          %199 = vst [vmem:[%s189 + $0x20] sm:%s181] %v198
          %v200 = vld [vmem:[%s188 + $0x28] sm:%s181]
          %201 = vst [vmem:[%s189 + $0x28] sm:%s181] %v200
          %v202 = vld [vmem:[%s188 + $0x30] sm:%s181]
          %203 = vst [vmem:[%s189 + $0x30] sm:%s181] %v202
          %v204 = vld [vmem:[%s188 + $0x38] sm:%s181]
          %205 = vst [vmem:[%s189 + $0x38] sm:%s181] %v204
        $region52: #{reverse.1} parent=46 // loop_footer
          %s187 = sadd.s32 1, %s183
        $region53: #{reverse.1} parent=46 // loop_footer_branch
          %182 = sbr.rel target = $region49
        $region54: #{reverse.1} parent=46 // loop_exit
          _
      $region47: #{reverse.1} parent=38 // pred_fallthru
        _
    $region39: #{reverse.1} parent=1 // pred_fallthru
      _
    %234 = vnop

// kernel: lenia_step_fftc.1
$region0: #{lenia_step_fftc.1}
  #allocation0 [shape = 'u32[]', space=smem, size = 0x4, offset = 0x4, fixed_abs, tag = 'smem constant byte address 0x4 - core index']
  #allocation1 [shape = 'u32[72,128]{1,0:T(1,128)}', space=vmem, size = 0x9000, scoped, tag = 'internal scratch']
  #allocation2 [shape = 'f32[1]{0:T(128)S(6)}', space=smem, size = 0x200, scoped, tag = 'scoped memory for lenia_step_fftc.1']
  #allocation12 [shape = 's32[]', space=sflag, size = 0x4, offset = 0, fixed_abs, tag = 'sflag constant byte address 0x0 - dummy sync flag']
  %s0 = inlined_call_operand.<no memory space> [shape: f32[1], index: 0, kind: input, shape index: {}]
  %s1 = inlined_call_operand.vmem [shape: f32[4], index: 1, kind: input, shape index: {}]
  %s2 = inlined_call_operand.vmem [shape: f32[4], index: 2, kind: input, shape index: {}]
  %s3 = inlined_call_operand.vmem [shape: f32[4], index: 3, kind: input, shape index: {}]
  %s4 = inlined_call_operand.vmem [shape: f32[4,128,128], index: 4, kind: input, shape index: {}]
  %s5 = inlined_call_operand.vmem [shape: f32[128,128], index: 5, kind: input, shape index: {}]
  %s6 = inlined_call_operand.vmem [shape: f32[3,128,128], index: 6, kind: input, shape index: {}]
  %s7 = inlined_call_operand.hbm [shape: f32[3,128,128], index: 7, kind: output, shape index: {}]
  %s8 = sld [smem:[#allocation0]]
  $region149: #{lenia_step_fftc.1} parent=0
    _
  %s10 = ssub.s32 1, %s8
  %s11 = scalar_select 0, %s10, %s8
  %12 = sst [smem:[#allocation2]] %s0
  $region1: #{lenia_step_fftc.1} parent=0
    #allocation3 [shape = 'u8[512]{0}', space=smem, size = 0x200, scoped, tag = 'input window, operand 1, single buffered']
    #allocation4 [shape = 's32[2]{0}', space=sflag, size = 0x8, scoped, tag = 'scoped memory for lenia_step_fftc.1']
    #allocation5 [shape = 's32[2]{0}', space=sflag, size = 0x8, scoped, tag = 'scoped memory for lenia_step_fftc.1']
    #allocation6 [shape = 'u8[512]{0}', space=smem, size = 0x200, scoped, tag = 'input window, operand 2, single buffered']
    #allocation7 [shape = 's32[1]{0}', space=sflag, size = 0x4, scoped, tag = 'scoped memory for lenia_step_fftc.1']
    #allocation8 [shape = 'u8[512]{0}', space=smem, size = 0x200, scoped, tag = 'input window, operand 3, single buffered']
    #allocation9 [shape = 'u8[262144]{0}', space=vmem, size = 0x40000, scoped, tag = 'input window, operand 4']
    #allocation10 [shape = 'u8[196608]{0}', space=vmem, size = 0x30000, scoped, tag = 'input window, operand 6']
    #allocation11 [shape = 'u8[196608]{0}', space=vmem, size = 0x30000, scoped, tag = 'output window, operand 0']
    %13 = vsyncpa [#allocation5], 0
    %14 = vsyncpa [#allocation7], 0
    %15 = vsyncpa [#allocation4], 0
    %s16 = scalar_lea.sflag [#allocation4], 1
    %17 = vsyncpa %s16, 0
    loop: start=0, step=1, limit=4
    $region2: #{lenia_step_fftc.1} parent=1 // loop_pre_header
      _
    $region3: #{lenia_step_fftc.1} parent=1 // loop_header
      %s19 = sphi 0, %s23
      %p20 = scmp.ge.s32.totalorder %s19, 4
      %s27 = sphi 0, %s27
      %s29 = sphi 0, %s27
      %s30 = sphi 0, %s29
      %s44 = sphi 0, %s30
      %s48 = sphi 0, %s48
      %s50 = sphi 0, %s48
      %s51 = sphi 0, %s50
      %s65 = sphi 0, %s51
      %s69 = sphi 0, %s69
      %s71 = sphi 0, %s69
      %s72 = sphi 0, %s71
      %s86 = sphi 0, %s72
      %s90 = sphi 0, %s90
      %s92 = sphi 0, %s90
      %s93 = sphi 0, %s92
      %s107 = sphi 0, %s93
      %s113 = sphi 0, %s115
      %s116 = sphi 0, %s113
      %s117 = sphi 0, %s116
      %s133 = sphi 0, %s117
      %s139 = sphi 0, %s141
      %s142 = sphi 0, %s139
      %s143 = sphi 0, %s142
      %s159 = sphi 0, %s143
      %s165 = sphi 0, %s167
      %s168 = sphi 0, %s165
      %s169 = sphi 0, %s168
      %s185 = sphi 0, %s169
      %s191 = sphi 0, %s193
      %s194 = sphi 0, %s191
      %s195 = sphi 0, %s194
      %s211 = sphi 0, %s195
    $region4: #{lenia_step_fftc.1} parent=1 // loop_header_branch
      %22 = sbr.rel (%p20) target = $region8
    $region5: #{lenia_step_fftc.1} parent=1 // loop_body
      %s24 = ssub.s32 %s19, 1
      %s25 = ssub.s32 %s19, 2
      %s26 = sadd.s32 %s19, 1
      %s28 = sadd.s32 %s27, 1
      %p31 = scmp.eq.s32.totalorder %s19, 1
      %p32 = scmp.ne.s32.totalorder %s27, %s29
      %p33 = scmp.eq.s32.totalorder %s19, 0
      %p34 = por %p32, %p33
      %p35 = scmp.ne.s32.totalorder %s27, %s29
      %p36 = scmp.eq.s32.totalorder %s24, 1
      %p37 = por %p35, %p36
      %p38 = scmp.ne.s32.totalorder %s29, %s30
      %p39 = scmp.eq.s32.totalorder %s24, 0
      %p40 = por %p38, %p39
      %p41 = scmp.ne.s32.totalorder %s29, %s30
      %p42 = scmp.eq.s32.totalorder %s25, 1
      %p43 = por %p41, %p42
      %p45 = scmp.ne.s32.totalorder %s30, %s44
      %p46 = scmp.eq.s32.totalorder %s25, 0
      %p47 = por %p45, %p46
      %s49 = sadd.s32 %s48, 1
      %p52 = scmp.eq.s32.totalorder %s19, 1
      %p53 = scmp.ne.s32.totalorder %s48, %s50
      %p54 = scmp.eq.s32.totalorder %s19, 0
      %p55 = por %p53, %p54
      %p56 = scmp.ne.s32.totalorder %s48, %s50
      %p57 = scmp.eq.s32.totalorder %s24, 1
      %p58 = por %p56, %p57
      %p59 = scmp.ne.s32.totalorder %s50, %s51
      %p60 = scmp.eq.s32.totalorder %s24, 0
      %p61 = por %p59, %p60
      %p62 = scmp.ne.s32.totalorder %s50, %s51
      %p63 = scmp.eq.s32.totalorder %s25, 1
      %p64 = por %p62, %p63
      %p66 = scmp.ne.s32.totalorder %s51, %s65
      %p67 = scmp.eq.s32.totalorder %s25, 0
      %p68 = por %p66, %p67
      %s70 = sadd.s32 %s69, 1
      %p73 = scmp.eq.s32.totalorder %s19, 1
      %p74 = scmp.ne.s32.totalorder %s69, %s71
      %p75 = scmp.eq.s32.totalorder %s19, 0
      %p76 = por %p74, %p75
      %p77 = scmp.ne.s32.totalorder %s69, %s71
      %p78 = scmp.eq.s32.totalorder %s24, 1
      %p79 = por %p77, %p78
      %p80 = scmp.ne.s32.totalorder %s71, %s72
      %p81 = scmp.eq.s32.totalorder %s24, 0
      %p82 = por %p80, %p81
      %p83 = scmp.ne.s32.totalorder %s71, %s72
      %p84 = scmp.eq.s32.totalorder %s25, 1
      %p85 = por %p83, %p84
      %p87 = scmp.ne.s32.totalorder %s72, %s86
      %p88 = scmp.eq.s32.totalorder %s25, 0
      %p89 = por %p87, %p88
      %s91 = sadd.s32 %s90, 1
      %p94 = scmp.eq.s32.totalorder %s19, 1
      %p95 = scmp.ne.s32.totalorder %s90, %s92
      %p96 = scmp.eq.s32.totalorder %s19, 0
      %p97 = por %p95, %p96
      %p98 = scmp.ne.s32.totalorder %s90, %s92
      %p99 = scmp.eq.s32.totalorder %s24, 1
      %p100 = por %p98, %p99
      %p101 = scmp.ne.s32.totalorder %s92, %s93
      %p102 = scmp.eq.s32.totalorder %s24, 0
      %p103 = por %p101, %p102
      %p104 = scmp.ne.s32.totalorder %s92, %s93
      %p105 = scmp.eq.s32.totalorder %s25, 1
      %p106 = por %p104, %p105
      %p108 = scmp.ne.s32.totalorder %s93, %s107
      %p109 = scmp.eq.s32.totalorder %s25, 0
      %p110 = por %p108, %p109
      %s111 = ssub.s32 %s19, %s26
      %p112 = scmp.eq.s32.totalorder %s111, 0
      %s114 = sadd.s32 %s113, 1
      %s115 = scalar_select %p112, %s113, %s114
      %p118 = pneg %p112
      %p119 = scmp.eq.s32.totalorder %s19, 1
      %p120 = por %p118, %p119
      %p121 = scmp.ne.s32.totalorder %s113, %s116
      %p122 = scmp.eq.s32.totalorder %s19, 0
      %p123 = por %p121, %p122
      %p124 = scmp.ne.s32.totalorder %s113, %s116
      %p125 = scmp.eq.s32.totalorder %s24, 1
      %p126 = por %p124, %p125
      %p127 = scmp.ne.s32.totalorder %s116, %s117
      %p128 = scmp.eq.s32.totalorder %s24, 0
      %p129 = por %p127, %p128
      %p130 = scmp.ne.s32.totalorder %s116, %s117
      %p131 = scmp.eq.s32.totalorder %s25, 1
      %p132 = por %p130, %p131
      %p134 = scmp.ne.s32.totalorder %s117, %s133
      %p135 = scmp.eq.s32.totalorder %s25, 0
      %p136 = por %p134, %p135
      %s137 = ssub.s32 %s19, %s26
      %p138 = scmp.eq.s32.totalorder %s137, 0
      %s140 = sadd.s32 %s139, 1
      %s141 = scalar_select %p138, %s139, %s140
      %p144 = pneg %p138
      %p145 = scmp.eq.s32.totalorder %s19, 1
      %p146 = por %p144, %p145
      %p147 = scmp.ne.s32.totalorder %s139, %s142
      %p148 = scmp.eq.s32.totalorder %s19, 0
      %p149 = por %p147, %p148
      %p150 = scmp.ne.s32.totalorder %s139, %s142
      %p151 = scmp.eq.s32.totalorder %s24, 1
      %p152 = por %p150, %p151
      %p153 = scmp.ne.s32.totalorder %s142, %s143
      %p154 = scmp.eq.s32.totalorder %s24, 0
      %p155 = por %p153, %p154
      %p156 = scmp.ne.s32.totalorder %s142, %s143
      %p157 = scmp.eq.s32.totalorder %s25, 1
      %p158 = por %p156, %p157
      %p160 = scmp.ne.s32.totalorder %s143, %s159
      %p161 = scmp.eq.s32.totalorder %s25, 0
      %p162 = por %p160, %p161
      %s163 = ssub.s32 %s19, %s26
      %p164 = scmp.eq.s32.totalorder %s163, 0
      %s166 = sadd.s32 %s165, 1
      %s167 = scalar_select %p164, %s165, %s166
      %p170 = pneg %p164
      %p171 = scmp.eq.s32.totalorder %s19, 1
      %p172 = por %p170, %p171
      %p173 = scmp.ne.s32.totalorder %s165, %s168
      %p174 = scmp.eq.s32.totalorder %s19, 0
      %p175 = por %p173, %p174
      %p176 = scmp.ne.s32.totalorder %s165, %s168
      %p177 = scmp.eq.s32.totalorder %s24, 1
      %p178 = por %p176, %p177
      %p179 = scmp.ne.s32.totalorder %s168, %s169
      %p180 = scmp.eq.s32.totalorder %s24, 0
      %p181 = por %p179, %p180
      %p182 = scmp.ne.s32.totalorder %s168, %s169
      %p183 = scmp.eq.s32.totalorder %s25, 1
      %p184 = por %p182, %p183
      %p186 = scmp.ne.s32.totalorder %s169, %s185
      %p187 = scmp.eq.s32.totalorder %s25, 0
      %p188 = por %p186, %p187
      %s189 = ssub.s32 %s19, %s26
      %p190 = scmp.eq.s32.totalorder %s189, 0
      %s192 = sadd.s32 %s191, 1
      %s193 = scalar_select %p190, %s191, %s192
      %p196 = pneg %p190
      %p197 = scmp.eq.s32.totalorder %s19, 1
      %p198 = por %p196, %p197
      %p199 = scmp.ne.s32.totalorder %s191, %s194
      %p200 = scmp.eq.s32.totalorder %s19, 0
      %p201 = por %p199, %p200
      %p202 = scmp.ne.s32.totalorder %s191, %s194
      %p203 = scmp.eq.s32.totalorder %s24, 1
      %p204 = por %p202, %p203
      %p205 = scmp.ne.s32.totalorder %s194, %s195
      %p206 = scmp.eq.s32.totalorder %s24, 0
      %p207 = por %p205, %p206
      %p208 = scmp.ne.s32.totalorder %s194, %s195
      %p209 = scmp.eq.s32.totalorder %s25, 1
      %p210 = por %p208, %p209
      %p212 = scmp.ne.s32.totalorder %s195, %s211
      %p213 = scmp.eq.s32.totalorder %s25, 0
      %p214 = por %p212, %p213
      %p215 = scmp.le.s32.totalorder 1, %s19
      %p216 = scmp.lt.s32.totalorder %s19, 3
      %p217 = pnand %p215, %p216
      %p218 = pneg %p217
      // Predicated region
      $region9: #{lenia_step_fftc.1} parent=5 // pred_check
        _
      $region10: #{lenia_step_fftc.1} parent=5 // pred_check_branch
        %220 = sbr.rel (%p217) target = $region12
      $region11: #{lenia_step_fftc.1} parent=5 // pred_region
        %s221 = ssub.s32 %s19, 1
        // Predicated region
        $region13: #{lenia_step_fftc.1} parent=11 // pred_check
          %p222 = pneg %p40
        $region14: #{lenia_step_fftc.1} parent=11 // pred_check_branch
          %224 = sbr.rel (%p222) target = $region16
        $region15: #{lenia_step_fftc.1} parent=11 // pred_region
          _
        $region16: #{lenia_step_fftc.1} parent=11 // pred_fallthru
          _
        // Predicated region
        $region17: #{lenia_step_fftc.1} parent=11 // pred_check
          %p225 = pneg %p61
        $region18: #{lenia_step_fftc.1} parent=11 // pred_check_branch
          %227 = sbr.rel (%p225) target = $region20
        $region19: #{lenia_step_fftc.1} parent=11 // pred_region
          %229 = vsyncadd [#allocation5], 0
          %s231 = sshll.u32 %s1, 4
          %s232 = int_to_ptr.vmem [resolvable:$true] %s231
          %234 = dma.vmem_to_smem %s232, 16, [#allocation3], [#allocation5]
        $region20: #{lenia_step_fftc.1} parent=11 // pred_fallthru
          _
        // Predicated region
        $region21: #{lenia_step_fftc.1} parent=11 // pred_check
          %p235 = pneg %p82
        $region22: #{lenia_step_fftc.1} parent=11 // pred_check_branch
          %237 = sbr.rel (%p235) target = $region24
        $region23: #{lenia_step_fftc.1} parent=11 // pred_region
          %239 = vsyncadd [#allocation7], 0
          %s241 = sshll.u32 %s2, 4
          %s242 = int_to_ptr.vmem [resolvable:$true] %s241
          %244 = dma.vmem_to_smem %s242, 16, [#allocation6], [#allocation7]
        $region24: #{lenia_step_fftc.1} parent=11 // pred_fallthru
          _
        // Predicated region
        $region25: #{lenia_step_fftc.1} parent=11 // pred_check
          %p245 = pneg %p103
        $region26: #{lenia_step_fftc.1} parent=11 // pred_check_branch
          %247 = sbr.rel (%p245) target = $region28
        $region27: #{lenia_step_fftc.1} parent=11 // pred_region
          %249 = vsyncadd [#allocation7], 0
          %s251 = sshll.u32 %s3, 4
          %s252 = int_to_ptr.vmem [resolvable:$true] %s251
          %254 = dma.vmem_to_smem %s252, 16, [#allocation8], [#allocation7]
        $region28: #{lenia_step_fftc.1} parent=11 // pred_fallthru
          _
      $region12: #{lenia_step_fftc.1} parent=5 // pred_fallthru
        _
      %p255 = scmp.lt.s32.totalorder %s19, 2
      // Predicated region
      $region29: #{lenia_step_fftc.1} parent=5 // pred_check
        %p256 = pneg %p255
      $region30: #{lenia_step_fftc.1} parent=5 // pred_check_branch
        %258 = sbr.rel (%p256) target = $region32
      $region31: #{lenia_step_fftc.1} parent=5 // pred_region
        // Predicated region
        $region33: #{lenia_step_fftc.1} parent=31 // pred_check
          %p259 = pneg %p123
        $region34: #{lenia_step_fftc.1} parent=31 // pred_check_branch
          %261 = sbr.rel (%p259) target = $region36
        $region35: #{lenia_step_fftc.1} parent=31 // pred_region
          %s262 = sand.u32 %s113, 1
          %s263 = sand.u32 %s113, 1
          %s264 = smul.addr %s263, 256
          %s265 = scalar_lea.vmem [#allocation9], %s264
          %s266 = smul.u32 8, %s19
          %s267 = smul.addr %s266, 8
          %s268 = scalar_lea.vmem %s4, %s267
          // Predicated region
          $region37: #{lenia_step_fftc.1} parent=35 // pred_check
            _
          $region38: #{lenia_step_fftc.1} parent=35 // pred_check_branch
            %270 = sbr.rel (0) target = $region40
          $region39: #{lenia_step_fftc.1} parent=35 // pred_region
            // Predicated region
            $region41: #{lenia_step_fftc.1} parent=39 // pred_check
              _
            $region42: #{lenia_step_fftc.1} parent=39 // pred_check_branch
              %272 = sbr.rel (0) target = $region44
            $region43: #{lenia_step_fftc.1} parent=39 // pred_region
              // Predicated region
              $region56: #{lenia_step_fftc.1} parent=43 // pred_check
                _
              $region57: #{lenia_step_fftc.1} parent=43 // pred_check_branch
                %350 = sbr.rel (0) target = $region59
              $region58: #{lenia_step_fftc.1} parent=43 // pred_region
                loop: start=0, step=1, limit=1
                $region60: #{lenia_step_fftc.1} parent=58 // loop_pre_header
                  _
                $region61: #{lenia_step_fftc.1} parent=58 // loop_header
                  %s352 = sphi 0, %s356
                  %p353 = scmp.ge.s32.totalorder %s352, 1
                  %s357 = sphi %s268, %s268
                  %s358 = sphi %s265, %s265
                $region62: #{lenia_step_fftc.1} parent=58 // loop_header_branch
                  %355 = sbr.rel (%p353) target = $region66
                $region63: #{lenia_step_fftc.1} parent=58 // loop_body
                  %v359 = vld [vmem:[%s357] sm:$0xff]
                  %360 = vst [vmem:[%s358] sm:$0xff] %v359
                  %v361 = vld [vmem:[%s357 + $0x8] sm:$0xff]
                  %362 = vst [vmem:[%s358 + $0x8] sm:$0xff] %v361
                  %v363 = vld [vmem:[%s357 + $0x10] sm:$0xff]
                  %364 = vst [vmem:[%s358 + $0x10] sm:$0xff] %v363
                  %v365 = vld [vmem:[%s357 + $0x18] sm:$0xff]
                  %366 = vst [vmem:[%s358 + $0x18] sm:$0xff] %v365
                  %v367 = vld [vmem:[%s357 + $0x20] sm:$0xff]
                  %368 = vst [vmem:[%s358 + $0x20] sm:$0xff] %v367
                  %v369 = vld [vmem:[%s357 + $0x28] sm:$0xff]
                  %370 = vst [vmem:[%s358 + $0x28] sm:$0xff] %v369
                  %v371 = vld [vmem:[%s357 + $0x30] sm:$0xff]
                  %372 = vst [vmem:[%s358 + $0x30] sm:$0xff] %v371
                  %v373 = vld [vmem:[%s357 + $0x38] sm:$0xff]
                  %374 = vst [vmem:[%s358 + $0x38] sm:$0xff] %v373
                  %v375 = vld [vmem:[%s357 + $0x80] sm:$0xff]
                  %376 = vst [vmem:[%s358 + $0x40] sm:$0xff] %v375
                  %v377 = vld [vmem:[%s357 + $0x88] sm:$0xff]
                  %378 = vst [vmem:[%s358 + $0x48] sm:$0xff] %v377
                  %v379 = vld [vmem:[%s357 + $0x90] sm:$0xff]
                  %380 = vst [vmem:[%s358 + $0x50] sm:$0xff] %v379
                  %v381 = vld [vmem:[%s357 + $0x98] sm:$0xff]
                  %382 = vst [vmem:[%s358 + $0x58] sm:$0xff] %v381
                  %v383 = vld [vmem:[%s357 + $0xa0] sm:$0xff]
                  %384 = vst [vmem:[%s358 + $0x60] sm:$0xff] %v383
                  %v385 = vld [vmem:[%s357 + $0xa8] sm:$0xff]
                  %386 = vst [vmem:[%s358 + $0x68] sm:$0xff] %v385
                  %v387 = vld [vmem:[%s357 + $0xb0] sm:$0xff]
                  %388 = vst [vmem:[%s358 + $0x70] sm:$0xff] %v387
                  %v389 = vld [vmem:[%s357 + $0xb8] sm:$0xff]
                  %390 = vst [vmem:[%s358 + $0x78] sm:$0xff] %v389
                  %v391 = vld [vmem:[%s357 + $0x100] sm:$0xff]
                  %392 = vst [vmem:[%s358 + $0x80] sm:$0xff] %v391
                  %v393 = vld [vmem:[%s357 + $0x108] sm:$0xff]
                  %394 = vst [vmem:[%s358 + $0x88] sm:$0xff] %v393
                  %v395 = vld [vmem:[%s357 + $0x110] sm:$0xff]
                  %396 = vst [vmem:[%s358 + $0x90] sm:$0xff] %v395
                  %v397 = vld [vmem:[%s357 + $0x118] sm:$0xff]
                  %398 = vst [vmem:[%s358 + $0x98] sm:$0xff] %v397
                  %v399 = vld [vmem:[%s357 + $0x120] sm:$0xff]
                  %400 = vst [vmem:[%s358 + $0xa0] sm:$0xff] %v399
                  %v401 = vld [vmem:[%s357 + $0x128] sm:$0xff]
                  %402 = vst [vmem:[%s358 + $0xa8] sm:$0xff] %v401
                  %v403 = vld [vmem:[%s357 + $0x130] sm:$0xff]
                  %404 = vst [vmem:[%s358 + $0xb0] sm:$0xff] %v403
                  %v405 = vld [vmem:[%s357 + $0x138] sm:$0xff]
                  %406 = vst [vmem:[%s358 + $0xb8] sm:$0xff] %v405
                  %v407 = vld [vmem:[%s357 + $0x180] sm:$0xff]
                  %408 = vst [vmem:[%s358 + $0xc0] sm:$0xff] %v407
                  %v409 = vld [vmem:[%s357 + $0x188] sm:$0xff]
                  %410 = vst [vmem:[%s358 + $0xc8] sm:$0xff] %v409
                  %v411 = vld [vmem:[%s357 + $0x190] sm:$0xff]
                  %412 = vst [vmem:[%s358 + $0xd0] sm:$0xff] %v411
                  %v413 = vld [vmem:[%s357 + $0x198] sm:$0xff]
                  %414 = vst [vmem:[%s358 + $0xd8] sm:$0xff] %v413
                  %v415 = vld [vmem:[%s357 + $0x1a0] sm:$0xff]
                  %416 = vst [vmem:[%s358 + $0xe0] sm:$0xff] %v415
                  %v417 = vld [vmem:[%s357 + $0x1a8] sm:$0xff]
                  %418 = vst [vmem:[%s358 + $0xe8] sm:$0xff] %v417
                  %v419 = vld [vmem:[%s357 + $0x1b0] sm:$0xff]
                  %420 = vst [vmem:[%s358 + $0xf0] sm:$0xff] %v419
                  %v421 = vld [vmem:[%s357 + $0x1b8] sm:$0xff]
                  %422 = vst [vmem:[%s358 + $0xf8] sm:$0xff] %v421
                $region64: #{lenia_step_fftc.1} parent=58 // loop_footer
                  %s356 = sadd.s32 1, %s352
                $region65: #{lenia_step_fftc.1} parent=58 // loop_footer_branch
                  %351 = sbr.rel target = $region61
                $region66: #{lenia_step_fftc.1} parent=58 // loop_exit
                  _
              $region59: #{lenia_step_fftc.1} parent=43 // pred_fallthru
                _
              // Predicated region
              $region67: #{lenia_step_fftc.1} parent=43 // pred_check
                _
              $region68: #{lenia_step_fftc.1} parent=43 // pred_check_branch
                %424 = sbr.rel target = $region70
              $region69: #{lenia_step_fftc.1} parent=43 // pred_region
                _
              $region70: #{lenia_step_fftc.1} parent=43 // pred_fallthru
                _
            $region44: #{lenia_step_fftc.1} parent=39 // pred_fallthru
              _
            // Predicated region
            $region45: #{lenia_step_fftc.1} parent=39 // pred_check
              _
            $region46: #{lenia_step_fftc.1} parent=39 // pred_check_branch
              %274 = sbr.rel target = $region48
            $region47: #{lenia_step_fftc.1} parent=39 // pred_region
              %s276 = ssub.s32 256, 1
              loop: start=0, step=1, limit=1
              $region49: #{lenia_step_fftc.1} parent=47 // loop_pre_header
                _
              $region50: #{lenia_step_fftc.1} parent=47 // loop_header
                %s278 = sphi 0, %s282
                %p279 = scmp.ge.s32.totalorder %s278, 1
                %s283 = sphi %s268, %s268
                %s284 = sphi %s265, %s265
              $region51: #{lenia_step_fftc.1} parent=47 // loop_header_branch
                %281 = sbr.rel (%p279) target = $region55
              $region52: #{lenia_step_fftc.1} parent=47 // loop_body
                %v285 = vld [vmem:[%s283] sm:%s276]
                %286 = vst [vmem:[%s284] sm:%s276] %v285
                %v287 = vld [vmem:[%s283 + $0x8] sm:%s276]
                %288 = vst [vmem:[%s284 + $0x8] sm:%s276] %v287
                %v289 = vld [vmem:[%s283 + $0x10] sm:%s276]
                %290 = vst [vmem:[%s284 + $0x10] sm:%s276] %v289
                %v291 = vld [vmem:[%s283 + $0x18] sm:%s276]
                %292 = vst [vmem:[%s284 + $0x18] sm:%s276] %v291
                %v293 = vld [vmem:[%s283 + $0x20] sm:%s276]
                %294 = vst [vmem:[%s284 + $0x20] sm:%s276] %v293
                %v295 = vld [vmem:[%s283 + $0x28] sm:%s276]
                %296 = vst [vmem:[%s284 + $0x28] sm:%s276] %v295
                %v297 = vld [vmem:[%s283 + $0x30] sm:%s276]
                %298 = vst [vmem:[%s284 + $0x30] sm:%s276] %v297
                %v299 = vld [vmem:[%s283 + $0x38] sm:%s276]
                %300 = vst [vmem:[%s284 + $0x38] sm:%s276] %v299
                %v301 = vld [vmem:[%s283 + $0x80] sm:%s276]
                %302 = vst [vmem:[%s284 + $0x40] sm:%s276] %v301
                %v303 = vld [vmem:[%s283 + $0x88] sm:%s276]
                %304 = vst [vmem:[%s284 + $0x48] sm:%s276] %v303
                %v305 = vld [vmem:[%s283 + $0x90] sm:%s276]
                %306 = vst [vmem:[%s284 + $0x50] sm:%s276] %v305
                %v307 = vld [vmem:[%s283 + $0x98] sm:%s276]
                %308 = vst [vmem:[%s284 + $0x58] sm:%s276] %v307
                %v309 = vld [vmem:[%s283 + $0xa0] sm:%s276]
                %310 = vst [vmem:[%s284 + $0x60] sm:%s276] %v309
                %v311 = vld [vmem:[%s283 + $0xa8] sm:%s276]
                %312 = vst [vmem:[%s284 + $0x68] sm:%s276] %v311
                %v313 = vld [vmem:[%s283 + $0xb0] sm:%s276]
                %314 = vst [vmem:[%s284 + $0x70] sm:%s276] %v313
                %v315 = vld [vmem:[%s283 + $0xb8] sm:%s276]
                %316 = vst [vmem:[%s284 + $0x78] sm:%s276] %v315
                %v317 = vld [vmem:[%s283 + $0x100] sm:%s276]
                %318 = vst [vmem:[%s284 + $0x80] sm:%s276] %v317
                %v319 = vld [vmem:[%s283 + $0x108] sm:%s276]
                %320 = vst [vmem:[%s284 + $0x88] sm:%s276] %v319
                %v321 = vld [vmem:[%s283 + $0x110] sm:%s276]
                %322 = vst [vmem:[%s284 + $0x90] sm:%s276] %v321
                %v323 = vld [vmem:[%s283 + $0x118] sm:%s276]
                %324 = vst [vmem:[%s284 + $0x98] sm:%s276] %v323
                %v325 = vld [vmem:[%s283 + $0x120] sm:%s276]
                %326 = vst [vmem:[%s284 + $0xa0] sm:%s276] %v325
                %v327 = vld [vmem:[%s283 + $0x128] sm:%s276]
                %328 = vst [vmem:[%s284 + $0xa8] sm:%s276] %v327
                %v329 = vld [vmem:[%s283 + $0x130] sm:%s276]
                %330 = vst [vmem:[%s284 + $0xb0] sm:%s276] %v329
                %v331 = vld [vmem:[%s283 + $0x138] sm:%s276]
                %332 = vst [vmem:[%s284 + $0xb8] sm:%s276] %v331
                %v333 = vld [vmem:[%s283 + $0x180] sm:%s276]
                %334 = vst [vmem:[%s284 + $0xc0] sm:%s276] %v333
                %v335 = vld [vmem:[%s283 + $0x188] sm:%s276]
                %336 = vst [vmem:[%s284 + $0xc8] sm:%s276] %v335
                %v337 = vld [vmem:[%s283 + $0x190] sm:%s276]
                %338 = vst [vmem:[%s284 + $0xd0] sm:%s276] %v337
                %v339 = vld [vmem:[%s283 + $0x198] sm:%s276]
                %340 = vst [vmem:[%s284 + $0xd8] sm:%s276] %v339
                %v341 = vld [vmem:[%s283 + $0x1a0] sm:%s276]
                %342 = vst [vmem:[%s284 + $0xe0] sm:%s276] %v341
                %v343 = vld [vmem:[%s283 + $0x1a8] sm:%s276]
                %344 = vst [vmem:[%s284 + $0xe8] sm:%s276] %v343
                %v345 = vld [vmem:[%s283 + $0x1b0] sm:%s276]
                %346 = vst [vmem:[%s284 + $0xf0] sm:%s276] %v345
                %v347 = vld [vmem:[%s283 + $0x1b8] sm:%s276]
                %348 = vst [vmem:[%s284 + $0xf8] sm:%s276] %v347
              $region53: #{lenia_step_fftc.1} parent=47 // loop_footer
                %s282 = sadd.s32 1, %s278
              $region54: #{lenia_step_fftc.1} parent=47 // loop_footer_branch
                %277 = sbr.rel target = $region50
              $region55: #{lenia_step_fftc.1} parent=47 // loop_exit
                _
            $region48: #{lenia_step_fftc.1} parent=39 // pred_fallthru
              _
          $region40: #{lenia_step_fftc.1} parent=35 // pred_fallthru
            _
          %425 = vnop
        $region36: #{lenia_step_fftc.1} parent=31 // pred_fallthru
          _
        // Predicated region
        $region71: #{lenia_step_fftc.1} parent=31 // pred_check
          %p426 = pneg %p149
        $region72: #{lenia_step_fftc.1} parent=31 // pred_check_branch
          %428 = sbr.rel (%p426) target = $region74
        $region73: #{lenia_step_fftc.1} parent=31 // pred_region
          %s429 = smul.u32 8, %s19
          %p430 = scmp.lt.s32.totalorder %s429, 15
          %s431 = scalar_select %p430, %s429, 15
          %s432 = smul.addr %s431, 8
          %s433 = scalar_lea.vmem %s5, %s432
          %s434 = smul.u32 8, %s19
        $region74: #{lenia_step_fftc.1} parent=31 // pred_fallthru
          _
        // Predicated region
        $region75: #{lenia_step_fftc.1} parent=31 // pred_check
          %p435 = pneg %p175
        $region76: #{lenia_step_fftc.1} parent=31 // pred_check_branch
          %437 = sbr.rel (%p435) target = $region78
        $region77: #{lenia_step_fftc.1} parent=31 // pred_region
          %s438 = sand.u32 %s165, 1
          %s439 = sand.u32 %s165, 1
          %s440 = smul.addr %s439, 192
          %s441 = scalar_lea.vmem [#allocation10], %s440
          %s442 = smul.u32 8, %s19
          %s443 = smul.addr %s442, 8
          %s444 = scalar_lea.vmem %s6, %s443
          // Predicated region
          $region79: #{lenia_step_fftc.1} parent=77 // pred_check
            _
          $region80: #{lenia_step_fftc.1} parent=77 // pred_check_branch
            %446 = sbr.rel (0) target = $region82
          $region81: #{lenia_step_fftc.1} parent=77 // pred_region
            // Predicated region
            $region83: #{lenia_step_fftc.1} parent=81 // pred_check
              _
            $region84: #{lenia_step_fftc.1} parent=81 // pred_check_branch
              %448 = sbr.rel (0) target = $region86
            $region85: #{lenia_step_fftc.1} parent=81 // pred_region
              // Predicated region
              $region98: #{lenia_step_fftc.1} parent=85 // pred_check
                _
              $region99: #{lenia_step_fftc.1} parent=85 // pred_check_branch
                %510 = sbr.rel (0) target = $region101
              $region100: #{lenia_step_fftc.1} parent=85 // pred_region
                loop: start=0, step=1, limit=1
                $region102: #{lenia_step_fftc.1} parent=100 // loop_pre_header
                  _
                $region103: #{lenia_step_fftc.1} parent=100 // loop_header
                  %s512 = sphi 0, %s516
                  %p513 = scmp.ge.s32.totalorder %s512, 1
                  %s517 = sphi %s444, %s444
                  %s518 = sphi %s441, %s441
                $region104: #{lenia_step_fftc.1} parent=100 // loop_header_branch
                  %515 = sbr.rel (%p513) target = $region108
                $region105: #{lenia_step_fftc.1} parent=100 // loop_body
                  %v519 = vld [vmem:[%s517] sm:$0xff]
                  %520 = vst [vmem:[%s518] sm:$0xff] %v519
                  %v521 = vld [vmem:[%s517 + $0x8] sm:$0xff]
                  %522 = vst [vmem:[%s518 + $0x8] sm:$0xff] %v521
                  %v523 = vld [vmem:[%s517 + $0x10] sm:$0xff]
                  %524 = vst [vmem:[%s518 + $0x10] sm:$0xff] %v523
                  %v525 = vld [vmem:[%s517 + $0x18] sm:$0xff]
                  %526 = vst [vmem:[%s518 + $0x18] sm:$0xff] %v525
                  %v527 = vld [vmem:[%s517 + $0x20] sm:$0xff]
                  %528 = vst [vmem:[%s518 + $0x20] sm:$0xff] %v527
                  %v529 = vld [vmem:[%s517 + $0x28] sm:$0xff]
                  %530 = vst [vmem:[%s518 + $0x28] sm:$0xff] %v529
                  %v531 = vld [vmem:[%s517 + $0x30] sm:$0xff]
                  %532 = vst [vmem:[%s518 + $0x30] sm:$0xff] %v531
                  %v533 = vld [vmem:[%s517 + $0x38] sm:$0xff]
                  %534 = vst [vmem:[%s518 + $0x38] sm:$0xff] %v533
                  %v535 = vld [vmem:[%s517 + $0x80] sm:$0xff]
                  %536 = vst [vmem:[%s518 + $0x40] sm:$0xff] %v535
                  %v537 = vld [vmem:[%s517 + $0x88] sm:$0xff]
                  %538 = vst [vmem:[%s518 + $0x48] sm:$0xff] %v537
                  %v539 = vld [vmem:[%s517 + $0x90] sm:$0xff]
                  %540 = vst [vmem:[%s518 + $0x50] sm:$0xff] %v539
                  %v541 = vld [vmem:[%s517 + $0x98] sm:$0xff]
                  %542 = vst [vmem:[%s518 + $0x58] sm:$0xff] %v541
                  %v543 = vld [vmem:[%s517 + $0xa0] sm:$0xff]
                  %544 = vst [vmem:[%s518 + $0x60] sm:$0xff] %v543
                  %v545 = vld [vmem:[%s517 + $0xa8] sm:$0xff]
                  %546 = vst [vmem:[%s518 + $0x68] sm:$0xff] %v545
                  %v547 = vld [vmem:[%s517 + $0xb0] sm:$0xff]
                  %548 = vst [vmem:[%s518 + $0x70] sm:$0xff] %v547
                  %v549 = vld [vmem:[%s517 + $0xb8] sm:$0xff]
                  %550 = vst [vmem:[%s518 + $0x78] sm:$0xff] %v549
                  %v551 = vld [vmem:[%s517 + $0x100] sm:$0xff]
                  %552 = vst [vmem:[%s518 + $0x80] sm:$0xff] %v551
                  %v553 = vld [vmem:[%s517 + $0x108] sm:$0xff]
                  %554 = vst [vmem:[%s518 + $0x88] sm:$0xff] %v553
                  %v555 = vld [vmem:[%s517 + $0x110] sm:$0xff]
                  %556 = vst [vmem:[%s518 + $0x90] sm:$0xff] %v555
                  %v557 = vld [vmem:[%s517 + $0x118] sm:$0xff]
                  %558 = vst [vmem:[%s518 + $0x98] sm:$0xff] %v557
                  %v559 = vld [vmem:[%s517 + $0x120] sm:$0xff]
                  %560 = vst [vmem:[%s518 + $0xa0] sm:$0xff] %v559
                  %v561 = vld [vmem:[%s517 + $0x128] sm:$0xff]
                  %562 = vst [vmem:[%s518 + $0xa8] sm:$0xff] %v561
                  %v563 = vld [vmem:[%s517 + $0x130] sm:$0xff]
                  %564 = vst [vmem:[%s518 + $0xb0] sm:$0xff] %v563
                  %v565 = vld [vmem:[%s517 + $0x138] sm:$0xff]
                  %566 = vst [vmem:[%s518 + $0xb8] sm:$0xff] %v565
                $region106: #{lenia_step_fftc.1} parent=100 // loop_footer
                  %s516 = sadd.s32 1, %s512
                $region107: #{lenia_step_fftc.1} parent=100 // loop_footer_branch
                  %511 = sbr.rel target = $region103
                $region108: #{lenia_step_fftc.1} parent=100 // loop_exit
                  _
              $region101: #{lenia_step_fftc.1} parent=85 // pred_fallthru
                _
              // Predicated region
              $region109: #{lenia_step_fftc.1} parent=85 // pred_check
                _
              $region110: #{lenia_step_fftc.1} parent=85 // pred_check_branch
                %568 = sbr.rel target = $region112
              $region111: #{lenia_step_fftc.1} parent=85 // pred_region
                _
              $region112: #{lenia_step_fftc.1} parent=85 // pred_fallthru
                _
            $region86: #{lenia_step_fftc.1} parent=81 // pred_fallthru
              _
            // Predicated region
            $region87: #{lenia_step_fftc.1} parent=81 // pred_check
              _
            $region88: #{lenia_step_fftc.1} parent=81 // pred_check_branch
              %450 = sbr.rel target = $region90
            $region89: #{lenia_step_fftc.1} parent=81 // pred_region
              %s452 = ssub.s32 256, 1
              loop: start=0, step=1, limit=1
              $region91: #{lenia_step_fftc.1} parent=89 // loop_pre_header
                _
              $region92: #{lenia_step_fftc.1} parent=89 // loop_header
                %s454 = sphi 0, %s458
                %p455 = scmp.ge.s32.totalorder %s454, 1
                %s459 = sphi %s444, %s444
                %s460 = sphi %s441, %s441
              $region93: #{lenia_step_fftc.1} parent=89 // loop_header_branch
                %457 = sbr.rel (%p455) target = $region97
              $region94: #{lenia_step_fftc.1} parent=89 // loop_body
                %v461 = vld [vmem:[%s459] sm:%s452]
                %462 = vst [vmem:[%s460] sm:%s452] %v461
                %v463 = vld [vmem:[%s459 + $0x8] sm:%s452]
                %464 = vst [vmem:[%s460 + $0x8] sm:%s452] %v463
                %v465 = vld [vmem:[%s459 + $0x10] sm:%s452]
                %466 = vst [vmem:[%s460 + $0x10] sm:%s452] %v465
                %v467 = vld [vmem:[%s459 + $0x18] sm:%s452]
                %468 = vst [vmem:[%s460 + $0x18] sm:%s452] %v467
                %v469 = vld [vmem:[%s459 + $0x20] sm:%s452]
                %470 = vst [vmem:[%s460 + $0x20] sm:%s452] %v469
                %v471 = vld [vmem:[%s459 + $0x28] sm:%s452]
                %472 = vst [vmem:[%s460 + $0x28] sm:%s452] %v471
                %v473 = vld [vmem:[%s459 + $0x30] sm:%s452]
                %474 = vst [vmem:[%s460 + $0x30] sm:%s452] %v473
                %v475 = vld [vmem:[%s459 + $0x38] sm:%s452]
                %476 = vst [vmem:[%s460 + $0x38] sm:%s452] %v475
                %v477 = vld [vmem:[%s459 + $0x80] sm:%s452]
                %478 = vst [vmem:[%s460 + $0x40] sm:%s452] %v477
                %v479 = vld [vmem:[%s459 + $0x88] sm:%s452]
                %480 = vst [vmem:[%s460 + $0x48] sm:%s452] %v479
                %v481 = vld [vmem:[%s459 + $0x90] sm:%s452]
                %482 = vst [vmem:[%s460 + $0x50] sm:%s452] %v481
                %v483 = vld [vmem:[%s459 + $0x98] sm:%s452]
                %484 = vst [vmem:[%s460 + $0x58] sm:%s452] %v483
                %v485 = vld [vmem:[%s459 + $0xa0] sm:%s452]
                %486 = vst [vmem:[%s460 + $0x60] sm:%s452] %v485
                %v487 = vld [vmem:[%s459 + $0xa8] sm:%s452]
                %488 = vst [vmem:[%s460 + $0x68] sm:%s452] %v487
                %v489 = vld [vmem:[%s459 + $0xb0] sm:%s452]
                %490 = vst [vmem:[%s460 + $0x70] sm:%s452] %v489
                %v491 = vld [vmem:[%s459 + $0xb8] sm:%s452]
                %492 = vst [vmem:[%s460 + $0x78] sm:%s452] %v491
                %v493 = vld [vmem:[%s459 + $0x100] sm:%s452]
                %494 = vst [vmem:[%s460 + $0x80] sm:%s452] %v493
                %v495 = vld [vmem:[%s459 + $0x108] sm:%s452]
                %496 = vst [vmem:[%s460 + $0x88] sm:%s452] %v495
                %v497 = vld [vmem:[%s459 + $0x110] sm:%s452]
                %498 = vst [vmem:[%s460 + $0x90] sm:%s452] %v497
                %v499 = vld [vmem:[%s459 + $0x118] sm:%s452]
                %500 = vst [vmem:[%s460 + $0x98] sm:%s452] %v499
                %v501 = vld [vmem:[%s459 + $0x120] sm:%s452]
                %502 = vst [vmem:[%s460 + $0xa0] sm:%s452] %v501
                %v503 = vld [vmem:[%s459 + $0x128] sm:%s452]
                %504 = vst [vmem:[%s460 + $0xa8] sm:%s452] %v503
                %v505 = vld [vmem:[%s459 + $0x130] sm:%s452]
                %506 = vst [vmem:[%s460 + $0xb0] sm:%s452] %v505
                %v507 = vld [vmem:[%s459 + $0x138] sm:%s452]
                %508 = vst [vmem:[%s460 + $0xb8] sm:%s452] %v507
              $region95: #{lenia_step_fftc.1} parent=89 // loop_footer
                %s458 = sadd.s32 1, %s454
              $region96: #{lenia_step_fftc.1} parent=89 // loop_footer_branch
                %453 = sbr.rel target = $region92
              $region97: #{lenia_step_fftc.1} parent=89 // loop_exit
                _
            $region90: #{lenia_step_fftc.1} parent=81 // pred_fallthru
              _
          $region82: #{lenia_step_fftc.1} parent=77 // pred_fallthru
            _
          %569 = vnop
        $region78: #{lenia_step_fftc.1} parent=31 // pred_fallthru
          _
      $region32: #{lenia_step_fftc.1} parent=5 // pred_fallthru
        _
      %p570 = scmp.le.s32.totalorder 1, %s19
      %p571 = scmp.lt.s32.totalorder %s19, 3
      %p572 = pnand %p570, %p571
      %p573 = pneg %p572
      // Predicated region
      $region113: #{lenia_step_fftc.1} parent=5 // pred_check
        _
      $region114: #{lenia_step_fftc.1} parent=5 // pred_check_branch
        %575 = sbr.rel (%p572) target = $region116
      $region115: #{lenia_step_fftc.1} parent=5 // pred_region
        %s576 = ssub.s32 %s19, 1
        // Predicated region
        $region117: #{lenia_step_fftc.1} parent=115 // pred_check
          %p577 = pneg %p61
        $region118: #{lenia_step_fftc.1} parent=115 // pred_check_branch
          %579 = sbr.rel (%p577) target = $region120
        $region119: #{lenia_step_fftc.1} parent=115 // pred_region
          %581 = dma.done [#allocation5], 16
        $region120: #{lenia_step_fftc.1} parent=115 // pred_fallthru
          _
        // Predicated region
        $region121: #{lenia_step_fftc.1} parent=115 // pred_check
          %p582 = pneg %p82
        $region122: #{lenia_step_fftc.1} parent=115 // pred_check_branch
          %584 = sbr.rel (%p582) target = $region124
        $region123: #{lenia_step_fftc.1} parent=115 // pred_region
          %586 = dma.done [#allocation7], 16
        $region124: #{lenia_step_fftc.1} parent=115 // pred_fallthru
          _
        // Predicated region
        $region125: #{lenia_step_fftc.1} parent=115 // pred_check
          %p587 = pneg %p103
        $region126: #{lenia_step_fftc.1} parent=115 // pred_check_branch
          %589 = sbr.rel (%p587) target = $region128
        $region127: #{lenia_step_fftc.1} parent=115 // pred_region
          %591 = dma.done [#allocation7], 16
        $region128: #{lenia_step_fftc.1} parent=115 // pred_fallthru
          _
        %s592 = sand.u32 %s116, 1
        %s593 = sand.u32 %s116, 1
        %s594 = smul.addr %s593, 256
        %s595 = scalar_lea.vmem [#allocation9], %s594
        // Predicated region
        $region129: #{lenia_step_fftc.1} parent=115 // pred_check
          %p596 = pneg %p129
        $region130: #{lenia_step_fftc.1} parent=115 // pred_check_branch
          %598 = sbr.rel (%p596) target = $region132
        $region131: #{lenia_step_fftc.1} parent=115 // pred_region
          _
        $region132: #{lenia_step_fftc.1} parent=115 // pred_fallthru
          _
        %s599 = sand.u32 %s168, 1
        %s600 = sand.u32 %s168, 1
        %s601 = smul.addr %s600, 192
        %s602 = scalar_lea.vmem [#allocation10], %s601
        // Predicated region
        $region133: #{lenia_step_fftc.1} parent=115 // pred_check
          %p603 = pneg %p181
        $region134: #{lenia_step_fftc.1} parent=115 // pred_check_branch
          %605 = sbr.rel (%p603) target = $region136
        $region135: #{lenia_step_fftc.1} parent=115 // pred_region
          _
        $region136: #{lenia_step_fftc.1} parent=115 // pred_fallthru
          _
        %606 = sfence
        %p607 = pneg %p40
        %p608 = pneg %p37
        %p609 = pneg %p61
        %p610 = pneg %p58
        %p611 = pneg %p82
        %p612 = pneg %p79
        %p613 = pneg %p103
        %p614 = pneg %p100
        %s615 = sand.u32 %s116, 1
        %s616 = sand.u32 %s116, 1
        %s617 = smul.addr %s616, 256
        %s618 = scalar_lea.vmem [#allocation9], %s617
        %p619 = pneg %p129
        %p620 = pneg %p126
        %s621 = smul.u32 8, %s24
        %p622 = scmp.lt.s32.totalorder %s621, 15
        %s623 = scalar_select %p622, %s621, 15
        %s624 = smul.addr %s623, 8
        %s625 = scalar_lea.vmem %s5, %s624
        %p626 = pneg %p155
        %p627 = pneg %p152
        %s628 = sand.u32 %s168, 1
        %s629 = sand.u32 %s168, 1
        %s630 = smul.addr %s629, 192
        %s631 = scalar_lea.vmem [#allocation10], %s630
        %p632 = pneg %p181
        %p633 = pneg %p178
        %p634 = pneg %p207
        %p635 = pneg %p204
        %s636 = sand.u32 %s194, 1
        %s637 = scalar_lea.sflag [#allocation4], %s636
        %s638 = sand.u32 %s194, 1
        %s639 = smul.addr %s638, 192
        %s640 = scalar_lea.vmem [#allocation11], %s639
        %s641 = smul.u32 8, %s24
        %s642 = smul.u32 8, %s24
        %p643 = scmp.lt.s32.totalorder %s642, 15
        %s644 = scalar_select %p643, %s642, 15
        %s645 = smul.addr %s644, 8
        %s646 = scalar_lea.vmem %s5, %s645
        %s647 = smul.u32 8, %s24
        %s648 = smul.u32 8, %s24
        %s649 = smul.u32 8, %s24
        %s650 = sld [smem:[#allocation2]]
        %v651 = vld [vmem:[%s595] sm:$0xff]
        %v652 = vld [vmem:[%s595 + $0x8] sm:$0xff]
        %v653 = vld [vmem:[%s595 + $0x10] sm:$0xff]
        %v654 = vld [vmem:[%s595 + $0x18] sm:$0xff]
        %v655 = vld [vmem:[%s595 + $0x20] sm:$0xff]
        %v656 = vld [vmem:[%s595 + $0x28] sm:$0xff]
        %v657 = vld [vmem:[%s595 + $0x30] sm:$0xff]
        %v658 = vld [vmem:[%s595 + $0x38] sm:$0xff]
        %s659 = sld [smem:[#allocation3]]
        %v660 = vstv %s659
        %v661 = vsub.f32 %v651, %v660
        %v662 = vsub.f32 %v652, %v660
        %v663 = vsub.f32 %v653, %v660
        %v664 = vsub.f32 %v654, %v660
        %v665 = vsub.f32 %v655, %v660
        %v666 = vsub.f32 %v656, %v660
        %v667 = vsub.f32 %v657, %v660
        %v668 = vsub.f32 %v658, %v660
        %v669 = vmul.f32 %v661, %v661
        %v670 = vmul.f32 %v662, %v662
        %v671 = vmul.f32 %v663, %v663
        %v672 = vmul.f32 %v664, %v664
        %v673 = vmul.f32 %v665, %v665
        %v674 = vmul.f32 %v666, %v666
        %v675 = vmul.f32 %v667, %v667
        %v676 = vmul.f32 %v668, %v668
        %s677 = sld [smem:[#allocation6]]
        %v678 = vstv %s677
        %v679 = vmul.f32 %v669, %v678
        %v680 = vmul.f32 %v670, %v678
        %v681 = vmul.f32 %v671, %v678
        %v682 = vmul.f32 %v672, %v678
        %v683 = vmul.f32 %v673, %v678
        %v684 = vmul.f32 %v674, %v678
        %v685 = vmul.f32 %v675, %v678
        %v686 = vmul.f32 %v676, %v678
        %v687 = vsub.f32 %v679, 0.001
        %v688 = vsub.f32 %v680, 0.001
        %v689 = vsub.f32 %v681, 0.001
        %v690 = vsub.f32 %v682, 0.001
        %v691 = vsub.f32 %v683, 0.001
        %v692 = vsub.f32 %v684, 0.001
        %v693 = vsub.f32 %v685, 0.001
        %v694 = vsub.f32 %v686, 0.001
        %v695 = vmul.f32 %v687, 1.442695
        %v696 = vpow.pop %v695
        %v697 = vmul.f32 %v688, 1.442695
        %v698 = vpow.pop %v697
        %v699 = vmul.f32 %v689, 1.442695
        %v700 = vpow.pop %v699
        %v701 = vmul.f32 %v690, 1.442695
        %v702 = vpow.pop %v701
        %v703 = vmul.f32 %v691, 1.442695
        %v704 = vpow.pop %v703
        %v705 = vmul.f32 %v692, 1.442695
        %v706 = vpow.pop %v705
        %v707 = vmul.f32 %v693, 1.442695
        %v708 = vpow.pop %v707
        %v709 = vmul.f32 %v694, 1.442695
        %v710 = vpow.pop %v709
        %v711 = vmul.f32 %v696, 2.0
        %v712 = vmul.f32 %v698, 2.0
        %v713 = vmul.f32 %v700, 2.0
        %v714 = vmul.f32 %v702, 2.0
        %v715 = vmul.f32 %v704, 2.0
        %v716 = vmul.f32 %v706, 2.0
        %v717 = vmul.f32 %v708, 2.0
        %v718 = vmul.f32 %v710, 2.0
        %v719 = vsub.f32 %v711, 1.0
        %v720 = vsub.f32 %v712, 1.0
        %v721 = vsub.f32 %v713, 1.0
        %v722 = vsub.f32 %v714, 1.0
        %v723 = vsub.f32 %v715, 1.0
        %v724 = vsub.f32 %v716, 1.0
        %v725 = vsub.f32 %v717, 1.0
        %v726 = vsub.f32 %v718, 1.0
        %s727 = sld [smem:[#allocation8]]
        %v728 = vstv %s727
        %v729 = vmul.f32 %v728, %v719
        %v730 = vmul.f32 %v728, %v720
        %v731 = vmul.f32 %v728, %v721
        %v732 = vmul.f32 %v728, %v722
        %v733 = vmul.f32 %v728, %v723
        %v734 = vmul.f32 %v728, %v724
        %v735 = vmul.f32 %v728, %v725
        %v736 = vmul.f32 %v728, %v726
        %v737 = vadd.f32 %v729, 0.0
        %v738 = vadd.f32 %v730, 0.0
        %v739 = vadd.f32 %v731, 0.0
        %v740 = vadd.f32 %v732, 0.0
        %v741 = vadd.f32 %v733, 0.0
        %v742 = vadd.f32 %v734, 0.0
        %v743 = vadd.f32 %v735, 0.0
        %v744 = vadd.f32 %v736, 0.0
        %s745 = scalar_lea.vmem %s595, 64 [#allocation9]
        %v746 = vld [vmem:[%s745] sm:$0xff]
        %v747 = vld [vmem:[%s745 + $0x8] sm:$0xff]
        %v748 = vld [vmem:[%s745 + $0x10] sm:$0xff]
        %v749 = vld [vmem:[%s745 + $0x18] sm:$0xff]
        %v750 = vld [vmem:[%s745 + $0x20] sm:$0xff]
        %v751 = vld [vmem:[%s745 + $0x28] sm:$0xff]
        %v752 = vld [vmem:[%s745 + $0x30] sm:$0xff]
        %v753 = vld [vmem:[%s745 + $0x38] sm:$0xff]
        %s754 = sld [smem:[#allocation3 + $0x1]]
        %v755 = vstv %s754
        %v756 = vsub.f32 %v746, %v755
        %v757 = vsub.f32 %v747, %v755
        %v758 = vsub.f32 %v748, %v755
        %v759 = vsub.f32 %v749, %v755
        %v760 = vsub.f32 %v750, %v755
        %v761 = vsub.f32 %v751, %v755
        %v762 = vsub.f32 %v752, %v755
        %v763 = vsub.f32 %v753, %v755
        %v764 = vmul.f32 %v756, %v756
        %v765 = vmul.f32 %v757, %v757
        %v766 = vmul.f32 %v758, %v758
        %v767 = vmul.f32 %v759, %v759
        %v768 = vmul.f32 %v760, %v760
        %v769 = vmul.f32 %v761, %v761
        %v770 = vmul.f32 %v762, %v762
        %v771 = vmul.f32 %v763, %v763
        %s772 = sld [smem:[#allocation6 + $0x1]]
        %v773 = vstv %s772
        %v774 = vmul.f32 %v764, %v773
        %v775 = vmul.f32 %v765, %v773
        %v776 = vmul.f32 %v766, %v773
        %v777 = vmul.f32 %v767, %v773
        %v778 = vmul.f32 %v768, %v773
        %v779 = vmul.f32 %v769, %v773
        %v780 = vmul.f32 %v770, %v773
        %v781 = vmul.f32 %v771, %v773
        %v782 = vsub.f32 %v774, 0.001
        %v783 = vsub.f32 %v775, 0.001
        %v784 = vsub.f32 %v776, 0.001
        %v785 = vsub.f32 %v777, 0.001
        %v786 = vsub.f32 %v778, 0.001
        %v787 = vsub.f32 %v779, 0.001
        %v788 = vsub.f32 %v780, 0.001
        %v789 = vsub.f32 %v781, 0.001
        %v790 = vmul.f32 %v782, 1.442695
        %v791 = vpow.pop %v790
        %v792 = vmul.f32 %v783, 1.442695
        %v793 = vpow.pop %v792
        %v794 = vmul.f32 %v784, 1.442695
        %v795 = vpow.pop %v794
        %v796 = vmul.f32 %v785, 1.442695
        %v797 = vpow.pop %v796
        %v798 = vmul.f32 %v786, 1.442695
        %v799 = vpow.pop %v798
        %v800 = vmul.f32 %v787, 1.442695
        %v801 = vpow.pop %v800
        %v802 = vmul.f32 %v788, 1.442695
        %v803 = vpow.pop %v802
        %v804 = vmul.f32 %v789, 1.442695
        %v805 = vpow.pop %v804
        %v806 = vmul.f32 %v791, 2.0
        %v807 = vmul.f32 %v793, 2.0
        %v808 = vmul.f32 %v795, 2.0
        %v809 = vmul.f32 %v797, 2.0
        %v810 = vmul.f32 %v799, 2.0
        %v811 = vmul.f32 %v801, 2.0
        %v812 = vmul.f32 %v803, 2.0
        %v813 = vmul.f32 %v805, 2.0
        %v814 = vsub.f32 %v806, 1.0
        %v815 = vsub.f32 %v807, 1.0
        %v816 = vsub.f32 %v808, 1.0
        %v817 = vsub.f32 %v809, 1.0
        %v818 = vsub.f32 %v810, 1.0
        %v819 = vsub.f32 %v811, 1.0
        %v820 = vsub.f32 %v812, 1.0
        %v821 = vsub.f32 %v813, 1.0
        %s822 = sld [smem:[#allocation8 + $0x1]]
        %v823 = vstv %s822
        %v824 = vmul.f32 %v823, %v814
        %v825 = vmul.f32 %v823, %v815
        %v826 = vmul.f32 %v823, %v816
        %v827 = vmul.f32 %v823, %v817
        %v828 = vmul.f32 %v823, %v818
        %v829 = vmul.f32 %v823, %v819
        %v830 = vmul.f32 %v823, %v820
        %v831 = vmul.f32 %v823, %v821
        %v832 = vadd.f32 %v737, %v824
        %v833 = vadd.f32 %v738, %v825
        %v834 = vadd.f32 %v739, %v826
        %v835 = vadd.f32 %v740, %v827
        %v836 = vadd.f32 %v741, %v828
        %v837 = vadd.f32 %v742, %v829
        %v838 = vadd.f32 %v743, %v830
        %v839 = vadd.f32 %v744, %v831
        %s840 = scalar_lea.vmem %s595, 128 [#allocation9]
        %v841 = vld [vmem:[%s840] sm:$0xff]
        %v842 = vld [vmem:[%s840 + $0x8] sm:$0xff]
        %v843 = vld [vmem:[%s840 + $0x10] sm:$0xff]
        %v844 = vld [vmem:[%s840 + $0x18] sm:$0xff]
        %v845 = vld [vmem:[%s840 + $0x20] sm:$0xff]
        %v846 = vld [vmem:[%s840 + $0x28] sm:$0xff]
        %v847 = vld [vmem:[%s840 + $0x30] sm:$0xff]
        %v848 = vld [vmem:[%s840 + $0x38] sm:$0xff]
        %s849 = sld [smem:[#allocation3 + $0x2]]
        %v850 = vstv %s849
        %v851 = vsub.f32 %v841, %v850
        %v852 = vsub.f32 %v842, %v850
        %v853 = vsub.f32 %v843, %v850
        %v854 = vsub.f32 %v844, %v850
        %v855 = vsub.f32 %v845, %v850
        %v856 = vsub.f32 %v846, %v850
        %v857 = vsub.f32 %v847, %v850
        %v858 = vsub.f32 %v848, %v850
        %v859 = vmul.f32 %v851, %v851
        %v860 = vmul.f32 %v852, %v852
        %v861 = vmul.f32 %v853, %v853
        %v862 = vmul.f32 %v854, %v854
        %v863 = vmul.f32 %v855, %v855
        %v864 = vmul.f32 %v856, %v856
        %v865 = vmul.f32 %v857, %v857
        %v866 = vmul.f32 %v858, %v858
        %s867 = sld [smem:[#allocation6 + $0x2]]
        %v868 = vstv %s867
        %v869 = vmul.f32 %v859, %v868
        %v870 = vmul.f32 %v860, %v868
        %v871 = vmul.f32 %v861, %v868
        %v872 = vmul.f32 %v862, %v868
        %v873 = vmul.f32 %v863, %v868
        %v874 = vmul.f32 %v864, %v868
        %v875 = vmul.f32 %v865, %v868
        %v876 = vmul.f32 %v866, %v868
        %v877 = vsub.f32 %v869, 0.001
        %v878 = vsub.f32 %v870, 0.001
        %v879 = vsub.f32 %v871, 0.001
        %v880 = vsub.f32 %v872, 0.001
        %v881 = vsub.f32 %v873, 0.001
        %v882 = vsub.f32 %v874, 0.001
        %v883 = vsub.f32 %v875, 0.001
        %v884 = vsub.f32 %v876, 0.001
        %v885 = vmul.f32 %v877, 1.442695
        %v886 = vpow.pop %v885
        %v887 = vmul.f32 %v878, 1.442695
        %v888 = vpow.pop %v887
        %v889 = vmul.f32 %v879, 1.442695
        %v890 = vpow.pop %v889
        %v891 = vmul.f32 %v880, 1.442695
        %v892 = vpow.pop %v891
        %v893 = vmul.f32 %v881, 1.442695
        %v894 = vpow.pop %v893
        %v895 = vmul.f32 %v882, 1.442695
        %v896 = vpow.pop %v895
        %v897 = vmul.f32 %v883, 1.442695
        %v898 = vpow.pop %v897
        %v899 = vmul.f32 %v884, 1.442695
        %v900 = vpow.pop %v899
        %v901 = vmul.f32 %v886, 2.0
        %v902 = vmul.f32 %v888, 2.0
        %v903 = vmul.f32 %v890, 2.0
        %v904 = vmul.f32 %v892, 2.0
        %v905 = vmul.f32 %v894, 2.0
        %v906 = vmul.f32 %v896, 2.0
        %v907 = vmul.f32 %v898, 2.0
        %v908 = vmul.f32 %v900, 2.0
        %v909 = vsub.f32 %v901, 1.0
        %v910 = vsub.f32 %v902, 1.0
        %v911 = vsub.f32 %v903, 1.0
        %v912 = vsub.f32 %v904, 1.0
        %v913 = vsub.f32 %v905, 1.0
        %v914 = vsub.f32 %v906, 1.0
        %v915 = vsub.f32 %v907, 1.0
        %v916 = vsub.f32 %v908, 1.0
        %s917 = sld [smem:[#allocation8 + $0x2]]
        %v918 = vstv %s917
        %v919 = vmul.f32 %v918, %v909
        %v920 = vmul.f32 %v918, %v910
        %v921 = vmul.f32 %v918, %v911
        %v922 = vmul.f32 %v918, %v912
        %v923 = vmul.f32 %v918, %v913
        %v924 = vmul.f32 %v918, %v914
        %v925 = vmul.f32 %v918, %v915
        %v926 = vmul.f32 %v918, %v916
        %v927 = vadd.f32 %v832, %v919
        %v928 = vadd.f32 %v833, %v920
        %v929 = vadd.f32 %v834, %v921
        %v930 = vadd.f32 %v835, %v922
        %v931 = vadd.f32 %v836, %v923
        %v932 = vadd.f32 %v837, %v924
        %v933 = vadd.f32 %v838, %v925
        %v934 = vadd.f32 %v839, %v926
        %s935 = scalar_lea.vmem %s595, 192 [#allocation9]
        %v936 = vld [vmem:[%s935] sm:$0xff]
        %v937 = vld [vmem:[%s935 + $0x8] sm:$0xff]
        %v938 = vld [vmem:[%s935 + $0x10] sm:$0xff]
        %v939 = vld [vmem:[%s935 + $0x18] sm:$0xff]
        %v940 = vld [vmem:[%s935 + $0x20] sm:$0xff]
        %v941 = vld [vmem:[%s935 + $0x28] sm:$0xff]
        %v942 = vld [vmem:[%s935 + $0x30] sm:$0xff]
        %v943 = vld [vmem:[%s935 + $0x38] sm:$0xff]
        %s944 = sld [smem:[#allocation3 + $0x3]]
        %v945 = vstv %s944
        %v946 = vsub.f32 %v936, %v945
        %v947 = vsub.f32 %v937, %v945
        %v948 = vsub.f32 %v938, %v945
        %v949 = vsub.f32 %v939, %v945
        %v950 = vsub.f32 %v940, %v945
        %v951 = vsub.f32 %v941, %v945
        %v952 = vsub.f32 %v942, %v945
        %v953 = vsub.f32 %v943, %v945
        %v954 = vmul.f32 %v946, %v946
        %v955 = vmul.f32 %v947, %v947
        %v956 = vmul.f32 %v948, %v948
        %v957 = vmul.f32 %v949, %v949
        %v958 = vmul.f32 %v950, %v950
        %v959 = vmul.f32 %v951, %v951
        %v960 = vmul.f32 %v952, %v952
        %v961 = vmul.f32 %v953, %v953
        %s962 = sld [smem:[#allocation6 + $0x3]]
        %v963 = vstv %s962
        %v964 = vmul.f32 %v954, %v963
        %v965 = vmul.f32 %v955, %v963
        %v966 = vmul.f32 %v956, %v963
        %v967 = vmul.f32 %v957, %v963
        %v968 = vmul.f32 %v958, %v963
        %v969 = vmul.f32 %v959, %v963
        %v970 = vmul.f32 %v960, %v963
        %v971 = vmul.f32 %v961, %v963
        %v972 = vsub.f32 %v964, 0.001
        %v973 = vsub.f32 %v965, 0.001
        %v974 = vsub.f32 %v966, 0.001
        %v975 = vsub.f32 %v967, 0.001
        %v976 = vsub.f32 %v968, 0.001
        %v977 = vsub.f32 %v969, 0.001
        %v978 = vsub.f32 %v970, 0.001
        %v979 = vsub.f32 %v971, 0.001
        %v980 = vmul.f32 %v972, 1.442695
        %v981 = vpow.pop %v980
        %v982 = vmul.f32 %v973, 1.442695
        %v983 = vpow.pop %v982
        %v984 = vmul.f32 %v974, 1.442695
        %v985 = vpow.pop %v984
        %v986 = vmul.f32 %v975, 1.442695
        %v987 = vpow.pop %v986
        %v988 = vmul.f32 %v976, 1.442695
        %v989 = vpow.pop %v988
        %v990 = vmul.f32 %v977, 1.442695
        %v991 = vpow.pop %v990
        %v992 = vmul.f32 %v978, 1.442695
        %v993 = vpow.pop %v992
        %v994 = vmul.f32 %v979, 1.442695
        %v995 = vpow.pop %v994
        %v996 = vmul.f32 %v981, 2.0
        %v997 = vmul.f32 %v983, 2.0
        %v998 = vmul.f32 %v985, 2.0
        %v999 = vmul.f32 %v987, 2.0
        %v1000 = vmul.f32 %v989, 2.0
        %v1001 = vmul.f32 %v991, 2.0
        %v1002 = vmul.f32 %v993, 2.0
        %v1003 = vmul.f32 %v995, 2.0
        %v1004 = vsub.f32 %v996, 1.0
        %v1005 = vsub.f32 %v997, 1.0
        %v1006 = vsub.f32 %v998, 1.0
        %v1007 = vsub.f32 %v999, 1.0
        %v1008 = vsub.f32 %v1000, 1.0
        %v1009 = vsub.f32 %v1001, 1.0
        %v1010 = vsub.f32 %v1002, 1.0
        %v1011 = vsub.f32 %v1003, 1.0
        %s1012 = sld [smem:[#allocation8 + $0x3]]
        %v1013 = vstv %s1012
        %v1014 = vmul.f32 %v1013, %v1004
        %v1015 = vmul.f32 %v1013, %v1005
        %v1016 = vmul.f32 %v1013, %v1006
        %v1017 = vmul.f32 %v1013, %v1007
        %v1018 = vmul.f32 %v1013, %v1008
        %v1019 = vmul.f32 %v1013, %v1009
        %v1020 = vmul.f32 %v1013, %v1010
        %v1021 = vmul.f32 %v1013, %v1011
        %v1022 = vadd.f32 %v927, %v1014
        %v1023 = vadd.f32 %v928, %v1015
        %v1024 = vadd.f32 %v929, %v1016
        %v1025 = vadd.f32 %v930, %v1017
        %v1026 = vadd.f32 %v931, %v1018
        %v1027 = vadd.f32 %v932, %v1019
        %v1028 = vadd.f32 %v933, %v1020
        %v1029 = vadd.f32 %v934, %v1021
        %v1030 = vld [vmem:[%s646] sm:$0xff]
        %v1031 = vld [vmem:[%s646 + $0x8] sm:$0xff]
        %v1032 = vld [vmem:[%s646 + $0x10] sm:$0xff]
        %v1033 = vld [vmem:[%s646 + $0x18] sm:$0xff]
        %v1034 = vld [vmem:[%s646 + $0x20] sm:$0xff]
        %v1035 = vld [vmem:[%s646 + $0x28] sm:$0xff]
        %v1036 = vld [vmem:[%s646 + $0x30] sm:$0xff]
        %v1037 = vld [vmem:[%s646 + $0x38] sm:$0xff]
        %v1038 = vsub.f32 %v1030, 1e-08
        %v1039 = vsub.f32 %v1031, 1e-08
        %v1040 = vsub.f32 %v1032, 1e-08
        %v1041 = vsub.f32 %v1033, 1e-08
        %v1042 = vsub.f32 %v1034, 1e-08
        %v1043 = vsub.f32 %v1035, 1e-08
        %v1044 = vsub.f32 %v1036, 1e-08
        %v1045 = vsub.f32 %v1037, 1e-08
        %v1046 = vmax.f32 %v1038, 0.0
        %v1047 = vmax.f32 %v1039, 0.0
        %v1048 = vmax.f32 %v1040, 0.0
        %v1049 = vmax.f32 %v1041, 0.0
        %v1050 = vmax.f32 %v1042, 0.0
        %v1051 = vmax.f32 %v1043, 0.0
        %v1052 = vmax.f32 %v1044, 0.0
        %v1053 = vmax.f32 %v1045, 0.0
        %v1054 = vmin.f32 %v1046, 1.0
        %v1055 = vmin.f32 %v1047, 1.0
        %v1056 = vmin.f32 %v1048, 1.0
        %v1057 = vmin.f32 %v1049, 1.0
        %v1058 = vmin.f32 %v1050, 1.0
        %v1059 = vmin.f32 %v1051, 1.0
        %v1060 = vmin.f32 %v1052, 1.0
        %v1061 = vmin.f32 %v1053, 1.0
        %v1062 = vmul.f32 %v1054, -10.0
        %v1063 = vmul.f32 %v1055, -10.0
        %v1064 = vmul.f32 %v1056, -10.0
        %v1065 = vmul.f32 %v1057, -10.0
        %v1066 = vmul.f32 %v1058, -10.0
        %v1067 = vmul.f32 %v1059, -10.0
        %v1068 = vmul.f32 %v1060, -10.0
        %v1069 = vmul.f32 %v1061, -10.0
        %v1070 = vld [vmem:[%s602] sm:$0xff]
        %v1071 = vld [vmem:[%s602 + $0x8] sm:$0xff]
        %v1072 = vld [vmem:[%s602 + $0x10] sm:$0xff]
        %v1073 = vld [vmem:[%s602 + $0x18] sm:$0xff]
        %v1074 = vld [vmem:[%s602 + $0x20] sm:$0xff]
        %v1075 = vld [vmem:[%s602 + $0x28] sm:$0xff]
        %v1076 = vld [vmem:[%s602 + $0x30] sm:$0xff]
        %v1077 = vld [vmem:[%s602 + $0x38] sm:$0xff]
        %v1078 = vadd.f32 %v1022, %v1062
        %v1079 = vadd.f32 %v1023, %v1063
        %v1080 = vadd.f32 %v1024, %v1064
        %v1081 = vadd.f32 %v1025, %v1065
        %v1082 = vadd.f32 %v1026, %v1066
        %v1083 = vadd.f32 %v1027, %v1067
        %v1084 = vadd.f32 %v1028, %v1068
        %v1085 = vadd.f32 %v1029, %v1069
        %v1086 = vstv %s650
        %v1087 = vmul.f32 %v1086, %v1078
        %v1088 = vmul.f32 %v1086, %v1079
        %v1089 = vmul.f32 %v1086, %v1080
        %v1090 = vmul.f32 %v1086, %v1081
        %v1091 = vmul.f32 %v1086, %v1082
        %v1092 = vmul.f32 %v1086, %v1083
        %v1093 = vmul.f32 %v1086, %v1084
        %v1094 = vmul.f32 %v1086, %v1085
        %v1095 = vadd.f32 %v1070, %v1087
        %v1096 = vadd.f32 %v1071, %v1088
        %v1097 = vadd.f32 %v1072, %v1089
        %v1098 = vadd.f32 %v1073, %v1090
        %v1099 = vadd.f32 %v1074, %v1091
        %v1100 = vadd.f32 %v1075, %v1092
        %v1101 = vadd.f32 %v1076, %v1093
        %v1102 = vadd.f32 %v1077, %v1094
        %v1103 = vmax.f32 %v1095, 0.0
        %v1104 = vmax.f32 %v1096, 0.0
        %v1105 = vmax.f32 %v1097, 0.0
        %v1106 = vmax.f32 %v1098, 0.0
        %v1107 = vmax.f32 %v1099, 0.0
        %v1108 = vmax.f32 %v1100, 0.0
        %v1109 = vmax.f32 %v1101, 0.0
        %v1110 = vmax.f32 %v1102, 0.0
        %v1111 = vmin.f32 %v1103, 1.0
        %v1112 = vmin.f32 %v1104, 1.0
        %v1113 = vmin.f32 %v1105, 1.0
        %v1114 = vmin.f32 %v1106, 1.0
        %v1115 = vmin.f32 %v1107, 1.0
        %v1116 = vmin.f32 %v1108, 1.0
        %v1117 = vmin.f32 %v1109, 1.0
        %v1118 = vmin.f32 %v1110, 1.0
        %1119 = vst [vmem:[%s640] sm:$0xff] %v1111
        %1120 = vst [vmem:[%s640 + $0x8] sm:$0xff] %v1112
        %1121 = vst [vmem:[%s640 + $0x10] sm:$0xff] %v1113
        %1122 = vst [vmem:[%s640 + $0x18] sm:$0xff] %v1114
        %1123 = vst [vmem:[%s640 + $0x20] sm:$0xff] %v1115
        %1124 = vst [vmem:[%s640 + $0x28] sm:$0xff] %v1116
        %1125 = vst [vmem:[%s640 + $0x30] sm:$0xff] %v1117
        %1126 = vst [vmem:[%s640 + $0x38] sm:$0xff] %v1118
        %s1127 = scalar_lea.vmem %s602, 64 [#allocation10]
        %v1128 = vld [vmem:[%s1127] sm:$0xff]
        %v1129 = vld [vmem:[%s1127 + $0x8] sm:$0xff]
        %v1130 = vld [vmem:[%s1127 + $0x10] sm:$0xff]
        %v1131 = vld [vmem:[%s1127 + $0x18] sm:$0xff]
        %v1132 = vld [vmem:[%s1127 + $0x20] sm:$0xff]
        %v1133 = vld [vmem:[%s1127 + $0x28] sm:$0xff]
        %v1134 = vld [vmem:[%s1127 + $0x30] sm:$0xff]
        %v1135 = vld [vmem:[%s1127 + $0x38] sm:$0xff]
        %v1136 = vmul.f32 %v1086, %v1062
        %v1137 = vmul.f32 %v1086, %v1063
        %v1138 = vmul.f32 %v1086, %v1064
        %v1139 = vmul.f32 %v1086, %v1065
        %v1140 = vmul.f32 %v1086, %v1066
        %v1141 = vmul.f32 %v1086, %v1067
        %v1142 = vmul.f32 %v1086, %v1068
        %v1143 = vmul.f32 %v1086, %v1069
        %v1144 = vadd.f32 %v1128, %v1136
        %v1145 = vadd.f32 %v1129, %v1137
        %v1146 = vadd.f32 %v1130, %v1138
        %v1147 = vadd.f32 %v1131, %v1139
        %v1148 = vadd.f32 %v1132, %v1140
        %v1149 = vadd.f32 %v1133, %v1141
        %v1150 = vadd.f32 %v1134, %v1142
        %v1151 = vadd.f32 %v1135, %v1143
        %v1152 = vmax.f32 %v1144, 0.0
        %v1153 = vmax.f32 %v1145, 0.0
        %v1154 = vmax.f32 %v1146, 0.0
        %v1155 = vmax.f32 %v1147, 0.0
        %v1156 = vmax.f32 %v1148, 0.0
        %v1157 = vmax.f32 %v1149, 0.0
        %v1158 = vmax.f32 %v1150, 0.0
        %v1159 = vmax.f32 %v1151, 0.0
        %v1160 = vmin.f32 %v1152, 1.0
        %v1161 = vmin.f32 %v1153, 1.0
        %v1162 = vmin.f32 %v1154, 1.0
        %v1163 = vmin.f32 %v1155, 1.0
        %v1164 = vmin.f32 %v1156, 1.0
        %v1165 = vmin.f32 %v1157, 1.0
        %v1166 = vmin.f32 %v1158, 1.0
        %v1167 = vmin.f32 %v1159, 1.0
        %s1168 = scalar_lea.vmem %s640, 64 [#allocation11]
        %1169 = vst [vmem:[%s1168] sm:$0xff] %v1160
        %1170 = vst [vmem:[%s1168 + $0x8] sm:$0xff] %v1161
        %1171 = vst [vmem:[%s1168 + $0x10] sm:$0xff] %v1162
        %1172 = vst [vmem:[%s1168 + $0x18] sm:$0xff] %v1163
        %1173 = vst [vmem:[%s1168 + $0x20] sm:$0xff] %v1164
        %1174 = vst [vmem:[%s1168 + $0x28] sm:$0xff] %v1165
        %1175 = vst [vmem:[%s1168 + $0x30] sm:$0xff] %v1166
        %1176 = vst [vmem:[%s1168 + $0x38] sm:$0xff] %v1167
        %s1177 = scalar_lea.vmem %s602, 128 [#allocation10]
        %v1178 = vld [vmem:[%s1177] sm:$0xff]
        %v1179 = vld [vmem:[%s1177 + $0x8] sm:$0xff]
        %v1180 = vld [vmem:[%s1177 + $0x10] sm:$0xff]
        %v1181 = vld [vmem:[%s1177 + $0x18] sm:$0xff]
        %v1182 = vld [vmem:[%s1177 + $0x20] sm:$0xff]
        %v1183 = vld [vmem:[%s1177 + $0x28] sm:$0xff]
        %v1184 = vld [vmem:[%s1177 + $0x30] sm:$0xff]
        %v1185 = vld [vmem:[%s1177 + $0x38] sm:$0xff]
        %v1186 = vmul.f32 %v1086, 0.0
        %v1187 = vadd.f32 %v1178, %v1186
        %v1188 = vadd.f32 %v1179, %v1186
        %v1189 = vadd.f32 %v1180, %v1186
        %v1190 = vadd.f32 %v1181, %v1186
        %v1191 = vadd.f32 %v1182, %v1186
        %v1192 = vadd.f32 %v1183, %v1186
        %v1193 = vadd.f32 %v1184, %v1186
        %v1194 = vadd.f32 %v1185, %v1186
        %v1195 = vmax.f32 %v1187, 0.0
        %v1196 = vmax.f32 %v1188, 0.0
        %v1197 = vmax.f32 %v1189, 0.0
        %v1198 = vmax.f32 %v1190, 0.0
        %v1199 = vmax.f32 %v1191, 0.0
        %v1200 = vmax.f32 %v1192, 0.0
        %v1201 = vmax.f32 %v1193, 0.0
        %v1202 = vmax.f32 %v1194, 0.0
        %v1203 = vmin.f32 %v1195, 1.0
        %v1204 = vmin.f32 %v1196, 1.0
        %v1205 = vmin.f32 %v1197, 1.0
        %v1206 = vmin.f32 %v1198, 1.0
        %v1207 = vmin.f32 %v1199, 1.0
        %v1208 = vmin.f32 %v1200, 1.0
        %v1209 = vmin.f32 %v1201, 1.0
        %v1210 = vmin.f32 %v1202, 1.0
        %s1211 = scalar_lea.vmem %s640, 128 [#allocation11]
        %1212 = vst [vmem:[%s1211] sm:$0xff] %v1203
        %1213 = vst [vmem:[%s1211 + $0x8] sm:$0xff] %v1204
        %1214 = vst [vmem:[%s1211 + $0x10] sm:$0xff] %v1205
        %1215 = vst [vmem:[%s1211 + $0x18] sm:$0xff] %v1206
        %1216 = vst [vmem:[%s1211 + $0x20] sm:$0xff] %v1207
        %1217 = vst [vmem:[%s1211 + $0x28] sm:$0xff] %v1208
        %1218 = vst [vmem:[%s1211 + $0x30] sm:$0xff] %v1209
        %1219 = vst [vmem:[%s1211 + $0x38] sm:$0xff] %v1210
        %s1220 = sand.u32 %s194, 1
        %s1221 = scalar_lea.sflag [#allocation4], %s1220
        %s1222 = sand.u32 %s194, 1
        %s1223 = smul.addr %s1222, 192
        %s1224 = scalar_lea.vmem [#allocation11], %s1223
        // Predicated region
        $region137: #{lenia_step_fftc.1} parent=115 // pred_check
          %p1225 = pneg %p204
        $region138: #{lenia_step_fftc.1} parent=115 // pred_check_branch
          %1227 = sbr.rel (%p1225) target = $region140
        $region139: #{lenia_step_fftc.1} parent=115 // pred_region
          #allocation13 [shape = 'u32[6]{0}', space=smem, size = 0x18, scoped, tag = 'DMA stride descriptor']
          %s1228 = smul.u32 8, %s24
          %1230 = vsyncadd %s1221, 0
          %s1231 = smul.addr %s1228, 8
          %s1232 = scalar_lea.hbm %s7, %s1231
          %s1234 = sshll.u32 1, 14
          %s1235 = sxor.u32 4294967295, %s1234
          %s1238 = sshll.u32 7, 18
          %s1239 = sxor.u32 4294967295, %s1238
          %s1240 = sand.u32 0, %s1239
          %s1242 = sor.u32 %s1240, 0
          %s1243 = sshll.u32 %s1224, 4
          %s1244 = int_to_ptr.vmem [resolvable:$true] %s1243
          %s1245 = sshll.u32 %s1232, 4
          %s1246 = int_to_ptr.hbm [resolvable:$true] %s1245
          %1252 = sst [smem:[#allocation13]] 1024
          %s1253 = scalar_lea.smem [#allocation13], 1
          %1254 = sst [smem:[%s1253]] 2048
          %s1255 = scalar_lea.smem [#allocation13], 2
          %1256 = sst [smem:[%s1255]] 8
          %s1257 = scalar_lea.smem [#allocation13], 3
          %1258 = sst [smem:[%s1257]] 128
          %s1259 = scalar_lea.smem [#allocation13], 4
          %1260 = sst [smem:[%s1259]] 128
          %s1261 = scalar_lea.smem [#allocation13], 5
          %1262 = sst [smem:[%s1261]] 8
          %1264 = dma.general %s1244, 3072, %s1246, %s1221, [#allocation12], [#allocation13], %s1242, 0
        $region140: #{lenia_step_fftc.1} parent=115 // pred_fallthru
          _
      $region116: #{lenia_step_fftc.1} parent=5 // pred_fallthru
        _
      %p1265 = scmp.le.s32.totalorder 2, %s19
      // Predicated region
      $region141: #{lenia_step_fftc.1} parent=5 // pred_check
        %p1266 = pneg %p1265
      $region142: #{lenia_step_fftc.1} parent=5 // pred_check_branch
        %1268 = sbr.rel (%p1266) target = $region144
      $region143: #{lenia_step_fftc.1} parent=5 // pred_region
        %s1269 = ssub.s32 %s19, 2
        // Predicated region
        $region145: #{lenia_step_fftc.1} parent=143 // pred_check
          %p1270 = pneg %p210
        $region146: #{lenia_step_fftc.1} parent=143 // pred_check_branch
          %1272 = sbr.rel (%p1270) target = $region148
        $region147: #{lenia_step_fftc.1} parent=143 // pred_region
          %s1273 = sand.u32 %s195, 1
          %s1274 = scalar_lea.sflag [#allocation4], %s1273
          %s1275 = sand.u32 %s195, 1
          %s1276 = smul.addr %s1275, 192
          %s1277 = scalar_lea.vmem [#allocation11], %s1276
          %1279 = dma.done %s1274, 3072
        $region148: #{lenia_step_fftc.1} parent=143 // pred_fallthru
          _
      $region144: #{lenia_step_fftc.1} parent=5 // pred_fallthru
        _
    $region6: #{lenia_step_fftc.1} parent=1 // loop_footer
      %s23 = sadd.s32 1, %s19
    $region7: #{lenia_step_fftc.1} parent=1 // loop_footer_branch
      %18 = sbr.rel target = $region3
    $region8: #{lenia_step_fftc.1} parent=1 // loop_exit
      _
    %1280 = vsyncpa [#allocation4], 1
    %s1281 = scalar_lea.sflag [#allocation4], 1
    %1282 = vsyncpa %s1281, 1
    %1283 = vsyncpa [#allocation5], 1
    %s1284 = scalar_lea.sflag [#allocation5], 1
    %1285 = vsyncpa %s1284, 1
    %1286 = vsyncpa [#allocation7], 1

</llo_original>
